<compile_context>
chip_gen: v6e
topology: v6e:2x2x1
jax: 0.10.0
libtpu: 0.0.40
codegen_flags: <defaults>
</compile_context>

<pallas_src>
import functools

import jax
import jax.numpy as jnp
from jax.experimental import pallas as pl
from jax.experimental.pallas import tpu as pltpu


def _self_attention_kernel(x_ref, w1_ref, w2_ref, wp_ref, bp_ref, o_ref, *,
                           num_heads, head_dim, seq_len, block_b, scale):
    """One batch-block per grid step.

    x_ref : (block_b * N, C)   flattened input rows
    w1_ref: (C, 3C)            qkv1_linear weight (in, out)   -- no bias
    w2_ref: (C, 3C)            qkv2_linear weight (in, out)   -- no bias
    wp_ref: (C, C)             proj weight (in, out)
    bp_ref: (1, C)             proj bias
    o_ref : (block_b * N, C)   flattened output rows
    """
    x = x_ref[...]                                   # (M, C), native dtype
    H, hd, N = num_heads, head_dim, seq_len
    C = H * hd

    def mha(inp_2d, w_qkv):
        # Fused qkv projection: one (M, C) @ (C, 3C) MXU matmul, f32 accumulation.
        qkv = jnp.dot(inp_2d, w_qkv, preferred_element_type=jnp.float32)
        qkv = qkv.astype(inp_2d.dtype)               # keep MXU operands narrow

        def gather(col0):
            # (G, N, hd) with G = block_b * H; all slices are static.
            return jnp.stack(
                [qkv[b * N:(b + 1) * N, col0 + h * hd: col0 + (h + 1) * hd]
                 for b in range(block_b) for h in range(H)], axis=0)

        q = gather(0)
        k = gather(C)
        v = gather(2 * C)

        # Batched scores: single contraction over all (batch, head) pairs.
        s = jnp.einsum('gnd,gmd->gnm', q, k,
                       preferred_element_type=jnp.float32) * scale    # (G,N,N) f32
        # Numerically-stable softmax; divide via the (otherwise idle) EUP slot.
        s = s - jnp.max(s, axis=-1, keepdims=True)
        p = jnp.exp(s)
        p = p * pl.reciprocal(jnp.sum(p, axis=-1, keepdims=True), approx=True)

        # Batched weighted values, f32 accumulation.
        o = jnp.einsum('gnm,gmd->gnd', p.astype(v.dtype), v,
                       preferred_element_type=jnp.float32)             # (G,N,hd)

        # Merge heads back to channel order (c = h*hd + d) per batch row block.
        rows = [jnp.concatenate([o[b * H + h] for h in range(H)], axis=-1)
                for b in range(block_b)]
        return jnp.concatenate(rows, axis=0)                           # (M, C) f32

    x_f32 = x.astype(jnp.float32)
    # block 1: attn1 = x + MHA1(x)          (attn_drop / drop_path are identity)
    a1 = x_f32 + mha(x, w1_ref[...])
    # block 2: attn2 = MHA2(attn1) + attn1
    a2 = mha(a1.astype(x.dtype), w2_ref[...]) + a1
    # output projection (+ bias); proj_drop is identity
    out = jnp.dot(a2.astype(x.dtype), wp_ref[...],
                  preferred_element_type=jnp.float32) + bp_ref[...].astype(jnp.float32)
    o_ref[...] = out.astype(o_ref.dtype)


def self_attention_pallas(x, w_qkv1, w_qkv2, w_proj, b_proj, *,
                          num_heads, block_b=None):
    B, N, C = x.shape
    assert C % num_heads == 0, "model_dim must be divisible by num_heads"
    head_dim = C // num_heads
    scale = head_dim ** (-0.5)

    if block_b is None:
        block_b = next(c for c in (8, 4, 2, 1) if B % c == 0)   # amortize grid overhead
    assert B % block_b == 0
    M = block_b * N
    # Block last-two-dims rule: M must be a multiple of 8 unless it is the full dim.
    assert (M % 8 == 0) or (block_b == B), "pick block_b so block rows are 8-aligned"

    x2d = x.reshape(B * N, C)          # lane-dense 2-D slab view (layout plumbing only)

    kernel = functools.partial(_self_attention_kernel,
                               num_heads=num_heads, head_dim=head_dim,
                               seq_len=N, block_b=block_b, scale=scale)

    out2d = pl.pallas_call(
        kernel,
        out_shape=jax.ShapeDtypeStruct((B * N, C), x.dtype),
        grid_spec=pltpu.PrefetchScalarGridSpec(
            num_scalar_prefetch=0,
            grid=(B // block_b,),
            in_specs=[
                pl.BlockSpec((M, C), lambda i: (i, 0)),          # x rows
                pl.BlockSpec((C, 3 * C), lambda i: (0, 0)),      # qkv1 weight (resident)
                pl.BlockSpec((C, 3 * C), lambda i: (0, 0)),      # qkv2 weight (resident)
                pl.BlockSpec((C, C), lambda i: (0, 0)),          # proj weight (resident)
                pl.BlockSpec((1, C), lambda i: (0, 0)),          # proj bias
            ],
            out_specs=pl.BlockSpec((M, C), lambda i: (i, 0)),
        ),
        compiler_params=pltpu.CompilerParams(
            dimension_semantics=("parallel",),
            vmem_limit_bytes=48 * 1024 * 1024,   # > 32 MiB default, < 64 MiB v7x VMEM
        ),
    )(x2d, w_qkv1, w_qkv2, w_proj, b_proj)

    return out2d.reshape(B, N, C)


def self_attention_ref(x, w_qkv1, w_qkv2, w_proj, b_proj, *, num_heads):
    """Pure-JAX reference that mirrors the PyTorch forward exactly."""
    B, N, C = x.shape
    hd = C // num_heads
    scale = hd ** (-0.5)

    def mha(inp, w):
        qkv = jnp.einsum('bnc,cd->bnd', inp, w)
        q, k, v = jnp.split(qkv, 3, axis=-1)

        def split_heads(t):
            return t.reshape(B, N, num_heads, hd).transpose(0, 2, 1, 3)

        q, k, v = split_heads(q), split_heads(k), split_heads(v)
        s = jnp.einsum('bhnd,bhmd->bhnm', q, k) * scale
        p = jax.nn.softmax(s, axis=-1)
        o = jnp.einsum('bhnm,bhmd->bhnd', p, v)
        return o.transpose(0, 2, 1, 3).reshape(B, N, C)

    a1 = x + mha(x, w_qkv1)
    a2 = mha(a1, w_qkv2) + a1
    return jnp.einsum('bnc,cd->bnd', a2, w_proj) + b_proj[0]


if __name__ == "__main__":
    # Small shapes consistent with the module: model_dim=C, num_heads=8.
    B, N, C = 2, 8, 32
    NUM_HEADS = 8

    key = jax.random.PRNGKey(0)
    kx, k1, k2, kp, kb = jax.random.split(key, 5)

    x = jax.random.normal(kx, (B, N, C), dtype=jnp.float32)
    # nn.Linear(model_dim, 3*model_dim, bias=False) -> stored here as (in, out)
    w_qkv1 = jax.random.normal(k1, (C, 3 * C), dtype=jnp.float32) * 0.05
    w_qkv2 = jax.random.normal(k2, (C, 3 * C), dtype=jnp.float32) * 0.05
    # nn.Linear(model_dim, model_dim) with bias -> (in, out) + (1, out)
    w_proj = jax.random.normal(kp, (C, C), dtype=jnp.float32) * 0.05
    b_proj = jax.random.normal(kb, (1, C), dtype=jnp.float32) * 0.05

    out = self_attention_pallas(x, w_qkv1, w_qkv2, w_proj, b_proj,
                                num_heads=NUM_HEADS)
    out = jax.block_until_ready(out)

    ref = self_attention_ref(x, w_qkv1, w_qkv2, w_proj, b_proj,
                             num_heads=NUM_HEADS)
    assert out.shape == (B, N, C)
    # Tolerance accounts for the approx (EUP) reciprocal in the softmax.
    assert jnp.allclose(out, ref, atol=1e-2, rtol=1e-2), (
        f"max abs err = {jnp.max(jnp.abs(out - ref))}")

    print("KERNEL_OK")
</pallas_src>

<mosaic_0001>
module attributes {stable_mosaic.version = 11 : i64} {
  func.func @_self_attention_kernel(%arg0: i32, %arg1: memref<16x32xf32, #tpu.memory_space<vmem>>, %arg2: memref<32x96xf32, #tpu.memory_space<vmem>>, %arg3: memref<32x96xf32, #tpu.memory_space<vmem>>, %arg4: memref<32x32xf32, #tpu.memory_space<vmem>>, %arg5: memref<1x32xf32, #tpu.memory_space<vmem>>, %arg6: memref<16x32xf32, #tpu.memory_space<vmem>>) attributes {dimension_semantics = [#tpu.dimension_semantics<parallel>], iteration_bounds = array<i64: 1>, scalar_prefetch = 0 : i64, scratch_operands = 0 : i64, tpu.core_type = #tpu.core_type<tc>, window_params = [{transform_indices = @transform_0, window_bounds = array<i64: 16, 32>}, {pipeline_mode = #tpu.pipeline_mode<synchronous>, transform_indices = @transform_1, window_bounds = array<i64: 32, 96>}, {pipeline_mode = #tpu.pipeline_mode<synchronous>, transform_indices = @transform_2, window_bounds = array<i64: 32, 96>}, {pipeline_mode = #tpu.pipeline_mode<synchronous>, transform_indices = @transform_3, window_bounds = array<i64: 32, 32>}, {pipeline_mode = #tpu.pipeline_mode<synchronous>, transform_indices = @transform_4, window_bounds = array<i64: 1, 32>}, {transform_indices = @transform_5, window_bounds = array<i64: 16, 32>}]} {
    %c0 = arith.constant 0 : index
    %c0_0 = arith.constant 0 : index
    %0 = vector.load %arg1[%c0, %c0_0] : memref<16x32xf32, #tpu.memory_space<vmem>>, vector<16x32xf32>
    %c0_1 = arith.constant 0 : index
    %c0_2 = arith.constant 0 : index
    %1 = vector.load %arg2[%c0_1, %c0_2] : memref<32x96xf32, #tpu.memory_space<vmem>>, vector<32x96xf32>
    %cst = arith.constant dense<0.000000e+00> : vector<16x96xf32>
    %2 = tpu.matmul %0, %1, %cst {dimension_numbers = #tpu.dot_dimension_numbers<[1], [0], [0], [1], [0, 0, 1, 1], [], []>} : vector<16x32xf32>, vector<32x96xf32>, vector<16x96xf32> -> vector<16x96xf32>
    %3 = vector.extract_strided_slice %2 {offsets = [0, 0], sizes = [8, 4], strides = [1, 1]} : vector<16x96xf32> to vector<8x4xf32>
    %4 = vector.extract_strided_slice %2 {offsets = [0, 4], sizes = [8, 4], strides = [1, 1]} : vector<16x96xf32> to vector<8x4xf32>
    %5 = vector.extract_strided_slice %2 {offsets = [0, 8], sizes = [8, 4], strides = [1, 1]} : vector<16x96xf32> to vector<8x4xf32>
    %6 = vector.extract_strided_slice %2 {offsets = [0, 12], sizes = [8, 4], strides = [1, 1]} : vector<16x96xf32> to vector<8x4xf32>
    %7 = vector.extract_strided_slice %2 {offsets = [0, 16], sizes = [8, 4], strides = [1, 1]} : vector<16x96xf32> to vector<8x4xf32>
    %8 = vector.extract_strided_slice %2 {offsets = [0, 20], sizes = [8, 4], strides = [1, 1]} : vector<16x96xf32> to vector<8x4xf32>
    %9 = vector.extract_strided_slice %2 {offsets = [0, 24], sizes = [8, 4], strides = [1, 1]} : vector<16x96xf32> to vector<8x4xf32>
    %10 = vector.extract_strided_slice %2 {offsets = [0, 28], sizes = [8, 4], strides = [1, 1]} : vector<16x96xf32> to vector<8x4xf32>
    %11 = vector.extract_strided_slice %2 {offsets = [8, 0], sizes = [8, 4], strides = [1, 1]} : vector<16x96xf32> to vector<8x4xf32>
    %12 = vector.extract_strided_slice %2 {offsets = [8, 4], sizes = [8, 4], strides = [1, 1]} : vector<16x96xf32> to vector<8x4xf32>
    %13 = vector.extract_strided_slice %2 {offsets = [8, 8], sizes = [8, 4], strides = [1, 1]} : vector<16x96xf32> to vector<8x4xf32>
    %14 = vector.extract_strided_slice %2 {offsets = [8, 12], sizes = [8, 4], strides = [1, 1]} : vector<16x96xf32> to vector<8x4xf32>
    %15 = vector.extract_strided_slice %2 {offsets = [8, 16], sizes = [8, 4], strides = [1, 1]} : vector<16x96xf32> to vector<8x4xf32>
    %16 = vector.extract_strided_slice %2 {offsets = [8, 20], sizes = [8, 4], strides = [1, 1]} : vector<16x96xf32> to vector<8x4xf32>
    %17 = vector.extract_strided_slice %2 {offsets = [8, 24], sizes = [8, 4], strides = [1, 1]} : vector<16x96xf32> to vector<8x4xf32>
    %18 = vector.extract_strided_slice %2 {offsets = [8, 28], sizes = [8, 4], strides = [1, 1]} : vector<16x96xf32> to vector<8x4xf32>
    %19 = vector.shape_cast %3 : vector<8x4xf32> to vector<1x8x4xf32>
    %20 = vector.shape_cast %4 : vector<8x4xf32> to vector<1x8x4xf32>
    %21 = vector.shape_cast %5 : vector<8x4xf32> to vector<1x8x4xf32>
    %22 = vector.shape_cast %6 : vector<8x4xf32> to vector<1x8x4xf32>
    %23 = vector.shape_cast %7 : vector<8x4xf32> to vector<1x8x4xf32>
    %24 = vector.shape_cast %8 : vector<8x4xf32> to vector<1x8x4xf32>
    %25 = vector.shape_cast %9 : vector<8x4xf32> to vector<1x8x4xf32>
    %26 = vector.shape_cast %10 : vector<8x4xf32> to vector<1x8x4xf32>
    %27 = vector.shape_cast %11 : vector<8x4xf32> to vector<1x8x4xf32>
    %28 = vector.shape_cast %12 : vector<8x4xf32> to vector<1x8x4xf32>
    %29 = vector.shape_cast %13 : vector<8x4xf32> to vector<1x8x4xf32>
    %30 = vector.shape_cast %14 : vector<8x4xf32> to vector<1x8x4xf32>
    %31 = vector.shape_cast %15 : vector<8x4xf32> to vector<1x8x4xf32>
    %32 = vector.shape_cast %16 : vector<8x4xf32> to vector<1x8x4xf32>
    %33 = vector.shape_cast %17 : vector<8x4xf32> to vector<1x8x4xf32>
    %34 = vector.shape_cast %18 : vector<8x4xf32> to vector<1x8x4xf32>
    %35 = tpu.concatenate %19, %20, %21, %22, %23, %24, %25, %26, %27, %28, %29, %30, %31, %32, %33, %34 in 0 : vector<1x8x4xf32>, vector<1x8x4xf32>, vector<1x8x4xf32>, vector<1x8x4xf32>, vector<1x8x4xf32>, vector<1x8x4xf32>, vector<1x8x4xf32>, vector<1x8x4xf32>, vector<1x8x4xf32>, vector<1x8x4xf32>, vector<1x8x4xf32>, vector<1x8x4xf32>, vector<1x8x4xf32>, vector<1x8x4xf32>, vector<1x8x4xf32>, vector<1x8x4xf32> -> vector<16x8x4xf32>
    %36 = vector.extract_strided_slice %2 {offsets = [0, 32], sizes = [8, 4], strides = [1, 1]} : vector<16x96xf32> to vector<8x4xf32>
    %37 = vector.extract_strided_slice %2 {offsets = [0, 36], sizes = [8, 4], strides = [1, 1]} : vector<16x96xf32> to vector<8x4xf32>
    %38 = vector.extract_strided_slice %2 {offsets = [0, 40], sizes = [8, 4], strides = [1, 1]} : vector<16x96xf32> to vector<8x4xf32>
    %39 = vector.extract_strided_slice %2 {offsets = [0, 44], sizes = [8, 4], strides = [1, 1]} : vector<16x96xf32> to vector<8x4xf32>
    %40 = vector.extract_strided_slice %2 {offsets = [0, 48], sizes = [8, 4], strides = [1, 1]} : vector<16x96xf32> to vector<8x4xf32>
    %41 = vector.extract_strided_slice %2 {offsets = [0, 52], sizes = [8, 4], strides = [1, 1]} : vector<16x96xf32> to vector<8x4xf32>
    %42 = vector.extract_strided_slice %2 {offsets = [0, 56], sizes = [8, 4], strides = [1, 1]} : vector<16x96xf32> to vector<8x4xf32>
    %43 = vector.extract_strided_slice %2 {offsets = [0, 60], sizes = [8, 4], strides = [1, 1]} : vector<16x96xf32> to vector<8x4xf32>
    %44 = vector.extract_strided_slice %2 {offsets = [8, 32], sizes = [8, 4], strides = [1, 1]} : vector<16x96xf32> to vector<8x4xf32>
    %45 = vector.extract_strided_slice %2 {offsets = [8, 36], sizes = [8, 4], strides = [1, 1]} : vector<16x96xf32> to vector<8x4xf32>
    %46 = vector.extract_strided_slice %2 {offsets = [8, 40], sizes = [8, 4], strides = [1, 1]} : vector<16x96xf32> to vector<8x4xf32>
    %47 = vector.extract_strided_slice %2 {offsets = [8, 44], sizes = [8, 4], strides = [1, 1]} : vector<16x96xf32> to vector<8x4xf32>
    %48 = vector.extract_strided_slice %2 {offsets = [8, 48], sizes = [8, 4], strides = [1, 1]} : vector<16x96xf32> to vector<8x4xf32>
    %49 = vector.extract_strided_slice %2 {offsets = [8, 52], sizes = [8, 4], strides = [1, 1]} : vector<16x96xf32> to vector<8x4xf32>
    %50 = vector.extract_strided_slice %2 {offsets = [8, 56], sizes = [8, 4], strides = [1, 1]} : vector<16x96xf32> to vector<8x4xf32>
    %51 = vector.extract_strided_slice %2 {offsets = [8, 60], sizes = [8, 4], strides = [1, 1]} : vector<16x96xf32> to vector<8x4xf32>
    %52 = vector.shape_cast %36 : vector<8x4xf32> to vector<1x8x4xf32>
    %53 = vector.shape_cast %37 : vector<8x4xf32> to vector<1x8x4xf32>
    %54 = vector.shape_cast %38 : vector<8x4xf32> to vector<1x8x4xf32>
    %55 = vector.shape_cast %39 : vector<8x4xf32> to vector<1x8x4xf32>
    %56 = vector.shape_cast %40 : vector<8x4xf32> to vector<1x8x4xf32>
    %57 = vector.shape_cast %41 : vector<8x4xf32> to vector<1x8x4xf32>
    %58 = vector.shape_cast %42 : vector<8x4xf32> to vector<1x8x4xf32>
    %59 = vector.shape_cast %43 : vector<8x4xf32> to vector<1x8x4xf32>
    %60 = vector.shape_cast %44 : vector<8x4xf32> to vector<1x8x4xf32>
    %61 = vector.shape_cast %45 : vector<8x4xf32> to vector<1x8x4xf32>
    %62 = vector.shape_cast %46 : vector<8x4xf32> to vector<1x8x4xf32>
    %63 = vector.shape_cast %47 : vector<8x4xf32> to vector<1x8x4xf32>
    %64 = vector.shape_cast %48 : vector<8x4xf32> to vector<1x8x4xf32>
    %65 = vector.shape_cast %49 : vector<8x4xf32> to vector<1x8x4xf32>
    %66 = vector.shape_cast %50 : vector<8x4xf32> to vector<1x8x4xf32>
    %67 = vector.shape_cast %51 : vector<8x4xf32> to vector<1x8x4xf32>
    %68 = tpu.concatenate %52, %53, %54, %55, %56, %57, %58, %59, %60, %61, %62, %63, %64, %65, %66, %67 in 0 : vector<1x8x4xf32>, vector<1x8x4xf32>, vector<1x8x4xf32>, vector<1x8x4xf32>, vector<1x8x4xf32>, vector<1x8x4xf32>, vector<1x8x4xf32>, vector<1x8x4xf32>, vector<1x8x4xf32>, vector<1x8x4xf32>, vector<1x8x4xf32>, vector<1x8x4xf32>, vector<1x8x4xf32>, vector<1x8x4xf32>, vector<1x8x4xf32>, vector<1x8x4xf32> -> vector<16x8x4xf32>
    %69 = vector.extract_strided_slice %2 {offsets = [0, 64], sizes = [8, 4], strides = [1, 1]} : vector<16x96xf32> to vector<8x4xf32>
    %70 = vector.extract_strided_slice %2 {offsets = [0, 68], sizes = [8, 4], strides = [1, 1]} : vector<16x96xf32> to vector<8x4xf32>
    %71 = vector.extract_strided_slice %2 {offsets = [0, 72], sizes = [8, 4], strides = [1, 1]} : vector<16x96xf32> to vector<8x4xf32>
    %72 = vector.extract_strided_slice %2 {offsets = [0, 76], sizes = [8, 4], strides = [1, 1]} : vector<16x96xf32> to vector<8x4xf32>
    %73 = vector.extract_strided_slice %2 {offsets = [0, 80], sizes = [8, 4], strides = [1, 1]} : vector<16x96xf32> to vector<8x4xf32>
    %74 = vector.extract_strided_slice %2 {offsets = [0, 84], sizes = [8, 4], strides = [1, 1]} : vector<16x96xf32> to vector<8x4xf32>
    %75 = vector.extract_strided_slice %2 {offsets = [0, 88], sizes = [8, 4], strides = [1, 1]} : vector<16x96xf32> to vector<8x4xf32>
    %76 = vector.extract_strided_slice %2 {offsets = [0, 92], sizes = [8, 4], strides = [1, 1]} : vector<16x96xf32> to vector<8x4xf32>
    %77 = vector.extract_strided_slice %2 {offsets = [8, 64], sizes = [8, 4], strides = [1, 1]} : vector<16x96xf32> to vector<8x4xf32>
    %78 = vector.extract_strided_slice %2 {offsets = [8, 68], sizes = [8, 4], strides = [1, 1]} : vector<16x96xf32> to vector<8x4xf32>
    %79 = vector.extract_strided_slice %2 {offsets = [8, 72], sizes = [8, 4], strides = [1, 1]} : vector<16x96xf32> to vector<8x4xf32>
    %80 = vector.extract_strided_slice %2 {offsets = [8, 76], sizes = [8, 4], strides = [1, 1]} : vector<16x96xf32> to vector<8x4xf32>
    %81 = vector.extract_strided_slice %2 {offsets = [8, 80], sizes = [8, 4], strides = [1, 1]} : vector<16x96xf32> to vector<8x4xf32>
    %82 = vector.extract_strided_slice %2 {offsets = [8, 84], sizes = [8, 4], strides = [1, 1]} : vector<16x96xf32> to vector<8x4xf32>
    %83 = vector.extract_strided_slice %2 {offsets = [8, 88], sizes = [8, 4], strides = [1, 1]} : vector<16x96xf32> to vector<8x4xf32>
    %84 = vector.extract_strided_slice %2 {offsets = [8, 92], sizes = [8, 4], strides = [1, 1]} : vector<16x96xf32> to vector<8x4xf32>
    %85 = vector.shape_cast %69 : vector<8x4xf32> to vector<1x8x4xf32>
    %86 = vector.shape_cast %70 : vector<8x4xf32> to vector<1x8x4xf32>
    %87 = vector.shape_cast %71 : vector<8x4xf32> to vector<1x8x4xf32>
    %88 = vector.shape_cast %72 : vector<8x4xf32> to vector<1x8x4xf32>
    %89 = vector.shape_cast %73 : vector<8x4xf32> to vector<1x8x4xf32>
    %90 = vector.shape_cast %74 : vector<8x4xf32> to vector<1x8x4xf32>
    %91 = vector.shape_cast %75 : vector<8x4xf32> to vector<1x8x4xf32>
    %92 = vector.shape_cast %76 : vector<8x4xf32> to vector<1x8x4xf32>
    %93 = vector.shape_cast %77 : vector<8x4xf32> to vector<1x8x4xf32>
    %94 = vector.shape_cast %78 : vector<8x4xf32> to vector<1x8x4xf32>
    %95 = vector.shape_cast %79 : vector<8x4xf32> to vector<1x8x4xf32>
    %96 = vector.shape_cast %80 : vector<8x4xf32> to vector<1x8x4xf32>
    %97 = vector.shape_cast %81 : vector<8x4xf32> to vector<1x8x4xf32>
    %98 = vector.shape_cast %82 : vector<8x4xf32> to vector<1x8x4xf32>
    %99 = vector.shape_cast %83 : vector<8x4xf32> to vector<1x8x4xf32>
    %100 = vector.shape_cast %84 : vector<8x4xf32> to vector<1x8x4xf32>
    %101 = tpu.concatenate %85, %86, %87, %88, %89, %90, %91, %92, %93, %94, %95, %96, %97, %98, %99, %100 in 0 : vector<1x8x4xf32>, vector<1x8x4xf32>, vector<1x8x4xf32>, vector<1x8x4xf32>, vector<1x8x4xf32>, vector<1x8x4xf32>, vector<1x8x4xf32>, vector<1x8x4xf32>, vector<1x8x4xf32>, vector<1x8x4xf32>, vector<1x8x4xf32>, vector<1x8x4xf32>, vector<1x8x4xf32>, vector<1x8x4xf32>, vector<1x8x4xf32>, vector<1x8x4xf32> -> vector<16x8x4xf32>
    "tpu.trace_start"() <{level = 10 : i32, message = "gnd,gmd->gnm"}> : () -> ()
    %cst_3 = arith.constant dense<0.000000e+00> : vector<16x8x8xf32>
    %102 = tpu.matmul %35, %68, %cst_3 {dimension_numbers = #tpu.dot_dimension_numbers<[2], [2], [1], [1], [0, 0, 0, 1, 1, 1], [0], [0]>} : vector<16x8x4xf32>, vector<16x8x4xf32>, vector<16x8x8xf32> -> vector<16x8x8xf32>
    "tpu.trace_stop"() : () -> ()
    %cst_4 = arith.constant 5.000000e-01 : f32
    %103 = vector.broadcast %cst_4 : f32 to vector<16x8x8xf32>
    %104 = arith.mulf %102, %103 : vector<16x8x8xf32>
    %cst_5 = arith.constant dense<0xFF800000> : vector<16x8xf32>
    %105 = vector.multi_reduction <maximumf>, %104, %cst_5 [2] : vector<16x8x8xf32> to vector<16x8xf32>
    %106 = vector.shape_cast %105 : vector<16x8xf32> to vector<16x8x1xf32>
    %107 = vector.broadcast %106 : vector<16x8x1xf32> to vector<16x8x8xf32>
    %108 = arith.subf %104, %107 : vector<16x8x8xf32>
    %109 = math.exp %108 : vector<16x8x8xf32>
    %cst_6 = arith.constant dense<0.000000e+00> : vector<16x8xf32>
    %110 = vector.multi_reduction <add>, %109, %cst_6 [2] : vector<16x8x8xf32> to vector<16x8xf32>
    %111 = vector.shape_cast %110 : vector<16x8xf32> to vector<16x8x1xf32>
    %112 = tpu.reciprocal %111 {approx = true} : vector<16x8x1xf32> -> vector<16x8x1xf32>
    %113 = vector.broadcast %112 : vector<16x8x1xf32> to vector<16x8x8xf32>
    %114 = arith.mulf %109, %113 : vector<16x8x8xf32>
    "tpu.trace_start"() <{level = 10 : i32, message = "gnm,gmd->gnd"}> : () -> ()
    %cst_7 = arith.constant dense<0.000000e+00> : vector<16x8x4xf32>
    %115 = tpu.matmul %114, %101, %cst_7 {dimension_numbers = #tpu.dot_dimension_numbers<[2], [1], [1], [2], [0, 0, 0, 1, 1, 2], [0], [0]>} : vector<16x8x8xf32>, vector<16x8x4xf32>, vector<16x8x4xf32> -> vector<16x8x4xf32>
    "tpu.trace_stop"() : () -> ()
    %116 = vector.extract_strided_slice %115 {offsets = [0, 0, 0], sizes = [1, 8, 4], strides = [1, 1, 1]} : vector<16x8x4xf32> to vector<1x8x4xf32>
    %117 = vector.shape_cast %116 : vector<1x8x4xf32> to vector<8x4xf32>
    %118 = vector.extract_strided_slice %115 {offsets = [1, 0, 0], sizes = [1, 8, 4], strides = [1, 1, 1]} : vector<16x8x4xf32> to vector<1x8x4xf32>
    %119 = vector.shape_cast %118 : vector<1x8x4xf32> to vector<8x4xf32>
    %120 = vector.extract_strided_slice %115 {offsets = [2, 0, 0], sizes = [1, 8, 4], strides = [1, 1, 1]} : vector<16x8x4xf32> to vector<1x8x4xf32>
    %121 = vector.shape_cast %120 : vector<1x8x4xf32> to vector<8x4xf32>
    %122 = vector.extract_strided_slice %115 {offsets = [3, 0, 0], sizes = [1, 8, 4], strides = [1, 1, 1]} : vector<16x8x4xf32> to vector<1x8x4xf32>
    %123 = vector.shape_cast %122 : vector<1x8x4xf32> to vector<8x4xf32>
    %124 = vector.extract_strided_slice %115 {offsets = [4, 0, 0], sizes = [1, 8, 4], strides = [1, 1, 1]} : vector<16x8x4xf32> to vector<1x8x4xf32>
    %125 = vector.shape_cast %124 : vector<1x8x4xf32> to vector<8x4xf32>
    %126 = vector.extract_strided_slice %115 {offsets = [5, 0, 0], sizes = [1, 8, 4], strides = [1, 1, 1]} : vector<16x8x4xf32> to vector<1x8x4xf32>
    %127 = vector.shape_cast %126 : vector<1x8x4xf32> to vector<8x4xf32>
    %128 = vector.extract_strided_slice %115 {offsets = [6, 0, 0], sizes = [1, 8, 4], strides = [1, 1, 1]} : vector<16x8x4xf32> to vector<1x8x4xf32>
    %129 = vector.shape_cast %128 : vector<1x8x4xf32> to vector<8x4xf32>
    %130 = vector.extract_strided_slice %115 {offsets = [7, 0, 0], sizes = [1, 8, 4], strides = [1, 1, 1]} : vector<16x8x4xf32> to vector<1x8x4xf32>
    %131 = vector.shape_cast %130 : vector<1x8x4xf32> to vector<8x4xf32>
    %132 = tpu.concatenate %117, %119, %121, %123, %125, %127, %129, %131 in 1 : vector<8x4xf32>, vector<8x4xf32>, vector<8x4xf32>, vector<8x4xf32>, vector<8x4xf32>, vector<8x4xf32>, vector<8x4xf32>, vector<8x4xf32> -> vector<8x32xf32>
    %133 = vector.extract_strided_slice %115 {offsets = [8, 0, 0], sizes = [1, 8, 4], strides = [1, 1, 1]} : vector<16x8x4xf32> to vector<1x8x4xf32>
    %134 = vector.shape_cast %133 : vector<1x8x4xf32> to vector<8x4xf32>
    %135 = vector.extract_strided_slice %115 {offsets = [9, 0, 0], sizes = [1, 8, 4], strides = [1, 1, 1]} : vector<16x8x4xf32> to vector<1x8x4xf32>
    %136 = vector.shape_cast %135 : vector<1x8x4xf32> to vector<8x4xf32>
    %137 = vector.extract_strided_slice %115 {offsets = [10, 0, 0], sizes = [1, 8, 4], strides = [1, 1, 1]} : vector<16x8x4xf32> to vector<1x8x4xf32>
    %138 = vector.shape_cast %137 : vector<1x8x4xf32> to vector<8x4xf32>
    %139 = vector.extract_strided_slice %115 {offsets = [11, 0, 0], sizes = [1, 8, 4], strides = [1, 1, 1]} : vector<16x8x4xf32> to vector<1x8x4xf32>
    %140 = vector.shape_cast %139 : vector<1x8x4xf32> to vector<8x4xf32>
    %141 = vector.extract_strided_slice %115 {offsets = [12, 0, 0], sizes = [1, 8, 4], strides = [1, 1, 1]} : vector<16x8x4xf32> to vector<1x8x4xf32>
    %142 = vector.shape_cast %141 : vector<1x8x4xf32> to vector<8x4xf32>
    %143 = vector.extract_strided_slice %115 {offsets = [13, 0, 0], sizes = [1, 8, 4], strides = [1, 1, 1]} : vector<16x8x4xf32> to vector<1x8x4xf32>
    %144 = vector.shape_cast %143 : vector<1x8x4xf32> to vector<8x4xf32>
    %145 = vector.extract_strided_slice %115 {offsets = [14, 0, 0], sizes = [1, 8, 4], strides = [1, 1, 1]} : vector<16x8x4xf32> to vector<1x8x4xf32>
    %146 = vector.shape_cast %145 : vector<1x8x4xf32> to vector<8x4xf32>
    %147 = vector.extract_strided_slice %115 {offsets = [15, 0, 0], sizes = [1, 8, 4], strides = [1, 1, 1]} : vector<16x8x4xf32> to vector<1x8x4xf32>
    %148 = vector.shape_cast %147 : vector<1x8x4xf32> to vector<8x4xf32>
    %149 = tpu.concatenate %134, %136, %138, %140, %142, %144, %146, %148 in 1 : vector<8x4xf32>, vector<8x4xf32>, vector<8x4xf32>, vector<8x4xf32>, vector<8x4xf32>, vector<8x4xf32>, vector<8x4xf32>, vector<8x4xf32> -> vector<8x32xf32>
    %150 = tpu.concatenate %132, %149 in 0 : vector<8x32xf32>, vector<8x32xf32> -> vector<16x32xf32>
    %151 = arith.addf %0, %150 : vector<16x32xf32>
    %c0_8 = arith.constant 0 : index
    %c0_9 = arith.constant 0 : index
    %152 = vector.load %arg3[%c0_8, %c0_9] : memref<32x96xf32, #tpu.memory_space<vmem>>, vector<32x96xf32>
    %cst_10 = arith.constant dense<0.000000e+00> : vector<16x96xf32>
    %153 = tpu.matmul %151, %152, %cst_10 {dimension_numbers = #tpu.dot_dimension_numbers<[1], [0], [0], [1], [0, 0, 1, 1], [], []>} : vector<16x32xf32>, vector<32x96xf32>, vector<16x96xf32> -> vector<16x96xf32>
    %154 = vector.extract_strided_slice %153 {offsets = [0, 0], sizes = [8, 4], strides = [1, 1]} : vector<16x96xf32> to vector<8x4xf32>
    %155 = vector.extract_strided_slice %153 {offsets = [0, 4], sizes = [8, 4], strides = [1, 1]} : vector<16x96xf32> to vector<8x4xf32>
    %156 = vector.extract_strided_slice %153 {offsets = [0, 8], sizes = [8, 4], strides = [1, 1]} : vector<16x96xf32> to vector<8x4xf32>
    %157 = vector.extract_strided_slice %153 {offsets = [0, 12], sizes = [8, 4], strides = [1, 1]} : vector<16x96xf32> to vector<8x4xf32>
    %158 = vector.extract_strided_slice %153 {offsets = [0, 16], sizes = [8, 4], strides = [1, 1]} : vector<16x96xf32> to vector<8x4xf32>
    %159 = vector.extract_strided_slice %153 {offsets = [0, 20], sizes = [8, 4], strides = [1, 1]} : vector<16x96xf32> to vector<8x4xf32>
    %160 = vector.extract_strided_slice %153 {offsets = [0, 24], sizes = [8, 4], strides = [1, 1]} : vector<16x96xf32> to vector<8x4xf32>
    %161 = vector.extract_strided_slice %153 {offsets = [0, 28], sizes = [8, 4], strides = [1, 1]} : vector<16x96xf32> to vector<8x4xf32>
    %162 = vector.extract_strided_slice %153 {offsets = [8, 0], sizes = [8, 4], strides = [1, 1]} : vector<16x96xf32> to vector<8x4xf32>
    %163 = vector.extract_strided_slice %153 {offsets = [8, 4], sizes = [8, 4], strides = [1, 1]} : vector<16x96xf32> to vector<8x4xf32>
    %164 = vector.extract_strided_slice %153 {offsets = [8, 8], sizes = [8, 4], strides = [1, 1]} : vector<16x96xf32> to vector<8x4xf32>
    %165 = vector.extract_strided_slice %153 {offsets = [8, 12], sizes = [8, 4], strides = [1, 1]} : vector<16x96xf32> to vector<8x4xf32>
    %166 = vector.extract_strided_slice %153 {offsets = [8, 16], sizes = [8, 4], strides = [1, 1]} : vector<16x96xf32> to vector<8x4xf32>
    %167 = vector.extract_strided_slice %153 {offsets = [8, 20], sizes = [8, 4], strides = [1, 1]} : vector<16x96xf32> to vector<8x4xf32>
    %168 = vector.extract_strided_slice %153 {offsets = [8, 24], sizes = [8, 4], strides = [1, 1]} : vector<16x96xf32> to vector<8x4xf32>
    %169 = vector.extract_strided_slice %153 {offsets = [8, 28], sizes = [8, 4], strides = [1, 1]} : vector<16x96xf32> to vector<8x4xf32>
    %170 = vector.shape_cast %154 : vector<8x4xf32> to vector<1x8x4xf32>
    %171 = vector.shape_cast %155 : vector<8x4xf32> to vector<1x8x4xf32>
    %172 = vector.shape_cast %156 : vector<8x4xf32> to vector<1x8x4xf32>
    %173 = vector.shape_cast %157 : vector<8x4xf32> to vector<1x8x4xf32>
    %174 = vector.shape_cast %158 : vector<8x4xf32> to vector<1x8x4xf32>
    %175 = vector.shape_cast %159 : vector<8x4xf32> to vector<1x8x4xf32>
    %176 = vector.shape_cast %160 : vector<8x4xf32> to vector<1x8x4xf32>
    %177 = vector.shape_cast %161 : vector<8x4xf32> to vector<1x8x4xf32>
    %178 = vector.shape_cast %162 : vector<8x4xf32> to vector<1x8x4xf32>
    %179 = vector.shape_cast %163 : vector<8x4xf32> to vector<1x8x4xf32>
    %180 = vector.shape_cast %164 : vector<8x4xf32> to vector<1x8x4xf32>
    %181 = vector.shape_cast %165 : vector<8x4xf32> to vector<1x8x4xf32>
    %182 = vector.shape_cast %166 : vector<8x4xf32> to vector<1x8x4xf32>
    %183 = vector.shape_cast %167 : vector<8x4xf32> to vector<1x8x4xf32>
    %184 = vector.shape_cast %168 : vector<8x4xf32> to vector<1x8x4xf32>
    %185 = vector.shape_cast %169 : vector<8x4xf32> to vector<1x8x4xf32>
    %186 = tpu.concatenate %170, %171, %172, %173, %174, %175, %176, %177, %178, %179, %180, %181, %182, %183, %184, %185 in 0 : vector<1x8x4xf32>, vector<1x8x4xf32>, vector<1x8x4xf32>, vector<1x8x4xf32>, vector<1x8x4xf32>, vector<1x8x4xf32>, vector<1x8x4xf32>, vector<1x8x4xf32>, vector<1x8x4xf32>, vector<1x8x4xf32>, vector<1x8x4xf32>, vector<1x8x4xf32>, vector<1x8x4xf32>, vector<1x8x4xf32>, vector<1x8x4xf32>, vector<1x8x4xf32> -> vector<16x8x4xf32>
    %187 = vector.extract_strided_slice %153 {offsets = [0, 32], sizes = [8, 4], strides = [1, 1]} : vector<16x96xf32> to vector<8x4xf32>
    %188 = vector.extract_strided_slice %153 {offsets = [0, 36], sizes = [8, 4], strides = [1, 1]} : vector<16x96xf32> to vector<8x4xf32>
    %189 = vector.extract_strided_slice %153 {offsets = [0, 40], sizes = [8, 4], strides = [1, 1]} : vector<16x96xf32> to vector<8x4xf32>
    %190 = vector.extract_strided_slice %153 {offsets = [0, 44], sizes = [8, 4], strides = [1, 1]} : vector<16x96xf32> to vector<8x4xf32>
    %191 = vector.extract_strided_slice %153 {offsets = [0, 48], sizes = [8, 4], strides = [1, 1]} : vector<16x96xf32> to vector<8x4xf32>
    %192 = vector.extract_strided_slice %153 {offsets = [0, 52], sizes = [8, 4], strides = [1, 1]} : vector<16x96xf32> to vector<8x4xf32>
    %193 = vector.extract_strided_slice %153 {offsets = [0, 56], sizes = [8, 4], strides = [1, 1]} : vector<16x96xf32> to vector<8x4xf32>
    %194 = vector.extract_strided_slice %153 {offsets = [0, 60], sizes = [8, 4], strides = [1, 1]} : vector<16x96xf32> to vector<8x4xf32>
    %195 = vector.extract_strided_slice %153 {offsets = [8, 32], sizes = [8, 4], strides = [1, 1]} : vector<16x96xf32> to vector<8x4xf32>
    %196 = vector.extract_strided_slice %153 {offsets = [8, 36], sizes = [8, 4], strides = [1, 1]} : vector<16x96xf32> to vector<8x4xf32>
    %197 = vector.extract_strided_slice %153 {offsets = [8, 40], sizes = [8, 4], strides = [1, 1]} : vector<16x96xf32> to vector<8x4xf32>
    %198 = vector.extract_strided_slice %153 {offsets = [8, 44], sizes = [8, 4], strides = [1, 1]} : vector<16x96xf32> to vector<8x4xf32>
    %199 = vector.extract_strided_slice %153 {offsets = [8, 48], sizes = [8, 4], strides = [1, 1]} : vector<16x96xf32> to vector<8x4xf32>
    %200 = vector.extract_strided_slice %153 {offsets = [8, 52], sizes = [8, 4], strides = [1, 1]} : vector<16x96xf32> to vector<8x4xf32>
    %201 = vector.extract_strided_slice %153 {offsets = [8, 56], sizes = [8, 4], strides = [1, 1]} : vector<16x96xf32> to vector<8x4xf32>
    %202 = vector.extract_strided_slice %153 {offsets = [8, 60], sizes = [8, 4], strides = [1, 1]} : vector<16x96xf32> to vector<8x4xf32>
    %203 = vector.shape_cast %187 : vector<8x4xf32> to vector<1x8x4xf32>
    %204 = vector.shape_cast %188 : vector<8x4xf32> to vector<1x8x4xf32>
    %205 = vector.shape_cast %189 : vector<8x4xf32> to vector<1x8x4xf32>
    %206 = vector.shape_cast %190 : vector<8x4xf32> to vector<1x8x4xf32>
    %207 = vector.shape_cast %191 : vector<8x4xf32> to vector<1x8x4xf32>
    %208 = vector.shape_cast %192 : vector<8x4xf32> to vector<1x8x4xf32>
    %209 = vector.shape_cast %193 : vector<8x4xf32> to vector<1x8x4xf32>
    %210 = vector.shape_cast %194 : vector<8x4xf32> to vector<1x8x4xf32>
    %211 = vector.shape_cast %195 : vector<8x4xf32> to vector<1x8x4xf32>
    %212 = vector.shape_cast %196 : vector<8x4xf32> to vector<1x8x4xf32>
    %213 = vector.shape_cast %197 : vector<8x4xf32> to vector<1x8x4xf32>
    %214 = vector.shape_cast %198 : vector<8x4xf32> to vector<1x8x4xf32>
    %215 = vector.shape_cast %199 : vector<8x4xf32> to vector<1x8x4xf32>
    %216 = vector.shape_cast %200 : vector<8x4xf32> to vector<1x8x4xf32>
    %217 = vector.shape_cast %201 : vector<8x4xf32> to vector<1x8x4xf32>
    %218 = vector.shape_cast %202 : vector<8x4xf32> to vector<1x8x4xf32>
    %219 = tpu.concatenate %203, %204, %205, %206, %207, %208, %209, %210, %211, %212, %213, %214, %215, %216, %217, %218 in 0 : vector<1x8x4xf32>, vector<1x8x4xf32>, vector<1x8x4xf32>, vector<1x8x4xf32>, vector<1x8x4xf32>, vector<1x8x4xf32>, vector<1x8x4xf32>, vector<1x8x4xf32>, vector<1x8x4xf32>, vector<1x8x4xf32>, vector<1x8x4xf32>, vector<1x8x4xf32>, vector<1x8x4xf32>, vector<1x8x4xf32>, vector<1x8x4xf32>, vector<1x8x4xf32> -> vector<16x8x4xf32>
    %220 = vector.extract_strided_slice %153 {offsets = [0, 64], sizes = [8, 4], strides = [1, 1]} : vector<16x96xf32> to vector<8x4xf32>
    %221 = vector.extract_strided_slice %153 {offsets = [0, 68], sizes = [8, 4], strides = [1, 1]} : vector<16x96xf32> to vector<8x4xf32>
    %222 = vector.extract_strided_slice %153 {offsets = [0, 72], sizes = [8, 4], strides = [1, 1]} : vector<16x96xf32> to vector<8x4xf32>
    %223 = vector.extract_strided_slice %153 {offsets = [0, 76], sizes = [8, 4], strides = [1, 1]} : vector<16x96xf32> to vector<8x4xf32>
    %224 = vector.extract_strided_slice %153 {offsets = [0, 80], sizes = [8, 4], strides = [1, 1]} : vector<16x96xf32> to vector<8x4xf32>
    %225 = vector.extract_strided_slice %153 {offsets = [0, 84], sizes = [8, 4], strides = [1, 1]} : vector<16x96xf32> to vector<8x4xf32>
    %226 = vector.extract_strided_slice %153 {offsets = [0, 88], sizes = [8, 4], strides = [1, 1]} : vector<16x96xf32> to vector<8x4xf32>
    %227 = vector.extract_strided_slice %153 {offsets = [0, 92], sizes = [8, 4], strides = [1, 1]} : vector<16x96xf32> to vector<8x4xf32>
    %228 = vector.extract_strided_slice %153 {offsets = [8, 64], sizes = [8, 4], strides = [1, 1]} : vector<16x96xf32> to vector<8x4xf32>
    %229 = vector.extract_strided_slice %153 {offsets = [8, 68], sizes = [8, 4], strides = [1, 1]} : vector<16x96xf32> to vector<8x4xf32>
    %230 = vector.extract_strided_slice %153 {offsets = [8, 72], sizes = [8, 4], strides = [1, 1]} : vector<16x96xf32> to vector<8x4xf32>
    %231 = vector.extract_strided_slice %153 {offsets = [8, 76], sizes = [8, 4], strides = [1, 1]} : vector<16x96xf32> to vector<8x4xf32>
    %232 = vector.extract_strided_slice %153 {offsets = [8, 80], sizes = [8, 4], strides = [1, 1]} : vector<16x96xf32> to vector<8x4xf32>
    %233 = vector.extract_strided_slice %153 {offsets = [8, 84], sizes = [8, 4], strides = [1, 1]} : vector<16x96xf32> to vector<8x4xf32>
    %234 = vector.extract_strided_slice %153 {offsets = [8, 88], sizes = [8, 4], strides = [1, 1]} : vector<16x96xf32> to vector<8x4xf32>
    %235 = vector.extract_strided_slice %153 {offsets = [8, 92], sizes = [8, 4], strides = [1, 1]} : vector<16x96xf32> to vector<8x4xf32>
    %236 = vector.shape_cast %220 : vector<8x4xf32> to vector<1x8x4xf32>
    %237 = vector.shape_cast %221 : vector<8x4xf32> to vector<1x8x4xf32>
    %238 = vector.shape_cast %222 : vector<8x4xf32> to vector<1x8x4xf32>
    %239 = vector.shape_cast %223 : vector<8x4xf32> to vector<1x8x4xf32>
    %240 = vector.shape_cast %224 : vector<8x4xf32> to vector<1x8x4xf32>
    %241 = vector.shape_cast %225 : vector<8x4xf32> to vector<1x8x4xf32>
    %242 = vector.shape_cast %226 : vector<8x4xf32> to vector<1x8x4xf32>
    %243 = vector.shape_cast %227 : vector<8x4xf32> to vector<1x8x4xf32>
    %244 = vector.shape_cast %228 : vector<8x4xf32> to vector<1x8x4xf32>
    %245 = vector.shape_cast %229 : vector<8x4xf32> to vector<1x8x4xf32>
    %246 = vector.shape_cast %230 : vector<8x4xf32> to vector<1x8x4xf32>
    %247 = vector.shape_cast %231 : vector<8x4xf32> to vector<1x8x4xf32>
    %248 = vector.shape_cast %232 : vector<8x4xf32> to vector<1x8x4xf32>
    %249 = vector.shape_cast %233 : vector<8x4xf32> to vector<1x8x4xf32>
    %250 = vector.shape_cast %234 : vector<8x4xf32> to vector<1x8x4xf32>
    %251 = vector.shape_cast %235 : vector<8x4xf32> to vector<1x8x4xf32>
    %252 = tpu.concatenate %236, %237, %238, %239, %240, %241, %242, %243, %244, %245, %246, %247, %248, %249, %250, %251 in 0 : vector<1x8x4xf32>, vector<1x8x4xf32>, vector<1x8x4xf32>, vector<1x8x4xf32>, vector<1x8x4xf32>, vector<1x8x4xf32>, vector<1x8x4xf32>, vector<1x8x4xf32>, vector<1x8x4xf32>, vector<1x8x4xf32>, vector<1x8x4xf32>, vector<1x8x4xf32>, vector<1x8x4xf32>, vector<1x8x4xf32>, vector<1x8x4xf32>, vector<1x8x4xf32> -> vector<16x8x4xf32>
    "tpu.trace_start"() <{level = 10 : i32, message = "gnd,gmd->gnm"}> : () -> ()
    %cst_11 = arith.constant dense<0.000000e+00> : vector<16x8x8xf32>
    %253 = tpu.matmul %186, %219, %cst_11 {dimension_numbers = #tpu.dot_dimension_numbers<[2], [2], [1], [1], [0, 0, 0, 1, 1, 1], [0], [0]>} : vector<16x8x4xf32>, vector<16x8x4xf32>, vector<16x8x8xf32> -> vector<16x8x8xf32>
    "tpu.trace_stop"() : () -> ()
    %cst_12 = arith.constant 5.000000e-01 : f32
    %254 = vector.broadcast %cst_12 : f32 to vector<16x8x8xf32>
    %255 = arith.mulf %253, %254 : vector<16x8x8xf32>
    %cst_13 = arith.constant dense<0xFF800000> : vector<16x8xf32>
    %256 = vector.multi_reduction <maximumf>, %255, %cst_13 [2] : vector<16x8x8xf32> to vector<16x8xf32>
    %257 = vector.shape_cast %256 : vector<16x8xf32> to vector<16x8x1xf32>
    %258 = vector.broadcast %257 : vector<16x8x1xf32> to vector<16x8x8xf32>
    %259 = arith.subf %255, %258 : vector<16x8x8xf32>
    %260 = math.exp %259 : vector<16x8x8xf32>
    %cst_14 = arith.constant dense<0.000000e+00> : vector<16x8xf32>
    %261 = vector.multi_reduction <add>, %260, %cst_14 [2] : vector<16x8x8xf32> to vector<16x8xf32>
    %262 = vector.shape_cast %261 : vector<16x8xf32> to vector<16x8x1xf32>
    %263 = tpu.reciprocal %262 {approx = true} : vector<16x8x1xf32> -> vector<16x8x1xf32>
    %264 = vector.broadcast %263 : vector<16x8x1xf32> to vector<16x8x8xf32>
    %265 = arith.mulf %260, %264 : vector<16x8x8xf32>
    "tpu.trace_start"() <{level = 10 : i32, message = "gnm,gmd->gnd"}> : () -> ()
    %cst_15 = arith.constant dense<0.000000e+00> : vector<16x8x4xf32>
    %266 = tpu.matmul %265, %252, %cst_15 {dimension_numbers = #tpu.dot_dimension_numbers<[2], [1], [1], [2], [0, 0, 0, 1, 1, 2], [0], [0]>} : vector<16x8x8xf32>, vector<16x8x4xf32>, vector<16x8x4xf32> -> vector<16x8x4xf32>
    "tpu.trace_stop"() : () -> ()
    %267 = vector.extract_strided_slice %266 {offsets = [0, 0, 0], sizes = [1, 8, 4], strides = [1, 1, 1]} : vector<16x8x4xf32> to vector<1x8x4xf32>
    %268 = vector.shape_cast %267 : vector<1x8x4xf32> to vector<8x4xf32>
    %269 = vector.extract_strided_slice %266 {offsets = [1, 0, 0], sizes = [1, 8, 4], strides = [1, 1, 1]} : vector<16x8x4xf32> to vector<1x8x4xf32>
    %270 = vector.shape_cast %269 : vector<1x8x4xf32> to vector<8x4xf32>
    %271 = vector.extract_strided_slice %266 {offsets = [2, 0, 0], sizes = [1, 8, 4], strides = [1, 1, 1]} : vector<16x8x4xf32> to vector<1x8x4xf32>
    %272 = vector.shape_cast %271 : vector<1x8x4xf32> to vector<8x4xf32>
    %273 = vector.extract_strided_slice %266 {offsets = [3, 0, 0], sizes = [1, 8, 4], strides = [1, 1, 1]} : vector<16x8x4xf32> to vector<1x8x4xf32>
    %274 = vector.shape_cast %273 : vector<1x8x4xf32> to vector<8x4xf32>
    %275 = vector.extract_strided_slice %266 {offsets = [4, 0, 0], sizes = [1, 8, 4], strides = [1, 1, 1]} : vector<16x8x4xf32> to vector<1x8x4xf32>
    %276 = vector.shape_cast %275 : vector<1x8x4xf32> to vector<8x4xf32>
    %277 = vector.extract_strided_slice %266 {offsets = [5, 0, 0], sizes = [1, 8, 4], strides = [1, 1, 1]} : vector<16x8x4xf32> to vector<1x8x4xf32>
    %278 = vector.shape_cast %277 : vector<1x8x4xf32> to vector<8x4xf32>
    %279 = vector.extract_strided_slice %266 {offsets = [6, 0, 0], sizes = [1, 8, 4], strides = [1, 1, 1]} : vector<16x8x4xf32> to vector<1x8x4xf32>
    %280 = vector.shape_cast %279 : vector<1x8x4xf32> to vector<8x4xf32>
    %281 = vector.extract_strided_slice %266 {offsets = [7, 0, 0], sizes = [1, 8, 4], strides = [1, 1, 1]} : vector<16x8x4xf32> to vector<1x8x4xf32>
    %282 = vector.shape_cast %281 : vector<1x8x4xf32> to vector<8x4xf32>
    %283 = tpu.concatenate %268, %270, %272, %274, %276, %278, %280, %282 in 1 : vector<8x4xf32>, vector<8x4xf32>, vector<8x4xf32>, vector<8x4xf32>, vector<8x4xf32>, vector<8x4xf32>, vector<8x4xf32>, vector<8x4xf32> -> vector<8x32xf32>
    %284 = vector.extract_strided_slice %266 {offsets = [8, 0, 0], sizes = [1, 8, 4], strides = [1, 1, 1]} : vector<16x8x4xf32> to vector<1x8x4xf32>
    %285 = vector.shape_cast %284 : vector<1x8x4xf32> to vector<8x4xf32>
    %286 = vector.extract_strided_slice %266 {offsets = [9, 0, 0], sizes = [1, 8, 4], strides = [1, 1, 1]} : vector<16x8x4xf32> to vector<1x8x4xf32>
    %287 = vector.shape_cast %286 : vector<1x8x4xf32> to vector<8x4xf32>
    %288 = vector.extract_strided_slice %266 {offsets = [10, 0, 0], sizes = [1, 8, 4], strides = [1, 1, 1]} : vector<16x8x4xf32> to vector<1x8x4xf32>
    %289 = vector.shape_cast %288 : vector<1x8x4xf32> to vector<8x4xf32>
    %290 = vector.extract_strided_slice %266 {offsets = [11, 0, 0], sizes = [1, 8, 4], strides = [1, 1, 1]} : vector<16x8x4xf32> to vector<1x8x4xf32>
    %291 = vector.shape_cast %290 : vector<1x8x4xf32> to vector<8x4xf32>
    %292 = vector.extract_strided_slice %266 {offsets = [12, 0, 0], sizes = [1, 8, 4], strides = [1, 1, 1]} : vector<16x8x4xf32> to vector<1x8x4xf32>
    %293 = vector.shape_cast %292 : vector<1x8x4xf32> to vector<8x4xf32>
    %294 = vector.extract_strided_slice %266 {offsets = [13, 0, 0], sizes = [1, 8, 4], strides = [1, 1, 1]} : vector<16x8x4xf32> to vector<1x8x4xf32>
    %295 = vector.shape_cast %294 : vector<1x8x4xf32> to vector<8x4xf32>
    %296 = vector.extract_strided_slice %266 {offsets = [14, 0, 0], sizes = [1, 8, 4], strides = [1, 1, 1]} : vector<16x8x4xf32> to vector<1x8x4xf32>
    %297 = vector.shape_cast %296 : vector<1x8x4xf32> to vector<8x4xf32>
    %298 = vector.extract_strided_slice %266 {offsets = [15, 0, 0], sizes = [1, 8, 4], strides = [1, 1, 1]} : vector<16x8x4xf32> to vector<1x8x4xf32>
    %299 = vector.shape_cast %298 : vector<1x8x4xf32> to vector<8x4xf32>
    %300 = tpu.concatenate %285, %287, %289, %291, %293, %295, %297, %299 in 1 : vector<8x4xf32>, vector<8x4xf32>, vector<8x4xf32>, vector<8x4xf32>, vector<8x4xf32>, vector<8x4xf32>, vector<8x4xf32>, vector<8x4xf32> -> vector<8x32xf32>
    %301 = tpu.concatenate %283, %300 in 0 : vector<8x32xf32>, vector<8x32xf32> -> vector<16x32xf32>
    %302 = arith.addf %301, %151 : vector<16x32xf32>
    %c0_16 = arith.constant 0 : index
    %c0_17 = arith.constant 0 : index
    %303 = vector.load %arg4[%c0_16, %c0_17] : memref<32x32xf32, #tpu.memory_space<vmem>>, vector<32x32xf32>
    %cst_18 = arith.constant dense<0.000000e+00> : vector<16x32xf32>
    %304 = tpu.matmul %302, %303, %cst_18 {dimension_numbers = #tpu.dot_dimension_numbers<[1], [0], [0], [1], [0, 0, 1, 1], [], []>} : vector<16x32xf32>, vector<32x32xf32>, vector<16x32xf32> -> vector<16x32xf32>
    %c0_19 = arith.constant 0 : index
    %c0_20 = arith.constant 0 : index
    %305 = vector.load %arg5[%c0_19, %c0_20] : memref<1x32xf32, #tpu.memory_space<vmem>>, vector<1x32xf32>
    %306 = vector.broadcast %305 : vector<1x32xf32> to vector<16x32xf32>
    %307 = arith.addf %304, %306 : vector<16x32xf32>
    %c0_21 = arith.constant 0 : index
    %c0_22 = arith.constant 0 : index
    %308 = vector.load %arg6[%c0_21, %c0_22] : memref<16x32xf32, #tpu.memory_space<vmem>>, vector<16x32xf32>
    tpu.vector_store %arg6[%c0_21, %c0_22], %307 {strides = array<i32>} : memref<16x32xf32, #tpu.memory_space<vmem>>, vector<16x32xf32>,
    return
  }
  func.func @transform_0(%arg0: i32) -> (i32, i32) {
    %c0_i32 = arith.constant 0 : i32
    %c0_i32_0 = arith.constant 0 : i32
    return %arg0, %c0_i32 : i32, i32
  }
  func.func @transform_1(%arg0: i32) -> (i32, i32) {
    %c0_i32 = arith.constant 0 : i32
    %c0_i32_0 = arith.constant 0 : i32
    %c0_i32_1 = arith.constant 0 : i32
    return %c0_i32, %c0_i32_0 : i32, i32
  }
  func.func @transform_2(%arg0: i32) -> (i32, i32) {
    %c0_i32 = arith.constant 0 : i32
    %c0_i32_0 = arith.constant 0 : i32
    %c0_i32_1 = arith.constant 0 : i32
    return %c0_i32, %c0_i32_0 : i32, i32
  }
  func.func @transform_3(%arg0: i32) -> (i32, i32) {
    %c0_i32 = arith.constant 0 : i32
    %c0_i32_0 = arith.constant 0 : i32
    %c0_i32_1 = arith.constant 0 : i32
    return %c0_i32, %c0_i32_0 : i32, i32
  }
  func.func @transform_4(%arg0: i32) -> (i32, i32) {
    %c0_i32 = arith.constant 0 : i32
    %c0_i32_0 = arith.constant 0 : i32
    %c0_i32_1 = arith.constant 0 : i32
    return %c0_i32, %c0_i32_0 : i32, i32
  }
  func.func @transform_5(%arg0: i32) -> (i32, i32) {
    %c0_i32 = arith.constant 0 : i32
    %c0_i32_0 = arith.constant 0 : i32
    return %arg0, %c0_i32 : i32, i32
  }
}

</mosaic_0001>

<llo_original>
// kernel: tpu_custom_call.1
$region0: #{tpu_custom_call.1}
  #allocation0 [shape = 'u32[]', space=smem, size = 0x4, offset = 0x4, fixed_abs, tag = 'smem constant byte address 0x4 - core index']
  #allocation1 [shape = 'u32[144,128]{1,0:T(1,128)}', space=vmem, size = 0x12000, scoped, tag = 'internal scratch']
  %s0 = inlined_call_operand.hbm [shape: f32[16,32], index: 0, kind: input, shape index: {}]
  %s1 = inlined_call_operand.hbm [shape: f32[32,96], index: 1, kind: input, shape index: {}]
  %s2 = inlined_call_operand.hbm [shape: f32[32,96], index: 2, kind: input, shape index: {}]
  %s3 = inlined_call_operand.hbm [shape: f32[32,32], index: 3, kind: input, shape index: {}]
  %s4 = inlined_call_operand.vmem [shape: f32[1,32], index: 4, kind: input, shape index: {}]
  %s5 = inlined_call_operand.hbm [shape: f32[16,32], index: 5, kind: output, shape index: {}]
  %s6 = sld [smem:[#allocation0]]
  $region46: #{tpu_custom_call.1} parent=0
    _
  %s8 = ssub.s32 1, %s6
  %s9 = scalar_select 0, %s8, %s6
  $region1: #{tpu_custom_call.1} parent=0
    #allocation2 [shape = 'u8[8192]{0}', space=vmem, size = 0x2000, scoped, tag = 'input window, operand 0, single buffered']
    #allocation3 [shape = 's32[1]{0}', space=sflag, size = 0x4, scoped, tag = 'scoped memory for tpu_custom_call.1']
    #allocation4 [shape = 's32[1]{0}', space=sflag, size = 0x4, scoped, tag = 'scoped memory for tpu_custom_call.1']
    #allocation5 [shape = 'u8[16384]{0}', space=vmem, size = 0x4000, scoped, tag = 'input window, operand 1, single buffered']
    #allocation6 [shape = 's32[1]{0}', space=sflag, size = 0x4, scoped, tag = 'scoped memory for tpu_custom_call.1']
    #allocation7 [shape = 'u8[16384]{0}', space=vmem, size = 0x4000, scoped, tag = 'input window, operand 2, single buffered']
    #allocation8 [shape = 'u8[16384]{0}', space=vmem, size = 0x4000, scoped, tag = 'input window, operand 3, single buffered']
    #allocation9 [shape = 's32[1]{0}', space=sflag, size = 0x4, scoped, tag = 'scoped memory for tpu_custom_call.1']
    #allocation10 [shape = 'u8[8192]{0}', space=vmem, size = 0x2000, scoped, tag = 'output window, operand 0, single buffered']
    %10 = vsyncpa [#allocation3], 0
    %11 = vsyncpa [#allocation6], 0
    %12 = vsyncpa [#allocation9], 0
    %13 = vsyncpa [#allocation4], 0
    // Predicated region
    $region2: #{tpu_custom_call.1} parent=1 // pred_check
      _
    $region3: #{tpu_custom_call.1} parent=1 // pred_check_branch
      %15 = sbr.rel (0) target = $region5
    $region4: #{tpu_custom_call.1} parent=1 // pred_region
      %s17 = ssub.s32 256, 256
      %18 = vsyncadd [#allocation3], %s17
      %s19 = sshll.u32 [#allocation2], 4
      %s20 = int_to_ptr.vmem [resolvable:$true] %s19
      %25 = dma.hbm_to_vmem [thread:$0]  %s0, 256, %s20, [#allocation3], 128, 128, 8
    $region5: #{tpu_custom_call.1} parent=1 // pred_fallthru
      _
    // Predicated region
    $region6: #{tpu_custom_call.1} parent=1 // pred_check
      _
    $region7: #{tpu_custom_call.1} parent=1 // pred_check_branch
      %27 = sbr.rel (0) target = $region9
    $region8: #{tpu_custom_call.1} parent=1 // pred_region
      %s29 = ssub.s32 512, 512
      %30 = vsyncadd [#allocation6], %s29
      %s31 = sshll.u32 [#allocation5], 4
      %s32 = int_to_ptr.vmem [resolvable:$true] %s31
      %37 = dma.hbm_to_vmem [thread:$0]  %s1, 512, %s32, [#allocation6], 128, 128, 8
    $region9: #{tpu_custom_call.1} parent=1 // pred_fallthru
      _
    // Predicated region
    $region10: #{tpu_custom_call.1} parent=1 // pred_check
      _
    $region11: #{tpu_custom_call.1} parent=1 // pred_check_branch
      %39 = sbr.rel (0) target = $region13
    $region12: #{tpu_custom_call.1} parent=1 // pred_region
      %s41 = ssub.s32 512, 512
      %42 = vsyncadd [#allocation6], %s41
      %s43 = sshll.u32 [#allocation7], 4
      %s44 = int_to_ptr.vmem [resolvable:$true] %s43
      %49 = dma.hbm_to_vmem [thread:$0]  %s2, 512, %s44, [#allocation6], 128, 128, 8
    $region13: #{tpu_custom_call.1} parent=1 // pred_fallthru
      _
    // Predicated region
    $region14: #{tpu_custom_call.1} parent=1 // pred_check
      _
    $region15: #{tpu_custom_call.1} parent=1 // pred_check_branch
      %51 = sbr.rel (0) target = $region17
    $region16: #{tpu_custom_call.1} parent=1 // pred_region
      %s53 = ssub.s32 512, 512
      %54 = vsyncadd [#allocation9], %s53
      %s55 = sshll.u32 [#allocation8], 4
      %s56 = int_to_ptr.vmem [resolvable:$true] %s55
      %61 = dma.hbm_to_vmem [thread:$0]  %s3, 512, %s56, [#allocation9], 128, 128, 8
    $region17: #{tpu_custom_call.1} parent=1 // pred_fallthru
      _
    // Predicated region
    $region18: #{tpu_custom_call.1} parent=1 // pred_check
      _
    $region19: #{tpu_custom_call.1} parent=1 // pred_check_branch
      %63 = sbr.rel (0) target = $region21
    $region20: #{tpu_custom_call.1} parent=1 // pred_region
      _
    $region21: #{tpu_custom_call.1} parent=1 // pred_fallthru
      _
    // Predicated region
    $region22: #{tpu_custom_call.1} parent=1 // pred_check
      _
    $region23: #{tpu_custom_call.1} parent=1 // pred_check_branch
      %65 = sbr.rel (0) target = $region25
    $region24: #{tpu_custom_call.1} parent=1 // pred_region
      %66 = dma.done [#allocation3], 256
    $region25: #{tpu_custom_call.1} parent=1 // pred_fallthru
      _
    // Predicated region
    $region26: #{tpu_custom_call.1} parent=1 // pred_check
      _
    $region27: #{tpu_custom_call.1} parent=1 // pred_check_branch
      %68 = sbr.rel (0) target = $region29
    $region28: #{tpu_custom_call.1} parent=1 // pred_region
      %69 = dma.done [#allocation6], 512
    $region29: #{tpu_custom_call.1} parent=1 // pred_fallthru
      _
    // Predicated region
    $region30: #{tpu_custom_call.1} parent=1 // pred_check
      _
    $region31: #{tpu_custom_call.1} parent=1 // pred_check_branch
      %71 = sbr.rel (0) target = $region33
    $region32: #{tpu_custom_call.1} parent=1 // pred_region
      %72 = dma.done [#allocation6], 512
    $region33: #{tpu_custom_call.1} parent=1 // pred_fallthru
      _
    // Predicated region
    $region34: #{tpu_custom_call.1} parent=1 // pred_check
      _
    $region35: #{tpu_custom_call.1} parent=1 // pred_check_branch
      %74 = sbr.rel (0) target = $region37
    $region36: #{tpu_custom_call.1} parent=1 // pred_region
      %75 = dma.done [#allocation9], 512
    $region37: #{tpu_custom_call.1} parent=1 // pred_fallthru
      _
    %v76 = vld [vmem:[#allocation2] sm:$0xff]
    %v77 = vld [vmem:[#allocation2 + $0x8] sm:$0xff]
    %v78 = vld [vmem:[#allocation5] sm:$0xff]
    %v79 = vld [vmem:[#allocation5 + $0x8] sm:$0xff]
    %v80 = vld [vmem:[#allocation5 + $0x10] sm:$0xff]
    %v81 = vld [vmem:[#allocation5 + $0x18] sm:$0xff]
    %vm82 = vcmask 261120
    %v84 = vsel %vm82, %v76, 0
    %v87 = vsel %vm82, %v77, 0
    %89 = vmatprep.subr.mxu0 0.0
    %90 = vmatpush1.msra.mxu0 0.0
    %91 = vmatprep.subr.mxu0 0.0
    %92 = vmatpush1.msra.mxu0 0.0
    %93 = vmatprep.subr.mxu0 0.0
    %94 = vmatpush1.msra.mxu0 0.0
    %95 = vmatprep.subr.mxu0 0.0
    %96 = vmatpush1.msra.mxu0 0.0
    %97 = vmatprep.subr.mxu0 0.0
    %98 = vmatpush1.msra.mxu0 0.0
    %99 = vmatprep.subr.mxu0 0.0
    %100 = vmatpush1.msra.mxu0 0.0
    %101 = vmatprep.subr.mxu0 0.0
    %102 = vmatpush1.msra.mxu0 0.0
    %103 = vmatprep.subr.mxu0 0.0
    %104 = vmatpush1.msra.mxu0 0.0
    %105 = vmatprep.subr.mxu0 0.0
    %106 = vmatpush1.msra.mxu0 0.0
    %107 = vmatprep.subr.mxu0 0.0
    %108 = vmatpush1.msra.mxu0 0.0
    %109 = vmatprep.subr.mxu0 0.0
    %110 = vmatpush1.msra.mxu0 0.0
    %111 = vmatprep.subr.mxu0 0.0
    %112 = vmatpush1.msra.mxu0 0.0
    %113 = vmatprep.subr.mxu0 0.0
    %114 = vmatpush1.msra.mxu0 %v81
    %115 = vmatprep.subr.mxu0 0.0
    %116 = vmatpush1.msra.mxu0 %v80
    %117 = vmatprep.subr.mxu0 0.0
    %118 = vmatpush1.msra.mxu0 %v79
    %119 = vmatprep.subr.mxu0 0.0
    %120 = vmatpush1.msra.mxu0 %v78
    %121 = vmatprep.subr.mxu0 0.0
    %122 = vmatpush2.msra.mxu0 0.0
    %123 = vmatprep.subr.mxu0 0.0
    %124 = vmatpush2.msra.mxu0 0.0
    %125 = vmatprep.subr.mxu0 0.0
    %126 = vmatpush2.msra.mxu0 0.0
    %127 = vmatprep.subr.mxu0 0.0
    %128 = vmatpush2.msra.mxu0 0.0
    %129 = vmatprep.subr.mxu0 0.0
    %130 = vmatpush2.msra.mxu0 0.0
    %131 = vmatprep.subr.mxu0 0.0
    %132 = vmatpush2.msra.mxu0 0.0
    %133 = vmatprep.subr.mxu0 0.0
    %134 = vmatpush2.msra.mxu0 0.0
    %135 = vmatprep.subr.mxu0 0.0
    %136 = vmatpush2.msra.mxu0 0.0
    %137 = vmatprep.subr.mxu0 0.0
    %138 = vmatpush2.msra.mxu0 0.0
    %139 = vmatprep.subr.mxu0 0.0
    %140 = vmatpush2.msra.mxu0 0.0
    %141 = vmatprep.subr.mxu0 0.0
    %142 = vmatpush2.msra.mxu0 0.0
    %143 = vmatprep.subr.mxu0 0.0
    %144 = vmatpush2.msra.mxu0 0.0
    %145 = vmatprep.subr.mxu0 0.0
    %146 = vmatpush2.msra.mxu0 0.0
    %147 = vmatprep.subr.mxu0 0.0
    %148 = vmatpush2.msra.mxu0 0.0
    %149 = vmatprep.subr.mxu0 0.0
    %150 = vmatpush2.msra.mxu0 0.0
    %151 = vmatprep.subr.mxu0 0.0
    %152 = vmatpush2.msra.mxu0 0.0
    %153 = vmatprep.mubr.f32.mxu0 0.0
    %154 = vmatmul.mubr.f32.gmra.mxu0 %v84
    %v155 = vpop.f32.mrf.mxu0
    %v156 = vadd.f32 0.0, %v155
    %v157 = vpop.f32.mrf.mxu0
    %158 = vmatprep.mubr.f32.mxu0 0.0
    %159 = vmatmul.mubr.f32.gmra.mxu0 %v87
    %v160 = vpop.f32.mrf.mxu0
    %v161 = vadd.f32 0.0, %v160
    %v162 = vpop.f32.mrf.mxu0
    %163 = vdwg.mxu0
    %165 = vrot.lane.b32.xlu0 %v156, 124
    %v166 = vpop.permute.xlu0 %165
    %167 = vrot.lane.b32.xlu0 %v156, 120
    %v168 = vpop.permute.xlu0 %167
    %169 = vrot.lane.b32.xlu0 %v156, 116
    %v170 = vpop.permute.xlu0 %169
    %171 = vrot.lane.b32.xlu0 %v156, 112
    %v172 = vpop.permute.xlu0 %171
    %173 = vrot.lane.b32.xlu0 %v156, 108
    %v174 = vpop.permute.xlu0 %173
    %175 = vrot.lane.b32.xlu0 %v156, 104
    %v176 = vpop.permute.xlu0 %175
    %177 = vrot.lane.b32.xlu0 %v156, 100
    %v178 = vpop.permute.xlu0 %177
    %180 = vrot.lane.b32.xlu0 %v161, 124
    %v181 = vpop.permute.xlu0 %180
    %182 = vrot.lane.b32.xlu0 %v161, 120
    %v183 = vpop.permute.xlu0 %182
    %184 = vrot.lane.b32.xlu0 %v161, 116
    %v185 = vpop.permute.xlu0 %184
    %186 = vrot.lane.b32.xlu0 %v161, 112
    %v187 = vpop.permute.xlu0 %186
    %188 = vrot.lane.b32.xlu0 %v161, 108
    %v189 = vpop.permute.xlu0 %188
    %190 = vrot.lane.b32.xlu0 %v161, 104
    %v191 = vpop.permute.xlu0 %190
    %192 = vrot.lane.b32.xlu0 %v161, 100
    %v193 = vpop.permute.xlu0 %192
    %194 = vrot.lane.b32.xlu0 %v156, 96
    %v195 = vpop.permute.xlu0 %194
    %vm196 = vcmask 31744
    %v197 = vsel %vm196, %v156, 0
    %v199 = vsel %vm196, %v195, 0
    %201 = vmatprep.subr.mxu0 0.0
    %202 = vmatpush1.xpose.msra.mxu0 0.0
    %203 = vmatprep.subr.mxu0 0.0
    %204 = vmatpush1.xpose.msra.mxu0 0.0
    %205 = vmatprep.subr.mxu0 0.0
    %206 = vmatpush1.xpose.msra.mxu0 0.0
    %207 = vmatprep.subr.mxu0 0.0
    %208 = vmatpush1.xpose.msra.mxu0 0.0
    %209 = vmatprep.subr.mxu0 0.0
    %210 = vmatpush1.xpose.msra.mxu0 0.0
    %211 = vmatprep.subr.mxu0 0.0
    %212 = vmatpush1.xpose.msra.mxu0 0.0
    %213 = vmatprep.subr.mxu0 0.0
    %214 = vmatpush1.xpose.msra.mxu0 0.0
    %215 = vmatprep.subr.mxu0 0.0
    %216 = vmatpush1.xpose.msra.mxu0 0.0
    %217 = vmatprep.subr.mxu0 0.0
    %218 = vmatpush1.xpose.msra.mxu0 0.0
    %219 = vmatprep.subr.mxu0 0.0
    %220 = vmatpush1.xpose.msra.mxu0 0.0
    %221 = vmatprep.subr.mxu0 0.0
    %222 = vmatpush1.xpose.msra.mxu0 0.0
    %223 = vmatprep.subr.mxu0 0.0
    %224 = vmatpush1.xpose.msra.mxu0 0.0
    %225 = vmatprep.subr.mxu0 0.0
    %226 = vmatpush1.xpose.msra.mxu0 0.0
    %227 = vmatprep.subr.mxu0 0.0
    %228 = vmatpush1.xpose.msra.mxu0 0.0
    %229 = vmatprep.subr.mxu0 0.0
    %230 = vmatpush1.xpose.msra.mxu0 0.0
    %231 = vmatprep.subr.mxu0 0.0
    %232 = vmatpush1.xpose.msra.mxu0 %v199
    %233 = vmatprep.subr.mxu0 0.0
    %234 = vmatpush2.xpose.msra.mxu0 0.0
    %235 = vmatprep.subr.mxu0 0.0
    %236 = vmatpush2.xpose.msra.mxu0 0.0
    %237 = vmatprep.subr.mxu0 0.0
    %238 = vmatpush2.xpose.msra.mxu0 0.0
    %239 = vmatprep.subr.mxu0 0.0
    %240 = vmatpush2.xpose.msra.mxu0 0.0
    %241 = vmatprep.subr.mxu0 0.0
    %242 = vmatpush2.xpose.msra.mxu0 0.0
    %243 = vmatprep.subr.mxu0 0.0
    %244 = vmatpush2.xpose.msra.mxu0 0.0
    %245 = vmatprep.subr.mxu0 0.0
    %246 = vmatpush2.xpose.msra.mxu0 0.0
    %247 = vmatprep.subr.mxu0 0.0
    %248 = vmatpush2.xpose.msra.mxu0 0.0
    %249 = vmatprep.subr.mxu0 0.0
    %250 = vmatpush2.xpose.msra.mxu0 0.0
    %251 = vmatprep.subr.mxu0 0.0
    %252 = vmatpush2.xpose.msra.mxu0 0.0
    %253 = vmatprep.subr.mxu0 0.0
    %254 = vmatpush2.xpose.msra.mxu0 0.0
    %255 = vmatprep.subr.mxu0 0.0
    %256 = vmatpush2.xpose.msra.mxu0 0.0
    %257 = vmatprep.subr.mxu0 0.0
    %258 = vmatpush2.xpose.msra.mxu0 0.0
    %259 = vmatprep.subr.mxu0 0.0
    %260 = vmatpush2.xpose.msra.mxu0 0.0
    %261 = vmatprep.subr.mxu0 0.0
    %262 = vmatpush2.xpose.msra.mxu0 0.0
    %263 = vmatprep.subr.mxu0 0.0
    %264 = vmatpush2.xpose.msra.mxu0 0.0
    %265 = vmatprep.mubr.f32.mxu0 0.0
    %266 = vmatmul.mubr.f32.gmra.mxu0 %v197
    %v267 = vpop.f32.mrf.mxu0
    %v268 = vadd.f32 0.0, %v267
    %v269 = vpop.f32.mrf.mxu0
    %270 = vdwg.mxu0
    %271 = vrot.lane.b32.xlu0 %v166, 96
    %v272 = vpop.permute.xlu0 %271
    %v273 = vsel %vm196, %v166, 0
    %v275 = vsel %vm196, %v272, 0
    %277 = vmatprep.subr.mxu0 0.0
    %278 = vmatpush1.xpose.msra.mxu0 0.0
    %279 = vmatprep.subr.mxu0 0.0
    %280 = vmatpush1.xpose.msra.mxu0 0.0
    %281 = vmatprep.subr.mxu0 0.0
    %282 = vmatpush1.xpose.msra.mxu0 0.0
    %283 = vmatprep.subr.mxu0 0.0
    %284 = vmatpush1.xpose.msra.mxu0 0.0
    %285 = vmatprep.subr.mxu0 0.0
    %286 = vmatpush1.xpose.msra.mxu0 0.0
    %287 = vmatprep.subr.mxu0 0.0
    %288 = vmatpush1.xpose.msra.mxu0 0.0
    %289 = vmatprep.subr.mxu0 0.0
    %290 = vmatpush1.xpose.msra.mxu0 0.0
    %291 = vmatprep.subr.mxu0 0.0
    %292 = vmatpush1.xpose.msra.mxu0 0.0
    %293 = vmatprep.subr.mxu0 0.0
    %294 = vmatpush1.xpose.msra.mxu0 0.0
    %295 = vmatprep.subr.mxu0 0.0
    %296 = vmatpush1.xpose.msra.mxu0 0.0
    %297 = vmatprep.subr.mxu0 0.0
    %298 = vmatpush1.xpose.msra.mxu0 0.0
    %299 = vmatprep.subr.mxu0 0.0
    %300 = vmatpush1.xpose.msra.mxu0 0.0
    %301 = vmatprep.subr.mxu0 0.0
    %302 = vmatpush1.xpose.msra.mxu0 0.0
    %303 = vmatprep.subr.mxu0 0.0
    %304 = vmatpush1.xpose.msra.mxu0 0.0
    %305 = vmatprep.subr.mxu0 0.0
    %306 = vmatpush1.xpose.msra.mxu0 0.0
    %307 = vmatprep.subr.mxu0 0.0
    %308 = vmatpush1.xpose.msra.mxu0 %v275
    %309 = vmatprep.subr.mxu0 0.0
    %310 = vmatpush2.xpose.msra.mxu0 0.0
    %311 = vmatprep.subr.mxu0 0.0
    %312 = vmatpush2.xpose.msra.mxu0 0.0
    %313 = vmatprep.subr.mxu0 0.0
    %314 = vmatpush2.xpose.msra.mxu0 0.0
    %315 = vmatprep.subr.mxu0 0.0
    %316 = vmatpush2.xpose.msra.mxu0 0.0
    %317 = vmatprep.subr.mxu0 0.0
    %318 = vmatpush2.xpose.msra.mxu0 0.0
    %319 = vmatprep.subr.mxu0 0.0
    %320 = vmatpush2.xpose.msra.mxu0 0.0
    %321 = vmatprep.subr.mxu0 0.0
    %322 = vmatpush2.xpose.msra.mxu0 0.0
    %323 = vmatprep.subr.mxu0 0.0
    %324 = vmatpush2.xpose.msra.mxu0 0.0
    %325 = vmatprep.subr.mxu0 0.0
    %326 = vmatpush2.xpose.msra.mxu0 0.0
    %327 = vmatprep.subr.mxu0 0.0
    %328 = vmatpush2.xpose.msra.mxu0 0.0
    %329 = vmatprep.subr.mxu0 0.0
    %330 = vmatpush2.xpose.msra.mxu0 0.0
    %331 = vmatprep.subr.mxu0 0.0
    %332 = vmatpush2.xpose.msra.mxu0 0.0
    %333 = vmatprep.subr.mxu0 0.0
    %334 = vmatpush2.xpose.msra.mxu0 0.0
    %335 = vmatprep.subr.mxu0 0.0
    %336 = vmatpush2.xpose.msra.mxu0 0.0
    %337 = vmatprep.subr.mxu0 0.0
    %338 = vmatpush2.xpose.msra.mxu0 0.0
    %339 = vmatprep.subr.mxu0 0.0
    %340 = vmatpush2.xpose.msra.mxu0 0.0
    %341 = vmatprep.mubr.f32.mxu0 0.0
    %342 = vmatmul.mubr.f32.gmra.mxu0 %v273
    %v343 = vpop.f32.mrf.mxu0
    %v344 = vadd.f32 0.0, %v343
    %v345 = vpop.f32.mrf.mxu0
    %346 = vdwg.mxu0
    %347 = vrot.lane.b32.xlu0 %v168, 96
    %v348 = vpop.permute.xlu0 %347
    %v349 = vsel %vm196, %v168, 0
    %v351 = vsel %vm196, %v348, 0
    %353 = vmatprep.subr.mxu0 0.0
    %354 = vmatpush1.xpose.msra.mxu0 0.0
    %355 = vmatprep.subr.mxu0 0.0
    %356 = vmatpush1.xpose.msra.mxu0 0.0
    %357 = vmatprep.subr.mxu0 0.0
    %358 = vmatpush1.xpose.msra.mxu0 0.0
    %359 = vmatprep.subr.mxu0 0.0
    %360 = vmatpush1.xpose.msra.mxu0 0.0
    %361 = vmatprep.subr.mxu0 0.0
    %362 = vmatpush1.xpose.msra.mxu0 0.0
    %363 = vmatprep.subr.mxu0 0.0
    %364 = vmatpush1.xpose.msra.mxu0 0.0
    %365 = vmatprep.subr.mxu0 0.0
    %366 = vmatpush1.xpose.msra.mxu0 0.0
    %367 = vmatprep.subr.mxu0 0.0
    %368 = vmatpush1.xpose.msra.mxu0 0.0
    %369 = vmatprep.subr.mxu0 0.0
    %370 = vmatpush1.xpose.msra.mxu0 0.0
    %371 = vmatprep.subr.mxu0 0.0
    %372 = vmatpush1.xpose.msra.mxu0 0.0
    %373 = vmatprep.subr.mxu0 0.0
    %374 = vmatpush1.xpose.msra.mxu0 0.0
    %375 = vmatprep.subr.mxu0 0.0
    %376 = vmatpush1.xpose.msra.mxu0 0.0
    %377 = vmatprep.subr.mxu0 0.0
    %378 = vmatpush1.xpose.msra.mxu0 0.0
    %379 = vmatprep.subr.mxu0 0.0
    %380 = vmatpush1.xpose.msra.mxu0 0.0
    %381 = vmatprep.subr.mxu0 0.0
    %382 = vmatpush1.xpose.msra.mxu0 0.0
    %383 = vmatprep.subr.mxu0 0.0
    %384 = vmatpush1.xpose.msra.mxu0 %v351
    %385 = vmatprep.subr.mxu0 0.0
    %386 = vmatpush2.xpose.msra.mxu0 0.0
    %387 = vmatprep.subr.mxu0 0.0
    %388 = vmatpush2.xpose.msra.mxu0 0.0
    %389 = vmatprep.subr.mxu0 0.0
    %390 = vmatpush2.xpose.msra.mxu0 0.0
    %391 = vmatprep.subr.mxu0 0.0
    %392 = vmatpush2.xpose.msra.mxu0 0.0
    %393 = vmatprep.subr.mxu0 0.0
    %394 = vmatpush2.xpose.msra.mxu0 0.0
    %395 = vmatprep.subr.mxu0 0.0
    %396 = vmatpush2.xpose.msra.mxu0 0.0
    %397 = vmatprep.subr.mxu0 0.0
    %398 = vmatpush2.xpose.msra.mxu0 0.0
    %399 = vmatprep.subr.mxu0 0.0
    %400 = vmatpush2.xpose.msra.mxu0 0.0
    %401 = vmatprep.subr.mxu0 0.0
    %402 = vmatpush2.xpose.msra.mxu0 0.0
    %403 = vmatprep.subr.mxu0 0.0
    %404 = vmatpush2.xpose.msra.mxu0 0.0
    %405 = vmatprep.subr.mxu0 0.0
    %406 = vmatpush2.xpose.msra.mxu0 0.0
    %407 = vmatprep.subr.mxu0 0.0
    %408 = vmatpush2.xpose.msra.mxu0 0.0
    %409 = vmatprep.subr.mxu0 0.0
    %410 = vmatpush2.xpose.msra.mxu0 0.0
    %411 = vmatprep.subr.mxu0 0.0
    %412 = vmatpush2.xpose.msra.mxu0 0.0
    %413 = vmatprep.subr.mxu0 0.0
    %414 = vmatpush2.xpose.msra.mxu0 0.0
    %415 = vmatprep.subr.mxu0 0.0
    %416 = vmatpush2.xpose.msra.mxu0 0.0
    %417 = vmatprep.mubr.f32.mxu0 0.0
    %418 = vmatmul.mubr.f32.gmra.mxu0 %v349
    %v419 = vpop.f32.mrf.mxu0
    %v420 = vadd.f32 0.0, %v419
    %v421 = vpop.f32.mrf.mxu0
    %422 = vdwg.mxu0
    %423 = vrot.lane.b32.xlu0 %v170, 96
    %v424 = vpop.permute.xlu0 %423
    %v425 = vsel %vm196, %v170, 0
    %v427 = vsel %vm196, %v424, 0
    %429 = vmatprep.subr.mxu0 0.0
    %430 = vmatpush1.xpose.msra.mxu0 0.0
    %431 = vmatprep.subr.mxu0 0.0
    %432 = vmatpush1.xpose.msra.mxu0 0.0
    %433 = vmatprep.subr.mxu0 0.0
    %434 = vmatpush1.xpose.msra.mxu0 0.0
    %435 = vmatprep.subr.mxu0 0.0
    %436 = vmatpush1.xpose.msra.mxu0 0.0
    %437 = vmatprep.subr.mxu0 0.0
    %438 = vmatpush1.xpose.msra.mxu0 0.0
    %439 = vmatprep.subr.mxu0 0.0
    %440 = vmatpush1.xpose.msra.mxu0 0.0
    %441 = vmatprep.subr.mxu0 0.0
    %442 = vmatpush1.xpose.msra.mxu0 0.0
    %443 = vmatprep.subr.mxu0 0.0
    %444 = vmatpush1.xpose.msra.mxu0 0.0
    %445 = vmatprep.subr.mxu0 0.0
    %446 = vmatpush1.xpose.msra.mxu0 0.0
    %447 = vmatprep.subr.mxu0 0.0
    %448 = vmatpush1.xpose.msra.mxu0 0.0
    %449 = vmatprep.subr.mxu0 0.0
    %450 = vmatpush1.xpose.msra.mxu0 0.0
    %451 = vmatprep.subr.mxu0 0.0
    %452 = vmatpush1.xpose.msra.mxu0 0.0
    %453 = vmatprep.subr.mxu0 0.0
    %454 = vmatpush1.xpose.msra.mxu0 0.0
    %455 = vmatprep.subr.mxu0 0.0
    %456 = vmatpush1.xpose.msra.mxu0 0.0
    %457 = vmatprep.subr.mxu0 0.0
    %458 = vmatpush1.xpose.msra.mxu0 0.0
    %459 = vmatprep.subr.mxu0 0.0
    %460 = vmatpush1.xpose.msra.mxu0 %v427
    %461 = vmatprep.subr.mxu0 0.0
    %462 = vmatpush2.xpose.msra.mxu0 0.0
    %463 = vmatprep.subr.mxu0 0.0
    %464 = vmatpush2.xpose.msra.mxu0 0.0
    %465 = vmatprep.subr.mxu0 0.0
    %466 = vmatpush2.xpose.msra.mxu0 0.0
    %467 = vmatprep.subr.mxu0 0.0
    %468 = vmatpush2.xpose.msra.mxu0 0.0
    %469 = vmatprep.subr.mxu0 0.0
    %470 = vmatpush2.xpose.msra.mxu0 0.0
    %471 = vmatprep.subr.mxu0 0.0
    %472 = vmatpush2.xpose.msra.mxu0 0.0
    %473 = vmatprep.subr.mxu0 0.0
    %474 = vmatpush2.xpose.msra.mxu0 0.0
    %475 = vmatprep.subr.mxu0 0.0
    %476 = vmatpush2.xpose.msra.mxu0 0.0
    %477 = vmatprep.subr.mxu0 0.0
    %478 = vmatpush2.xpose.msra.mxu0 0.0
    %479 = vmatprep.subr.mxu0 0.0
    %480 = vmatpush2.xpose.msra.mxu0 0.0
    %481 = vmatprep.subr.mxu0 0.0
    %482 = vmatpush2.xpose.msra.mxu0 0.0
    %483 = vmatprep.subr.mxu0 0.0
    %484 = vmatpush2.xpose.msra.mxu0 0.0
    %485 = vmatprep.subr.mxu0 0.0
    %486 = vmatpush2.xpose.msra.mxu0 0.0
    %487 = vmatprep.subr.mxu0 0.0
    %488 = vmatpush2.xpose.msra.mxu0 0.0
    %489 = vmatprep.subr.mxu0 0.0
    %490 = vmatpush2.xpose.msra.mxu0 0.0
    %491 = vmatprep.subr.mxu0 0.0
    %492 = vmatpush2.xpose.msra.mxu0 0.0
    %493 = vmatprep.mubr.f32.mxu0 0.0
    %494 = vmatmul.mubr.f32.gmra.mxu0 %v425
    %v495 = vpop.f32.mrf.mxu0
    %v496 = vadd.f32 0.0, %v495
    %v497 = vpop.f32.mrf.mxu0
    %498 = vdwg.mxu0
    %499 = vrot.lane.b32.xlu0 %v172, 96
    %v500 = vpop.permute.xlu0 %499
    %v501 = vsel %vm196, %v172, 0
    %v503 = vsel %vm196, %v500, 0
    %505 = vmatprep.subr.mxu0 0.0
    %506 = vmatpush1.xpose.msra.mxu0 0.0
    %507 = vmatprep.subr.mxu0 0.0
    %508 = vmatpush1.xpose.msra.mxu0 0.0
    %509 = vmatprep.subr.mxu0 0.0
    %510 = vmatpush1.xpose.msra.mxu0 0.0
    %511 = vmatprep.subr.mxu0 0.0
    %512 = vmatpush1.xpose.msra.mxu0 0.0
    %513 = vmatprep.subr.mxu0 0.0
    %514 = vmatpush1.xpose.msra.mxu0 0.0
    %515 = vmatprep.subr.mxu0 0.0
    %516 = vmatpush1.xpose.msra.mxu0 0.0
    %517 = vmatprep.subr.mxu0 0.0
    %518 = vmatpush1.xpose.msra.mxu0 0.0
    %519 = vmatprep.subr.mxu0 0.0
    %520 = vmatpush1.xpose.msra.mxu0 0.0
    %521 = vmatprep.subr.mxu0 0.0
    %522 = vmatpush1.xpose.msra.mxu0 0.0
    %523 = vmatprep.subr.mxu0 0.0
    %524 = vmatpush1.xpose.msra.mxu0 0.0
    %525 = vmatprep.subr.mxu0 0.0
    %526 = vmatpush1.xpose.msra.mxu0 0.0
    %527 = vmatprep.subr.mxu0 0.0
    %528 = vmatpush1.xpose.msra.mxu0 0.0
    %529 = vmatprep.subr.mxu0 0.0
    %530 = vmatpush1.xpose.msra.mxu0 0.0
    %531 = vmatprep.subr.mxu0 0.0
    %532 = vmatpush1.xpose.msra.mxu0 0.0
    %533 = vmatprep.subr.mxu0 0.0
    %534 = vmatpush1.xpose.msra.mxu0 0.0
    %535 = vmatprep.subr.mxu0 0.0
    %536 = vmatpush1.xpose.msra.mxu0 %v503
    %537 = vmatprep.subr.mxu0 0.0
    %538 = vmatpush2.xpose.msra.mxu0 0.0
    %539 = vmatprep.subr.mxu0 0.0
    %540 = vmatpush2.xpose.msra.mxu0 0.0
    %541 = vmatprep.subr.mxu0 0.0
    %542 = vmatpush2.xpose.msra.mxu0 0.0
    %543 = vmatprep.subr.mxu0 0.0
    %544 = vmatpush2.xpose.msra.mxu0 0.0
    %545 = vmatprep.subr.mxu0 0.0
    %546 = vmatpush2.xpose.msra.mxu0 0.0
    %547 = vmatprep.subr.mxu0 0.0
    %548 = vmatpush2.xpose.msra.mxu0 0.0
    %549 = vmatprep.subr.mxu0 0.0
    %550 = vmatpush2.xpose.msra.mxu0 0.0
    %551 = vmatprep.subr.mxu0 0.0
    %552 = vmatpush2.xpose.msra.mxu0 0.0
    %553 = vmatprep.subr.mxu0 0.0
    %554 = vmatpush2.xpose.msra.mxu0 0.0
    %555 = vmatprep.subr.mxu0 0.0
    %556 = vmatpush2.xpose.msra.mxu0 0.0
    %557 = vmatprep.subr.mxu0 0.0
    %558 = vmatpush2.xpose.msra.mxu0 0.0
    %559 = vmatprep.subr.mxu0 0.0
    %560 = vmatpush2.xpose.msra.mxu0 0.0
    %561 = vmatprep.subr.mxu0 0.0
    %562 = vmatpush2.xpose.msra.mxu0 0.0
    %563 = vmatprep.subr.mxu0 0.0
    %564 = vmatpush2.xpose.msra.mxu0 0.0
    %565 = vmatprep.subr.mxu0 0.0
    %566 = vmatpush2.xpose.msra.mxu0 0.0
    %567 = vmatprep.subr.mxu0 0.0
    %568 = vmatpush2.xpose.msra.mxu0 0.0
    %569 = vmatprep.mubr.f32.mxu0 0.0
    %570 = vmatmul.mubr.f32.gmra.mxu0 %v501
    %v571 = vpop.f32.mrf.mxu0
    %v572 = vadd.f32 0.0, %v571
    %v573 = vpop.f32.mrf.mxu0
    %574 = vdwg.mxu0
    %575 = vrot.lane.b32.xlu0 %v174, 96
    %v576 = vpop.permute.xlu0 %575
    %v577 = vsel %vm196, %v174, 0
    %v579 = vsel %vm196, %v576, 0
    %581 = vmatprep.subr.mxu0 0.0
    %582 = vmatpush1.xpose.msra.mxu0 0.0
    %583 = vmatprep.subr.mxu0 0.0
    %584 = vmatpush1.xpose.msra.mxu0 0.0
    %585 = vmatprep.subr.mxu0 0.0
    %586 = vmatpush1.xpose.msra.mxu0 0.0
    %587 = vmatprep.subr.mxu0 0.0
    %588 = vmatpush1.xpose.msra.mxu0 0.0
    %589 = vmatprep.subr.mxu0 0.0
    %590 = vmatpush1.xpose.msra.mxu0 0.0
    %591 = vmatprep.subr.mxu0 0.0
    %592 = vmatpush1.xpose.msra.mxu0 0.0
    %593 = vmatprep.subr.mxu0 0.0
    %594 = vmatpush1.xpose.msra.mxu0 0.0
    %595 = vmatprep.subr.mxu0 0.0
    %596 = vmatpush1.xpose.msra.mxu0 0.0
    %597 = vmatprep.subr.mxu0 0.0
    %598 = vmatpush1.xpose.msra.mxu0 0.0
    %599 = vmatprep.subr.mxu0 0.0
    %600 = vmatpush1.xpose.msra.mxu0 0.0
    %601 = vmatprep.subr.mxu0 0.0
    %602 = vmatpush1.xpose.msra.mxu0 0.0
    %603 = vmatprep.subr.mxu0 0.0
    %604 = vmatpush1.xpose.msra.mxu0 0.0
    %605 = vmatprep.subr.mxu0 0.0
    %606 = vmatpush1.xpose.msra.mxu0 0.0
    %607 = vmatprep.subr.mxu0 0.0
    %608 = vmatpush1.xpose.msra.mxu0 0.0
    %609 = vmatprep.subr.mxu0 0.0
    %610 = vmatpush1.xpose.msra.mxu0 0.0
    %611 = vmatprep.subr.mxu0 0.0
    %612 = vmatpush1.xpose.msra.mxu0 %v579
    %613 = vmatprep.subr.mxu0 0.0
    %614 = vmatpush2.xpose.msra.mxu0 0.0
    %615 = vmatprep.subr.mxu0 0.0
    %616 = vmatpush2.xpose.msra.mxu0 0.0
    %617 = vmatprep.subr.mxu0 0.0
    %618 = vmatpush2.xpose.msra.mxu0 0.0
    %619 = vmatprep.subr.mxu0 0.0
    %620 = vmatpush2.xpose.msra.mxu0 0.0
    %621 = vmatprep.subr.mxu0 0.0
    %622 = vmatpush2.xpose.msra.mxu0 0.0
    %623 = vmatprep.subr.mxu0 0.0
    %624 = vmatpush2.xpose.msra.mxu0 0.0
    %625 = vmatprep.subr.mxu0 0.0
    %626 = vmatpush2.xpose.msra.mxu0 0.0
    %627 = vmatprep.subr.mxu0 0.0
    %628 = vmatpush2.xpose.msra.mxu0 0.0
    %629 = vmatprep.subr.mxu0 0.0
    %630 = vmatpush2.xpose.msra.mxu0 0.0
    %631 = vmatprep.subr.mxu0 0.0
    %632 = vmatpush2.xpose.msra.mxu0 0.0
    %633 = vmatprep.subr.mxu0 0.0
    %634 = vmatpush2.xpose.msra.mxu0 0.0
    %635 = vmatprep.subr.mxu0 0.0
    %636 = vmatpush2.xpose.msra.mxu0 0.0
    %637 = vmatprep.subr.mxu0 0.0
    %638 = vmatpush2.xpose.msra.mxu0 0.0
    %639 = vmatprep.subr.mxu0 0.0
    %640 = vmatpush2.xpose.msra.mxu0 0.0
    %641 = vmatprep.subr.mxu0 0.0
    %642 = vmatpush2.xpose.msra.mxu0 0.0
    %643 = vmatprep.subr.mxu0 0.0
    %644 = vmatpush2.xpose.msra.mxu0 0.0
    %645 = vmatprep.mubr.f32.mxu0 0.0
    %646 = vmatmul.mubr.f32.gmra.mxu0 %v577
    %v647 = vpop.f32.mrf.mxu0
    %v648 = vadd.f32 0.0, %v647
    %v649 = vpop.f32.mrf.mxu0
    %650 = vdwg.mxu0
    %651 = vrot.lane.b32.xlu0 %v176, 96
    %v652 = vpop.permute.xlu0 %651
    %v653 = vsel %vm196, %v176, 0
    %v655 = vsel %vm196, %v652, 0
    %657 = vmatprep.subr.mxu0 0.0
    %658 = vmatpush1.xpose.msra.mxu0 0.0
    %659 = vmatprep.subr.mxu0 0.0
    %660 = vmatpush1.xpose.msra.mxu0 0.0
    %661 = vmatprep.subr.mxu0 0.0
    %662 = vmatpush1.xpose.msra.mxu0 0.0
    %663 = vmatprep.subr.mxu0 0.0
    %664 = vmatpush1.xpose.msra.mxu0 0.0
    %665 = vmatprep.subr.mxu0 0.0
    %666 = vmatpush1.xpose.msra.mxu0 0.0
    %667 = vmatprep.subr.mxu0 0.0
    %668 = vmatpush1.xpose.msra.mxu0 0.0
    %669 = vmatprep.subr.mxu0 0.0
    %670 = vmatpush1.xpose.msra.mxu0 0.0
    %671 = vmatprep.subr.mxu0 0.0
    %672 = vmatpush1.xpose.msra.mxu0 0.0
    %673 = vmatprep.subr.mxu0 0.0
    %674 = vmatpush1.xpose.msra.mxu0 0.0
    %675 = vmatprep.subr.mxu0 0.0
    %676 = vmatpush1.xpose.msra.mxu0 0.0
    %677 = vmatprep.subr.mxu0 0.0
    %678 = vmatpush1.xpose.msra.mxu0 0.0
    %679 = vmatprep.subr.mxu0 0.0
    %680 = vmatpush1.xpose.msra.mxu0 0.0
    %681 = vmatprep.subr.mxu0 0.0
    %682 = vmatpush1.xpose.msra.mxu0 0.0
    %683 = vmatprep.subr.mxu0 0.0
    %684 = vmatpush1.xpose.msra.mxu0 0.0
    %685 = vmatprep.subr.mxu0 0.0
    %686 = vmatpush1.xpose.msra.mxu0 0.0
    %687 = vmatprep.subr.mxu0 0.0
    %688 = vmatpush1.xpose.msra.mxu0 %v655
    %689 = vmatprep.subr.mxu0 0.0
    %690 = vmatpush2.xpose.msra.mxu0 0.0
    %691 = vmatprep.subr.mxu0 0.0
    %692 = vmatpush2.xpose.msra.mxu0 0.0
    %693 = vmatprep.subr.mxu0 0.0
    %694 = vmatpush2.xpose.msra.mxu0 0.0
    %695 = vmatprep.subr.mxu0 0.0
    %696 = vmatpush2.xpose.msra.mxu0 0.0
    %697 = vmatprep.subr.mxu0 0.0
    %698 = vmatpush2.xpose.msra.mxu0 0.0
    %699 = vmatprep.subr.mxu0 0.0
    %700 = vmatpush2.xpose.msra.mxu0 0.0
    %701 = vmatprep.subr.mxu0 0.0
    %702 = vmatpush2.xpose.msra.mxu0 0.0
    %703 = vmatprep.subr.mxu0 0.0
    %704 = vmatpush2.xpose.msra.mxu0 0.0
    %705 = vmatprep.subr.mxu0 0.0
    %706 = vmatpush2.xpose.msra.mxu0 0.0
    %707 = vmatprep.subr.mxu0 0.0
    %708 = vmatpush2.xpose.msra.mxu0 0.0
    %709 = vmatprep.subr.mxu0 0.0
    %710 = vmatpush2.xpose.msra.mxu0 0.0
    %711 = vmatprep.subr.mxu0 0.0
    %712 = vmatpush2.xpose.msra.mxu0 0.0
    %713 = vmatprep.subr.mxu0 0.0
    %714 = vmatpush2.xpose.msra.mxu0 0.0
    %715 = vmatprep.subr.mxu0 0.0
    %716 = vmatpush2.xpose.msra.mxu0 0.0
    %717 = vmatprep.subr.mxu0 0.0
    %718 = vmatpush2.xpose.msra.mxu0 0.0
    %719 = vmatprep.subr.mxu0 0.0
    %720 = vmatpush2.xpose.msra.mxu0 0.0
    %721 = vmatprep.mubr.f32.mxu0 0.0
    %722 = vmatmul.mubr.f32.gmra.mxu0 %v653
    %v723 = vpop.f32.mrf.mxu0
    %v724 = vadd.f32 0.0, %v723
    %v725 = vpop.f32.mrf.mxu0
    %726 = vdwg.mxu0
    %727 = vrot.lane.b32.xlu0 %v178, 96
    %v728 = vpop.permute.xlu0 %727
    %v729 = vsel %vm196, %v178, 0
    %v731 = vsel %vm196, %v728, 0
    %733 = vmatprep.subr.mxu0 0.0
    %734 = vmatpush1.xpose.msra.mxu0 0.0
    %735 = vmatprep.subr.mxu0 0.0
    %736 = vmatpush1.xpose.msra.mxu0 0.0
    %737 = vmatprep.subr.mxu0 0.0
    %738 = vmatpush1.xpose.msra.mxu0 0.0
    %739 = vmatprep.subr.mxu0 0.0
    %740 = vmatpush1.xpose.msra.mxu0 0.0
    %741 = vmatprep.subr.mxu0 0.0
    %742 = vmatpush1.xpose.msra.mxu0 0.0
    %743 = vmatprep.subr.mxu0 0.0
    %744 = vmatpush1.xpose.msra.mxu0 0.0
    %745 = vmatprep.subr.mxu0 0.0
    %746 = vmatpush1.xpose.msra.mxu0 0.0
    %747 = vmatprep.subr.mxu0 0.0
    %748 = vmatpush1.xpose.msra.mxu0 0.0
    %749 = vmatprep.subr.mxu0 0.0
    %750 = vmatpush1.xpose.msra.mxu0 0.0
    %751 = vmatprep.subr.mxu0 0.0
    %752 = vmatpush1.xpose.msra.mxu0 0.0
    %753 = vmatprep.subr.mxu0 0.0
    %754 = vmatpush1.xpose.msra.mxu0 0.0
    %755 = vmatprep.subr.mxu0 0.0
    %756 = vmatpush1.xpose.msra.mxu0 0.0
    %757 = vmatprep.subr.mxu0 0.0
    %758 = vmatpush1.xpose.msra.mxu0 0.0
    %759 = vmatprep.subr.mxu0 0.0
    %760 = vmatpush1.xpose.msra.mxu0 0.0
    %761 = vmatprep.subr.mxu0 0.0
    %762 = vmatpush1.xpose.msra.mxu0 0.0
    %763 = vmatprep.subr.mxu0 0.0
    %764 = vmatpush1.xpose.msra.mxu0 %v731
    %765 = vmatprep.subr.mxu0 0.0
    %766 = vmatpush2.xpose.msra.mxu0 0.0
    %767 = vmatprep.subr.mxu0 0.0
    %768 = vmatpush2.xpose.msra.mxu0 0.0
    %769 = vmatprep.subr.mxu0 0.0
    %770 = vmatpush2.xpose.msra.mxu0 0.0
    %771 = vmatprep.subr.mxu0 0.0
    %772 = vmatpush2.xpose.msra.mxu0 0.0
    %773 = vmatprep.subr.mxu0 0.0
    %774 = vmatpush2.xpose.msra.mxu0 0.0
    %775 = vmatprep.subr.mxu0 0.0
    %776 = vmatpush2.xpose.msra.mxu0 0.0
    %777 = vmatprep.subr.mxu0 0.0
    %778 = vmatpush2.xpose.msra.mxu0 0.0
    %779 = vmatprep.subr.mxu0 0.0
    %780 = vmatpush2.xpose.msra.mxu0 0.0
    %781 = vmatprep.subr.mxu0 0.0
    %782 = vmatpush2.xpose.msra.mxu0 0.0
    %783 = vmatprep.subr.mxu0 0.0
    %784 = vmatpush2.xpose.msra.mxu0 0.0
    %785 = vmatprep.subr.mxu0 0.0
    %786 = vmatpush2.xpose.msra.mxu0 0.0
    %787 = vmatprep.subr.mxu0 0.0
    %788 = vmatpush2.xpose.msra.mxu0 0.0
    %789 = vmatprep.subr.mxu0 0.0
    %790 = vmatpush2.xpose.msra.mxu0 0.0
    %791 = vmatprep.subr.mxu0 0.0
    %792 = vmatpush2.xpose.msra.mxu0 0.0
    %793 = vmatprep.subr.mxu0 0.0
    %794 = vmatpush2.xpose.msra.mxu0 0.0
    %795 = vmatprep.subr.mxu0 0.0
    %796 = vmatpush2.xpose.msra.mxu0 0.0
    %797 = vmatprep.mubr.f32.mxu0 0.0
    %798 = vmatmul.mubr.f32.gmra.mxu0 %v729
    %v799 = vpop.f32.mrf.mxu0
    %v800 = vadd.f32 0.0, %v799
    %v801 = vpop.f32.mrf.mxu0
    %802 = vdwg.mxu0
    %803 = vrot.lane.b32.xlu0 %v161, 96
    %v804 = vpop.permute.xlu0 %803
    %v805 = vsel %vm196, %v161, 0
    %v807 = vsel %vm196, %v804, 0
    %809 = vmatprep.subr.mxu0 0.0
    %810 = vmatpush1.xpose.msra.mxu0 0.0
    %811 = vmatprep.subr.mxu0 0.0
    %812 = vmatpush1.xpose.msra.mxu0 0.0
    %813 = vmatprep.subr.mxu0 0.0
    %814 = vmatpush1.xpose.msra.mxu0 0.0
    %815 = vmatprep.subr.mxu0 0.0
    %816 = vmatpush1.xpose.msra.mxu0 0.0
    %817 = vmatprep.subr.mxu0 0.0
    %818 = vmatpush1.xpose.msra.mxu0 0.0
    %819 = vmatprep.subr.mxu0 0.0
    %820 = vmatpush1.xpose.msra.mxu0 0.0
    %821 = vmatprep.subr.mxu0 0.0
    %822 = vmatpush1.xpose.msra.mxu0 0.0
    %823 = vmatprep.subr.mxu0 0.0
    %824 = vmatpush1.xpose.msra.mxu0 0.0
    %825 = vmatprep.subr.mxu0 0.0
    %826 = vmatpush1.xpose.msra.mxu0 0.0
    %827 = vmatprep.subr.mxu0 0.0
    %828 = vmatpush1.xpose.msra.mxu0 0.0
    %829 = vmatprep.subr.mxu0 0.0
    %830 = vmatpush1.xpose.msra.mxu0 0.0
    %831 = vmatprep.subr.mxu0 0.0
    %832 = vmatpush1.xpose.msra.mxu0 0.0
    %833 = vmatprep.subr.mxu0 0.0
    %834 = vmatpush1.xpose.msra.mxu0 0.0
    %835 = vmatprep.subr.mxu0 0.0
    %836 = vmatpush1.xpose.msra.mxu0 0.0
    %837 = vmatprep.subr.mxu0 0.0
    %838 = vmatpush1.xpose.msra.mxu0 0.0
    %839 = vmatprep.subr.mxu0 0.0
    %840 = vmatpush1.xpose.msra.mxu0 %v807
    %841 = vmatprep.subr.mxu0 0.0
    %842 = vmatpush2.xpose.msra.mxu0 0.0
    %843 = vmatprep.subr.mxu0 0.0
    %844 = vmatpush2.xpose.msra.mxu0 0.0
    %845 = vmatprep.subr.mxu0 0.0
    %846 = vmatpush2.xpose.msra.mxu0 0.0
    %847 = vmatprep.subr.mxu0 0.0
    %848 = vmatpush2.xpose.msra.mxu0 0.0
    %849 = vmatprep.subr.mxu0 0.0
    %850 = vmatpush2.xpose.msra.mxu0 0.0
    %851 = vmatprep.subr.mxu0 0.0
    %852 = vmatpush2.xpose.msra.mxu0 0.0
    %853 = vmatprep.subr.mxu0 0.0
    %854 = vmatpush2.xpose.msra.mxu0 0.0
    %855 = vmatprep.subr.mxu0 0.0
    %856 = vmatpush2.xpose.msra.mxu0 0.0
    %857 = vmatprep.subr.mxu0 0.0
    %858 = vmatpush2.xpose.msra.mxu0 0.0
    %859 = vmatprep.subr.mxu0 0.0
    %860 = vmatpush2.xpose.msra.mxu0 0.0
    %861 = vmatprep.subr.mxu0 0.0
    %862 = vmatpush2.xpose.msra.mxu0 0.0
    %863 = vmatprep.subr.mxu0 0.0
    %864 = vmatpush2.xpose.msra.mxu0 0.0
    %865 = vmatprep.subr.mxu0 0.0
    %866 = vmatpush2.xpose.msra.mxu0 0.0
    %867 = vmatprep.subr.mxu0 0.0
    %868 = vmatpush2.xpose.msra.mxu0 0.0
    %869 = vmatprep.subr.mxu0 0.0
    %870 = vmatpush2.xpose.msra.mxu0 0.0
    %871 = vmatprep.subr.mxu0 0.0
    %872 = vmatpush2.xpose.msra.mxu0 0.0
    %873 = vmatprep.mubr.f32.mxu0 0.0
    %874 = vmatmul.mubr.f32.gmra.mxu0 %v805
    %v875 = vpop.f32.mrf.mxu0
    %v876 = vadd.f32 0.0, %v875
    %v877 = vpop.f32.mrf.mxu0
    %878 = vdwg.mxu0
    %879 = vrot.lane.b32.xlu0 %v181, 96
    %v880 = vpop.permute.xlu0 %879
    %v881 = vsel %vm196, %v181, 0
    %v883 = vsel %vm196, %v880, 0
    %885 = vmatprep.subr.mxu0 0.0
    %886 = vmatpush1.xpose.msra.mxu0 0.0
    %887 = vmatprep.subr.mxu0 0.0
    %888 = vmatpush1.xpose.msra.mxu0 0.0
    %889 = vmatprep.subr.mxu0 0.0
    %890 = vmatpush1.xpose.msra.mxu0 0.0
    %891 = vmatprep.subr.mxu0 0.0
    %892 = vmatpush1.xpose.msra.mxu0 0.0
    %893 = vmatprep.subr.mxu0 0.0
    %894 = vmatpush1.xpose.msra.mxu0 0.0
    %895 = vmatprep.subr.mxu0 0.0
    %896 = vmatpush1.xpose.msra.mxu0 0.0
    %897 = vmatprep.subr.mxu0 0.0
    %898 = vmatpush1.xpose.msra.mxu0 0.0
    %899 = vmatprep.subr.mxu0 0.0
    %900 = vmatpush1.xpose.msra.mxu0 0.0
    %901 = vmatprep.subr.mxu0 0.0
    %902 = vmatpush1.xpose.msra.mxu0 0.0
    %903 = vmatprep.subr.mxu0 0.0
    %904 = vmatpush1.xpose.msra.mxu0 0.0
    %905 = vmatprep.subr.mxu0 0.0
    %906 = vmatpush1.xpose.msra.mxu0 0.0
    %907 = vmatprep.subr.mxu0 0.0
    %908 = vmatpush1.xpose.msra.mxu0 0.0
    %909 = vmatprep.subr.mxu0 0.0
    %910 = vmatpush1.xpose.msra.mxu0 0.0
    %911 = vmatprep.subr.mxu0 0.0
    %912 = vmatpush1.xpose.msra.mxu0 0.0
    %913 = vmatprep.subr.mxu0 0.0
    %914 = vmatpush1.xpose.msra.mxu0 0.0
    %915 = vmatprep.subr.mxu0 0.0
    %916 = vmatpush1.xpose.msra.mxu0 %v883
    %917 = vmatprep.subr.mxu0 0.0
    %918 = vmatpush2.xpose.msra.mxu0 0.0
    %919 = vmatprep.subr.mxu0 0.0
    %920 = vmatpush2.xpose.msra.mxu0 0.0
    %921 = vmatprep.subr.mxu0 0.0
    %922 = vmatpush2.xpose.msra.mxu0 0.0
    %923 = vmatprep.subr.mxu0 0.0
    %924 = vmatpush2.xpose.msra.mxu0 0.0
    %925 = vmatprep.subr.mxu0 0.0
    %926 = vmatpush2.xpose.msra.mxu0 0.0
    %927 = vmatprep.subr.mxu0 0.0
    %928 = vmatpush2.xpose.msra.mxu0 0.0
    %929 = vmatprep.subr.mxu0 0.0
    %930 = vmatpush2.xpose.msra.mxu0 0.0
    %931 = vmatprep.subr.mxu0 0.0
    %932 = vmatpush2.xpose.msra.mxu0 0.0
    %933 = vmatprep.subr.mxu0 0.0
    %934 = vmatpush2.xpose.msra.mxu0 0.0
    %935 = vmatprep.subr.mxu0 0.0
    %936 = vmatpush2.xpose.msra.mxu0 0.0
    %937 = vmatprep.subr.mxu0 0.0
    %938 = vmatpush2.xpose.msra.mxu0 0.0
    %939 = vmatprep.subr.mxu0 0.0
    %940 = vmatpush2.xpose.msra.mxu0 0.0
    %941 = vmatprep.subr.mxu0 0.0
    %942 = vmatpush2.xpose.msra.mxu0 0.0
    %943 = vmatprep.subr.mxu0 0.0
    %944 = vmatpush2.xpose.msra.mxu0 0.0
    %945 = vmatprep.subr.mxu0 0.0
    %946 = vmatpush2.xpose.msra.mxu0 0.0
    %947 = vmatprep.subr.mxu0 0.0
    %948 = vmatpush2.xpose.msra.mxu0 0.0
    %949 = vmatprep.mubr.f32.mxu0 0.0
    %950 = vmatmul.mubr.f32.gmra.mxu0 %v881
    %v951 = vpop.f32.mrf.mxu0
    %v952 = vadd.f32 0.0, %v951
    %v953 = vpop.f32.mrf.mxu0
    %954 = vdwg.mxu0
    %955 = vrot.lane.b32.xlu0 %v183, 96
    %v956 = vpop.permute.xlu0 %955
    %v957 = vsel %vm196, %v183, 0
    %v959 = vsel %vm196, %v956, 0
    %961 = vmatprep.subr.mxu0 0.0
    %962 = vmatpush1.xpose.msra.mxu0 0.0
    %963 = vmatprep.subr.mxu0 0.0
    %964 = vmatpush1.xpose.msra.mxu0 0.0
    %965 = vmatprep.subr.mxu0 0.0
    %966 = vmatpush1.xpose.msra.mxu0 0.0
    %967 = vmatprep.subr.mxu0 0.0
    %968 = vmatpush1.xpose.msra.mxu0 0.0
    %969 = vmatprep.subr.mxu0 0.0
    %970 = vmatpush1.xpose.msra.mxu0 0.0
    %971 = vmatprep.subr.mxu0 0.0
    %972 = vmatpush1.xpose.msra.mxu0 0.0
    %973 = vmatprep.subr.mxu0 0.0
    %974 = vmatpush1.xpose.msra.mxu0 0.0
    %975 = vmatprep.subr.mxu0 0.0
    %976 = vmatpush1.xpose.msra.mxu0 0.0
    %977 = vmatprep.subr.mxu0 0.0
    %978 = vmatpush1.xpose.msra.mxu0 0.0
    %979 = vmatprep.subr.mxu0 0.0
    %980 = vmatpush1.xpose.msra.mxu0 0.0
    %981 = vmatprep.subr.mxu0 0.0
    %982 = vmatpush1.xpose.msra.mxu0 0.0
    %983 = vmatprep.subr.mxu0 0.0
    %984 = vmatpush1.xpose.msra.mxu0 0.0
    %985 = vmatprep.subr.mxu0 0.0
    %986 = vmatpush1.xpose.msra.mxu0 0.0
    %987 = vmatprep.subr.mxu0 0.0
    %988 = vmatpush1.xpose.msra.mxu0 0.0
    %989 = vmatprep.subr.mxu0 0.0
    %990 = vmatpush1.xpose.msra.mxu0 0.0
    %991 = vmatprep.subr.mxu0 0.0
    %992 = vmatpush1.xpose.msra.mxu0 %v959
    %993 = vmatprep.subr.mxu0 0.0
    %994 = vmatpush2.xpose.msra.mxu0 0.0
    %995 = vmatprep.subr.mxu0 0.0
    %996 = vmatpush2.xpose.msra.mxu0 0.0
    %997 = vmatprep.subr.mxu0 0.0
    %998 = vmatpush2.xpose.msra.mxu0 0.0
    %999 = vmatprep.subr.mxu0 0.0
    %1000 = vmatpush2.xpose.msra.mxu0 0.0
    %1001 = vmatprep.subr.mxu0 0.0
    %1002 = vmatpush2.xpose.msra.mxu0 0.0
    %1003 = vmatprep.subr.mxu0 0.0
    %1004 = vmatpush2.xpose.msra.mxu0 0.0
    %1005 = vmatprep.subr.mxu0 0.0
    %1006 = vmatpush2.xpose.msra.mxu0 0.0
    %1007 = vmatprep.subr.mxu0 0.0
    %1008 = vmatpush2.xpose.msra.mxu0 0.0
    %1009 = vmatprep.subr.mxu0 0.0
    %1010 = vmatpush2.xpose.msra.mxu0 0.0
    %1011 = vmatprep.subr.mxu0 0.0
    %1012 = vmatpush2.xpose.msra.mxu0 0.0
    %1013 = vmatprep.subr.mxu0 0.0
    %1014 = vmatpush2.xpose.msra.mxu0 0.0
    %1015 = vmatprep.subr.mxu0 0.0
    %1016 = vmatpush2.xpose.msra.mxu0 0.0
    %1017 = vmatprep.subr.mxu0 0.0
    %1018 = vmatpush2.xpose.msra.mxu0 0.0
    %1019 = vmatprep.subr.mxu0 0.0
    %1020 = vmatpush2.xpose.msra.mxu0 0.0
    %1021 = vmatprep.subr.mxu0 0.0
    %1022 = vmatpush2.xpose.msra.mxu0 0.0
    %1023 = vmatprep.subr.mxu0 0.0
    %1024 = vmatpush2.xpose.msra.mxu0 0.0
    %1025 = vmatprep.mubr.f32.mxu0 0.0
    %1026 = vmatmul.mubr.f32.gmra.mxu0 %v957
    %v1027 = vpop.f32.mrf.mxu0
    %v1028 = vadd.f32 0.0, %v1027
    %v1029 = vpop.f32.mrf.mxu0
    %1030 = vdwg.mxu0
    %1031 = vrot.lane.b32.xlu0 %v185, 96
    %v1032 = vpop.permute.xlu0 %1031
    %v1033 = vsel %vm196, %v185, 0
    %v1035 = vsel %vm196, %v1032, 0
    %1037 = vmatprep.subr.mxu0 0.0
    %1038 = vmatpush1.xpose.msra.mxu0 0.0
    %1039 = vmatprep.subr.mxu0 0.0
    %1040 = vmatpush1.xpose.msra.mxu0 0.0
    %1041 = vmatprep.subr.mxu0 0.0
    %1042 = vmatpush1.xpose.msra.mxu0 0.0
    %1043 = vmatprep.subr.mxu0 0.0
    %1044 = vmatpush1.xpose.msra.mxu0 0.0
    %1045 = vmatprep.subr.mxu0 0.0
    %1046 = vmatpush1.xpose.msra.mxu0 0.0
    %1047 = vmatprep.subr.mxu0 0.0
    %1048 = vmatpush1.xpose.msra.mxu0 0.0
    %1049 = vmatprep.subr.mxu0 0.0
    %1050 = vmatpush1.xpose.msra.mxu0 0.0
    %1051 = vmatprep.subr.mxu0 0.0
    %1052 = vmatpush1.xpose.msra.mxu0 0.0
    %1053 = vmatprep.subr.mxu0 0.0
    %1054 = vmatpush1.xpose.msra.mxu0 0.0
    %1055 = vmatprep.subr.mxu0 0.0
    %1056 = vmatpush1.xpose.msra.mxu0 0.0
    %1057 = vmatprep.subr.mxu0 0.0
    %1058 = vmatpush1.xpose.msra.mxu0 0.0
    %1059 = vmatprep.subr.mxu0 0.0
    %1060 = vmatpush1.xpose.msra.mxu0 0.0
    %1061 = vmatprep.subr.mxu0 0.0
    %1062 = vmatpush1.xpose.msra.mxu0 0.0
    %1063 = vmatprep.subr.mxu0 0.0
    %1064 = vmatpush1.xpose.msra.mxu0 0.0
    %1065 = vmatprep.subr.mxu0 0.0
    %1066 = vmatpush1.xpose.msra.mxu0 0.0
    %1067 = vmatprep.subr.mxu0 0.0
    %1068 = vmatpush1.xpose.msra.mxu0 %v1035
    %1069 = vmatprep.subr.mxu0 0.0
    %1070 = vmatpush2.xpose.msra.mxu0 0.0
    %1071 = vmatprep.subr.mxu0 0.0
    %1072 = vmatpush2.xpose.msra.mxu0 0.0
    %1073 = vmatprep.subr.mxu0 0.0
    %1074 = vmatpush2.xpose.msra.mxu0 0.0
    %1075 = vmatprep.subr.mxu0 0.0
    %1076 = vmatpush2.xpose.msra.mxu0 0.0
    %1077 = vmatprep.subr.mxu0 0.0
    %1078 = vmatpush2.xpose.msra.mxu0 0.0
    %1079 = vmatprep.subr.mxu0 0.0
    %1080 = vmatpush2.xpose.msra.mxu0 0.0
    %1081 = vmatprep.subr.mxu0 0.0
    %1082 = vmatpush2.xpose.msra.mxu0 0.0
    %1083 = vmatprep.subr.mxu0 0.0
    %1084 = vmatpush2.xpose.msra.mxu0 0.0
    %1085 = vmatprep.subr.mxu0 0.0
    %1086 = vmatpush2.xpose.msra.mxu0 0.0
    %1087 = vmatprep.subr.mxu0 0.0
    %1088 = vmatpush2.xpose.msra.mxu0 0.0
    %1089 = vmatprep.subr.mxu0 0.0
    %1090 = vmatpush2.xpose.msra.mxu0 0.0
    %1091 = vmatprep.subr.mxu0 0.0
    %1092 = vmatpush2.xpose.msra.mxu0 0.0
    %1093 = vmatprep.subr.mxu0 0.0
    %1094 = vmatpush2.xpose.msra.mxu0 0.0
    %1095 = vmatprep.subr.mxu0 0.0
    %1096 = vmatpush2.xpose.msra.mxu0 0.0
    %1097 = vmatprep.subr.mxu0 0.0
    %1098 = vmatpush2.xpose.msra.mxu0 0.0
    %1099 = vmatprep.subr.mxu0 0.0
    %1100 = vmatpush2.xpose.msra.mxu0 0.0
    %1101 = vmatprep.mubr.f32.mxu0 0.0
    %1102 = vmatmul.mubr.f32.gmra.mxu0 %v1033
    %v1103 = vpop.f32.mrf.mxu0
    %v1104 = vadd.f32 0.0, %v1103
    %v1105 = vpop.f32.mrf.mxu0
    %1106 = vdwg.mxu0
    %1107 = vrot.lane.b32.xlu0 %v187, 96
    %v1108 = vpop.permute.xlu0 %1107
    %v1109 = vsel %vm196, %v187, 0
    %v1111 = vsel %vm196, %v1108, 0
    %1113 = vmatprep.subr.mxu0 0.0
    %1114 = vmatpush1.xpose.msra.mxu0 0.0
    %1115 = vmatprep.subr.mxu0 0.0
    %1116 = vmatpush1.xpose.msra.mxu0 0.0
    %1117 = vmatprep.subr.mxu0 0.0
    %1118 = vmatpush1.xpose.msra.mxu0 0.0
    %1119 = vmatprep.subr.mxu0 0.0
    %1120 = vmatpush1.xpose.msra.mxu0 0.0
    %1121 = vmatprep.subr.mxu0 0.0
    %1122 = vmatpush1.xpose.msra.mxu0 0.0
    %1123 = vmatprep.subr.mxu0 0.0
    %1124 = vmatpush1.xpose.msra.mxu0 0.0
    %1125 = vmatprep.subr.mxu0 0.0
    %1126 = vmatpush1.xpose.msra.mxu0 0.0
    %1127 = vmatprep.subr.mxu0 0.0
    %1128 = vmatpush1.xpose.msra.mxu0 0.0
    %1129 = vmatprep.subr.mxu0 0.0
    %1130 = vmatpush1.xpose.msra.mxu0 0.0
    %1131 = vmatprep.subr.mxu0 0.0
    %1132 = vmatpush1.xpose.msra.mxu0 0.0
    %1133 = vmatprep.subr.mxu0 0.0
    %1134 = vmatpush1.xpose.msra.mxu0 0.0
    %1135 = vmatprep.subr.mxu0 0.0
    %1136 = vmatpush1.xpose.msra.mxu0 0.0
    %1137 = vmatprep.subr.mxu0 0.0
    %1138 = vmatpush1.xpose.msra.mxu0 0.0
    %1139 = vmatprep.subr.mxu0 0.0
    %1140 = vmatpush1.xpose.msra.mxu0 0.0
    %1141 = vmatprep.subr.mxu0 0.0
    %1142 = vmatpush1.xpose.msra.mxu0 0.0
    %1143 = vmatprep.subr.mxu0 0.0
    %1144 = vmatpush1.xpose.msra.mxu0 %v1111
    %1145 = vmatprep.subr.mxu0 0.0
    %1146 = vmatpush2.xpose.msra.mxu0 0.0
    %1147 = vmatprep.subr.mxu0 0.0
    %1148 = vmatpush2.xpose.msra.mxu0 0.0
    %1149 = vmatprep.subr.mxu0 0.0
    %1150 = vmatpush2.xpose.msra.mxu0 0.0
    %1151 = vmatprep.subr.mxu0 0.0
    %1152 = vmatpush2.xpose.msra.mxu0 0.0
    %1153 = vmatprep.subr.mxu0 0.0
    %1154 = vmatpush2.xpose.msra.mxu0 0.0
    %1155 = vmatprep.subr.mxu0 0.0
    %1156 = vmatpush2.xpose.msra.mxu0 0.0
    %1157 = vmatprep.subr.mxu0 0.0
    %1158 = vmatpush2.xpose.msra.mxu0 0.0
    %1159 = vmatprep.subr.mxu0 0.0
    %1160 = vmatpush2.xpose.msra.mxu0 0.0
    %1161 = vmatprep.subr.mxu0 0.0
    %1162 = vmatpush2.xpose.msra.mxu0 0.0
    %1163 = vmatprep.subr.mxu0 0.0
    %1164 = vmatpush2.xpose.msra.mxu0 0.0
    %1165 = vmatprep.subr.mxu0 0.0
    %1166 = vmatpush2.xpose.msra.mxu0 0.0
    %1167 = vmatprep.subr.mxu0 0.0
    %1168 = vmatpush2.xpose.msra.mxu0 0.0
    %1169 = vmatprep.subr.mxu0 0.0
    %1170 = vmatpush2.xpose.msra.mxu0 0.0
    %1171 = vmatprep.subr.mxu0 0.0
    %1172 = vmatpush2.xpose.msra.mxu0 0.0
    %1173 = vmatprep.subr.mxu0 0.0
    %1174 = vmatpush2.xpose.msra.mxu0 0.0
    %1175 = vmatprep.subr.mxu0 0.0
    %1176 = vmatpush2.xpose.msra.mxu0 0.0
    %1177 = vmatprep.mubr.f32.mxu0 0.0
    %1178 = vmatmul.mubr.f32.gmra.mxu0 %v1109
    %v1179 = vpop.f32.mrf.mxu0
    %v1180 = vadd.f32 0.0, %v1179
    %v1181 = vpop.f32.mrf.mxu0
    %1182 = vdwg.mxu0
    %1183 = vrot.lane.b32.xlu0 %v189, 96
    %v1184 = vpop.permute.xlu0 %1183
    %v1185 = vsel %vm196, %v189, 0
    %v1187 = vsel %vm196, %v1184, 0
    %1189 = vmatprep.subr.mxu0 0.0
    %1190 = vmatpush1.xpose.msra.mxu0 0.0
    %1191 = vmatprep.subr.mxu0 0.0
    %1192 = vmatpush1.xpose.msra.mxu0 0.0
    %1193 = vmatprep.subr.mxu0 0.0
    %1194 = vmatpush1.xpose.msra.mxu0 0.0
    %1195 = vmatprep.subr.mxu0 0.0
    %1196 = vmatpush1.xpose.msra.mxu0 0.0
    %1197 = vmatprep.subr.mxu0 0.0
    %1198 = vmatpush1.xpose.msra.mxu0 0.0
    %1199 = vmatprep.subr.mxu0 0.0
    %1200 = vmatpush1.xpose.msra.mxu0 0.0
    %1201 = vmatprep.subr.mxu0 0.0
    %1202 = vmatpush1.xpose.msra.mxu0 0.0
    %1203 = vmatprep.subr.mxu0 0.0
    %1204 = vmatpush1.xpose.msra.mxu0 0.0
    %1205 = vmatprep.subr.mxu0 0.0
    %1206 = vmatpush1.xpose.msra.mxu0 0.0
    %1207 = vmatprep.subr.mxu0 0.0
    %1208 = vmatpush1.xpose.msra.mxu0 0.0
    %1209 = vmatprep.subr.mxu0 0.0
    %1210 = vmatpush1.xpose.msra.mxu0 0.0
    %1211 = vmatprep.subr.mxu0 0.0
    %1212 = vmatpush1.xpose.msra.mxu0 0.0
    %1213 = vmatprep.subr.mxu0 0.0
    %1214 = vmatpush1.xpose.msra.mxu0 0.0
    %1215 = vmatprep.subr.mxu0 0.0
    %1216 = vmatpush1.xpose.msra.mxu0 0.0
    %1217 = vmatprep.subr.mxu0 0.0
    %1218 = vmatpush1.xpose.msra.mxu0 0.0
    %1219 = vmatprep.subr.mxu0 0.0
    %1220 = vmatpush1.xpose.msra.mxu0 %v1187
    %1221 = vmatprep.subr.mxu0 0.0
    %1222 = vmatpush2.xpose.msra.mxu0 0.0
    %1223 = vmatprep.subr.mxu0 0.0
    %1224 = vmatpush2.xpose.msra.mxu0 0.0
    %1225 = vmatprep.subr.mxu0 0.0
    %1226 = vmatpush2.xpose.msra.mxu0 0.0
    %1227 = vmatprep.subr.mxu0 0.0
    %1228 = vmatpush2.xpose.msra.mxu0 0.0
    %1229 = vmatprep.subr.mxu0 0.0
    %1230 = vmatpush2.xpose.msra.mxu0 0.0
    %1231 = vmatprep.subr.mxu0 0.0
    %1232 = vmatpush2.xpose.msra.mxu0 0.0
    %1233 = vmatprep.subr.mxu0 0.0
    %1234 = vmatpush2.xpose.msra.mxu0 0.0
    %1235 = vmatprep.subr.mxu0 0.0
    %1236 = vmatpush2.xpose.msra.mxu0 0.0
    %1237 = vmatprep.subr.mxu0 0.0
    %1238 = vmatpush2.xpose.msra.mxu0 0.0
    %1239 = vmatprep.subr.mxu0 0.0
    %1240 = vmatpush2.xpose.msra.mxu0 0.0
    %1241 = vmatprep.subr.mxu0 0.0
    %1242 = vmatpush2.xpose.msra.mxu0 0.0
    %1243 = vmatprep.subr.mxu0 0.0
    %1244 = vmatpush2.xpose.msra.mxu0 0.0
    %1245 = vmatprep.subr.mxu0 0.0
    %1246 = vmatpush2.xpose.msra.mxu0 0.0
    %1247 = vmatprep.subr.mxu0 0.0
    %1248 = vmatpush2.xpose.msra.mxu0 0.0
    %1249 = vmatprep.subr.mxu0 0.0
    %1250 = vmatpush2.xpose.msra.mxu0 0.0
    %1251 = vmatprep.subr.mxu0 0.0
    %1252 = vmatpush2.xpose.msra.mxu0 0.0
    %1253 = vmatprep.mubr.f32.mxu0 0.0
    %1254 = vmatmul.mubr.f32.gmra.mxu0 %v1185
    %v1255 = vpop.f32.mrf.mxu0
    %v1256 = vadd.f32 0.0, %v1255
    %v1257 = vpop.f32.mrf.mxu0
    %1258 = vdwg.mxu0
    %1259 = vrot.lane.b32.xlu0 %v191, 96
    %v1260 = vpop.permute.xlu0 %1259
    %v1261 = vsel %vm196, %v191, 0
    %v1263 = vsel %vm196, %v1260, 0
    %1265 = vmatprep.subr.mxu0 0.0
    %1266 = vmatpush1.xpose.msra.mxu0 0.0
    %1267 = vmatprep.subr.mxu0 0.0
    %1268 = vmatpush1.xpose.msra.mxu0 0.0
    %1269 = vmatprep.subr.mxu0 0.0
    %1270 = vmatpush1.xpose.msra.mxu0 0.0
    %1271 = vmatprep.subr.mxu0 0.0
    %1272 = vmatpush1.xpose.msra.mxu0 0.0
    %1273 = vmatprep.subr.mxu0 0.0
    %1274 = vmatpush1.xpose.msra.mxu0 0.0
    %1275 = vmatprep.subr.mxu0 0.0
    %1276 = vmatpush1.xpose.msra.mxu0 0.0
    %1277 = vmatprep.subr.mxu0 0.0
    %1278 = vmatpush1.xpose.msra.mxu0 0.0
    %1279 = vmatprep.subr.mxu0 0.0
    %1280 = vmatpush1.xpose.msra.mxu0 0.0
    %1281 = vmatprep.subr.mxu0 0.0
    %1282 = vmatpush1.xpose.msra.mxu0 0.0
    %1283 = vmatprep.subr.mxu0 0.0
    %1284 = vmatpush1.xpose.msra.mxu0 0.0
    %1285 = vmatprep.subr.mxu0 0.0
    %1286 = vmatpush1.xpose.msra.mxu0 0.0
    %1287 = vmatprep.subr.mxu0 0.0
    %1288 = vmatpush1.xpose.msra.mxu0 0.0
    %1289 = vmatprep.subr.mxu0 0.0
    %1290 = vmatpush1.xpose.msra.mxu0 0.0
    %1291 = vmatprep.subr.mxu0 0.0
    %1292 = vmatpush1.xpose.msra.mxu0 0.0
    %1293 = vmatprep.subr.mxu0 0.0
    %1294 = vmatpush1.xpose.msra.mxu0 0.0
    %1295 = vmatprep.subr.mxu0 0.0
    %1296 = vmatpush1.xpose.msra.mxu0 %v1263
    %1297 = vmatprep.subr.mxu0 0.0
    %1298 = vmatpush2.xpose.msra.mxu0 0.0
    %1299 = vmatprep.subr.mxu0 0.0
    %1300 = vmatpush2.xpose.msra.mxu0 0.0
    %1301 = vmatprep.subr.mxu0 0.0
    %1302 = vmatpush2.xpose.msra.mxu0 0.0
    %1303 = vmatprep.subr.mxu0 0.0
    %1304 = vmatpush2.xpose.msra.mxu0 0.0
    %1305 = vmatprep.subr.mxu0 0.0
    %1306 = vmatpush2.xpose.msra.mxu0 0.0
    %1307 = vmatprep.subr.mxu0 0.0
    %1308 = vmatpush2.xpose.msra.mxu0 0.0
    %1309 = vmatprep.subr.mxu0 0.0
    %1310 = vmatpush2.xpose.msra.mxu0 0.0
    %1311 = vmatprep.subr.mxu0 0.0
    %1312 = vmatpush2.xpose.msra.mxu0 0.0
    %1313 = vmatprep.subr.mxu0 0.0
    %1314 = vmatpush2.xpose.msra.mxu0 0.0
    %1315 = vmatprep.subr.mxu0 0.0
    %1316 = vmatpush2.xpose.msra.mxu0 0.0
    %1317 = vmatprep.subr.mxu0 0.0
    %1318 = vmatpush2.xpose.msra.mxu0 0.0
    %1319 = vmatprep.subr.mxu0 0.0
    %1320 = vmatpush2.xpose.msra.mxu0 0.0
    %1321 = vmatprep.subr.mxu0 0.0
    %1322 = vmatpush2.xpose.msra.mxu0 0.0
    %1323 = vmatprep.subr.mxu0 0.0
    %1324 = vmatpush2.xpose.msra.mxu0 0.0
    %1325 = vmatprep.subr.mxu0 0.0
    %1326 = vmatpush2.xpose.msra.mxu0 0.0
    %1327 = vmatprep.subr.mxu0 0.0
    %1328 = vmatpush2.xpose.msra.mxu0 0.0
    %1329 = vmatprep.mubr.f32.mxu0 0.0
    %1330 = vmatmul.mubr.f32.gmra.mxu0 %v1261
    %v1331 = vpop.f32.mrf.mxu0
    %v1332 = vadd.f32 0.0, %v1331
    %v1333 = vpop.f32.mrf.mxu0
    %1334 = vdwg.mxu0
    %1335 = vrot.lane.b32.xlu0 %v193, 96
    %v1336 = vpop.permute.xlu0 %1335
    %v1337 = vsel %vm196, %v193, 0
    %v1339 = vsel %vm196, %v1336, 0
    %1341 = vmatprep.subr.mxu0 0.0
    %1342 = vmatpush1.xpose.msra.mxu0 0.0
    %1343 = vmatprep.subr.mxu0 0.0
    %1344 = vmatpush1.xpose.msra.mxu0 0.0
    %1345 = vmatprep.subr.mxu0 0.0
    %1346 = vmatpush1.xpose.msra.mxu0 0.0
    %1347 = vmatprep.subr.mxu0 0.0
    %1348 = vmatpush1.xpose.msra.mxu0 0.0
    %1349 = vmatprep.subr.mxu0 0.0
    %1350 = vmatpush1.xpose.msra.mxu0 0.0
    %1351 = vmatprep.subr.mxu0 0.0
    %1352 = vmatpush1.xpose.msra.mxu0 0.0
    %1353 = vmatprep.subr.mxu0 0.0
    %1354 = vmatpush1.xpose.msra.mxu0 0.0
    %1355 = vmatprep.subr.mxu0 0.0
    %1356 = vmatpush1.xpose.msra.mxu0 0.0
    %1357 = vmatprep.subr.mxu0 0.0
    %1358 = vmatpush1.xpose.msra.mxu0 0.0
    %1359 = vmatprep.subr.mxu0 0.0
    %1360 = vmatpush1.xpose.msra.mxu0 0.0
    %1361 = vmatprep.subr.mxu0 0.0
    %1362 = vmatpush1.xpose.msra.mxu0 0.0
    %1363 = vmatprep.subr.mxu0 0.0
    %1364 = vmatpush1.xpose.msra.mxu0 0.0
    %1365 = vmatprep.subr.mxu0 0.0
    %1366 = vmatpush1.xpose.msra.mxu0 0.0
    %1367 = vmatprep.subr.mxu0 0.0
    %1368 = vmatpush1.xpose.msra.mxu0 0.0
    %1369 = vmatprep.subr.mxu0 0.0
    %1370 = vmatpush1.xpose.msra.mxu0 0.0
    %1371 = vmatprep.subr.mxu0 0.0
    %1372 = vmatpush1.xpose.msra.mxu0 %v1339
    %1373 = vmatprep.subr.mxu0 0.0
    %1374 = vmatpush2.xpose.msra.mxu0 0.0
    %1375 = vmatprep.subr.mxu0 0.0
    %1376 = vmatpush2.xpose.msra.mxu0 0.0
    %1377 = vmatprep.subr.mxu0 0.0
    %1378 = vmatpush2.xpose.msra.mxu0 0.0
    %1379 = vmatprep.subr.mxu0 0.0
    %1380 = vmatpush2.xpose.msra.mxu0 0.0
    %1381 = vmatprep.subr.mxu0 0.0
    %1382 = vmatpush2.xpose.msra.mxu0 0.0
    %1383 = vmatprep.subr.mxu0 0.0
    %1384 = vmatpush2.xpose.msra.mxu0 0.0
    %1385 = vmatprep.subr.mxu0 0.0
    %1386 = vmatpush2.xpose.msra.mxu0 0.0
    %1387 = vmatprep.subr.mxu0 0.0
    %1388 = vmatpush2.xpose.msra.mxu0 0.0
    %1389 = vmatprep.subr.mxu0 0.0
    %1390 = vmatpush2.xpose.msra.mxu0 0.0
    %1391 = vmatprep.subr.mxu0 0.0
    %1392 = vmatpush2.xpose.msra.mxu0 0.0
    %1393 = vmatprep.subr.mxu0 0.0
    %1394 = vmatpush2.xpose.msra.mxu0 0.0
    %1395 = vmatprep.subr.mxu0 0.0
    %1396 = vmatpush2.xpose.msra.mxu0 0.0
    %1397 = vmatprep.subr.mxu0 0.0
    %1398 = vmatpush2.xpose.msra.mxu0 0.0
    %1399 = vmatprep.subr.mxu0 0.0
    %1400 = vmatpush2.xpose.msra.mxu0 0.0
    %1401 = vmatprep.subr.mxu0 0.0
    %1402 = vmatpush2.xpose.msra.mxu0 0.0
    %1403 = vmatprep.subr.mxu0 0.0
    %1404 = vmatpush2.xpose.msra.mxu0 0.0
    %1405 = vmatprep.mubr.f32.mxu0 0.0
    %1406 = vmatmul.mubr.f32.gmra.mxu0 %v1337
    %v1407 = vpop.f32.mrf.mxu0
    %v1408 = vadd.f32 0.0, %v1407
    %v1409 = vpop.f32.mrf.mxu0
    %1410 = vdwg.mxu0
    %v1411 = vmul.f32 %v268, 0.5
    %v1412 = vmul.f32 %v344, 0.5
    %v1413 = vmul.f32 %v420, 0.5
    %v1414 = vmul.f32 %v496, 0.5
    %v1415 = vmul.f32 %v572, 0.5
    %v1416 = vmul.f32 %v648, 0.5
    %v1417 = vmul.f32 %v724, 0.5
    %v1418 = vmul.f32 %v800, 0.5
    %v1419 = vmul.f32 %v876, 0.5
    %v1420 = vmul.f32 %v952, 0.5
    %v1421 = vmul.f32 %v1028, 0.5
    %v1422 = vmul.f32 %v1104, 0.5
    %v1423 = vmul.f32 %v1180, 0.5
    %v1424 = vmul.f32 %v1256, 0.5
    %v1425 = vmul.f32 %v1332, 0.5
    %v1426 = vmul.f32 %v1408, 0.5
    %vm1427 = vcmask 64512
    %v1428 = vsel %vm1427, %v1411, -inf
    %1429 = vmax.xlane.f32.xlu0 %v1428
    %v1430 = vpop.xlane.xlu0 %1429
    %v1431 = vsel %vm1427, %v1412, -inf
    %1432 = vmax.xlane.f32.xlu0 %v1431
    %v1433 = vpop.xlane.xlu0 %1432
    %v1434 = vsel %vm1427, %v1413, -inf
    %1435 = vmax.xlane.f32.xlu0 %v1434
    %v1436 = vpop.xlane.xlu0 %1435
    %v1437 = vsel %vm1427, %v1414, -inf
    %1438 = vmax.xlane.f32.xlu0 %v1437
    %v1439 = vpop.xlane.xlu0 %1438
    %v1440 = vsel %vm1427, %v1415, -inf
    %1441 = vmax.xlane.f32.xlu0 %v1440
    %v1442 = vpop.xlane.xlu0 %1441
    %v1443 = vsel %vm1427, %v1416, -inf
    %1444 = vmax.xlane.f32.xlu0 %v1443
    %v1445 = vpop.xlane.xlu0 %1444
    %v1446 = vsel %vm1427, %v1417, -inf
    %1447 = vmax.xlane.f32.xlu0 %v1446
    %v1448 = vpop.xlane.xlu0 %1447
    %v1449 = vsel %vm1427, %v1418, -inf
    %1450 = vmax.xlane.f32.xlu0 %v1449
    %v1451 = vpop.xlane.xlu0 %1450
    %v1452 = vsel %vm1427, %v1419, -inf
    %1453 = vmax.xlane.f32.xlu0 %v1452
    %v1454 = vpop.xlane.xlu0 %1453
    %v1455 = vsel %vm1427, %v1420, -inf
    %1456 = vmax.xlane.f32.xlu0 %v1455
    %v1457 = vpop.xlane.xlu0 %1456
    %v1458 = vsel %vm1427, %v1421, -inf
    %1459 = vmax.xlane.f32.xlu0 %v1458
    %v1460 = vpop.xlane.xlu0 %1459
    %v1461 = vsel %vm1427, %v1422, -inf
    %1462 = vmax.xlane.f32.xlu0 %v1461
    %v1463 = vpop.xlane.xlu0 %1462
    %v1464 = vsel %vm1427, %v1423, -inf
    %1465 = vmax.xlane.f32.xlu0 %v1464
    %v1466 = vpop.xlane.xlu0 %1465
    %v1467 = vsel %vm1427, %v1424, -inf
    %1468 = vmax.xlane.f32.xlu0 %v1467
    %v1469 = vpop.xlane.xlu0 %1468
    %v1470 = vsel %vm1427, %v1425, -inf
    %1471 = vmax.xlane.f32.xlu0 %v1470
    %v1472 = vpop.xlane.xlu0 %1471
    %v1473 = vsel %vm1427, %v1426, -inf
    %1474 = vmax.xlane.f32.xlu0 %v1473
    %v1475 = vpop.xlane.xlu0 %1474
    %v1476 = vsub.f32 %v1411, %v1430
    %v1477 = vsub.f32 %v1412, %v1433
    %v1478 = vsub.f32 %v1413, %v1436
    %v1479 = vsub.f32 %v1414, %v1439
    %v1480 = vsub.f32 %v1415, %v1442
    %v1481 = vsub.f32 %v1416, %v1445
    %v1482 = vsub.f32 %v1417, %v1448
    %v1483 = vsub.f32 %v1418, %v1451
    %v1484 = vsub.f32 %v1419, %v1454
    %v1485 = vsub.f32 %v1420, %v1457
    %v1486 = vsub.f32 %v1421, %v1460
    %v1487 = vsub.f32 %v1422, %v1463
    %v1488 = vsub.f32 %v1423, %v1466
    %v1489 = vsub.f32 %v1424, %v1469
    %v1490 = vsub.f32 %v1425, %v1472
    %v1491 = vsub.f32 %v1426, %v1475
    %v1492 = vmul.f32 %v1476, 1.442695
    %v1493 = vpow.pop %v1492
    %v1494 = vmul.f32 %v1477, 1.442695
    %v1495 = vpow.pop %v1494
    %v1496 = vmul.f32 %v1478, 1.442695
    %v1497 = vpow.pop %v1496
    %v1498 = vmul.f32 %v1479, 1.442695
    %v1499 = vpow.pop %v1498
    %v1500 = vmul.f32 %v1480, 1.442695
    %v1501 = vpow.pop %v1500
    %v1502 = vmul.f32 %v1481, 1.442695
    %v1503 = vpow.pop %v1502
    %v1504 = vmul.f32 %v1482, 1.442695
    %v1505 = vpow.pop %v1504
    %v1506 = vmul.f32 %v1483, 1.442695
    %v1507 = vpow.pop %v1506
    %v1508 = vmul.f32 %v1484, 1.442695
    %v1509 = vpow.pop %v1508
    %v1510 = vmul.f32 %v1485, 1.442695
    %v1511 = vpow.pop %v1510
    %v1512 = vmul.f32 %v1486, 1.442695
    %v1513 = vpow.pop %v1512
    %v1514 = vmul.f32 %v1487, 1.442695
    %v1515 = vpow.pop %v1514
    %v1516 = vmul.f32 %v1488, 1.442695
    %v1517 = vpow.pop %v1516
    %v1518 = vmul.f32 %v1489, 1.442695
    %v1519 = vpow.pop %v1518
    %v1520 = vmul.f32 %v1490, 1.442695
    %v1521 = vpow.pop %v1520
    %v1522 = vmul.f32 %v1491, 1.442695
    %v1523 = vpow.pop %v1522
    %v1524 = vsel %vm1427, %v1493, 0.0
    %1525 = vadd.xlane.f32.xlu0 %v1524
    %v1526 = vpop.xlane.xlu0 %1525
    %v1527 = vsel %vm1427, %v1495, 0.0
    %1528 = vadd.xlane.f32.xlu0 %v1527
    %v1529 = vpop.xlane.xlu0 %1528
    %v1530 = vsel %vm1427, %v1497, 0.0
    %1531 = vadd.xlane.f32.xlu0 %v1530
    %v1532 = vpop.xlane.xlu0 %1531
    %v1533 = vsel %vm1427, %v1499, 0.0
    %1534 = vadd.xlane.f32.xlu0 %v1533
    %v1535 = vpop.xlane.xlu0 %1534
    %v1536 = vsel %vm1427, %v1501, 0.0
    %1537 = vadd.xlane.f32.xlu0 %v1536
    %v1538 = vpop.xlane.xlu0 %1537
    %v1539 = vsel %vm1427, %v1503, 0.0
    %1540 = vadd.xlane.f32.xlu0 %v1539
    %v1541 = vpop.xlane.xlu0 %1540
    %v1542 = vsel %vm1427, %v1505, 0.0
    %1543 = vadd.xlane.f32.xlu0 %v1542
    %v1544 = vpop.xlane.xlu0 %1543
    %v1545 = vsel %vm1427, %v1507, 0.0
    %1546 = vadd.xlane.f32.xlu0 %v1545
    %v1547 = vpop.xlane.xlu0 %1546
    %v1548 = vsel %vm1427, %v1509, 0.0
    %1549 = vadd.xlane.f32.xlu0 %v1548
    %v1550 = vpop.xlane.xlu0 %1549
    %v1551 = vsel %vm1427, %v1511, 0.0
    %1552 = vadd.xlane.f32.xlu0 %v1551
    %v1553 = vpop.xlane.xlu0 %1552
    %v1554 = vsel %vm1427, %v1513, 0.0
    %1555 = vadd.xlane.f32.xlu0 %v1554
    %v1556 = vpop.xlane.xlu0 %1555
    %v1557 = vsel %vm1427, %v1515, 0.0
    %1558 = vadd.xlane.f32.xlu0 %v1557
    %v1559 = vpop.xlane.xlu0 %1558
    %v1560 = vsel %vm1427, %v1517, 0.0
    %1561 = vadd.xlane.f32.xlu0 %v1560
    %v1562 = vpop.xlane.xlu0 %1561
    %v1563 = vsel %vm1427, %v1519, 0.0
    %1564 = vadd.xlane.f32.xlu0 %v1563
    %v1565 = vpop.xlane.xlu0 %1564
    %v1566 = vsel %vm1427, %v1521, 0.0
    %1567 = vadd.xlane.f32.xlu0 %v1566
    %v1568 = vpop.xlane.xlu0 %1567
    %v1569 = vsel %vm1427, %v1523, 0.0
    %1570 = vadd.xlane.f32.xlu0 %v1569
    %v1571 = vpop.xlane.xlu0 %1570
    %v1572 = vrcp.pop %v1526
    %v1573 = vrcp.pop %v1529
    %v1574 = vrcp.pop %v1532
    %v1575 = vrcp.pop %v1535
    %v1576 = vrcp.pop %v1538
    %v1577 = vrcp.pop %v1541
    %v1578 = vrcp.pop %v1544
    %v1579 = vrcp.pop %v1547
    %v1580 = vrcp.pop %v1550
    %v1581 = vrcp.pop %v1553
    %v1582 = vrcp.pop %v1556
    %v1583 = vrcp.pop %v1559
    %v1584 = vrcp.pop %v1562
    %v1585 = vrcp.pop %v1565
    %v1586 = vrcp.pop %v1568
    %v1587 = vrcp.pop %v1571
    %v1588 = vmul.f32 %v1493, %v1572
    %v1589 = vmul.f32 %v1495, %v1573
    %v1590 = vmul.f32 %v1497, %v1574
    %v1591 = vmul.f32 %v1499, %v1575
    %v1592 = vmul.f32 %v1501, %v1576
    %v1593 = vmul.f32 %v1503, %v1577
    %v1594 = vmul.f32 %v1505, %v1578
    %v1595 = vmul.f32 %v1507, %v1579
    %v1596 = vmul.f32 %v1509, %v1580
    %v1597 = vmul.f32 %v1511, %v1581
    %v1598 = vmul.f32 %v1513, %v1582
    %v1599 = vmul.f32 %v1515, %v1583
    %v1600 = vmul.f32 %v1517, %v1584
    %v1601 = vmul.f32 %v1519, %v1585
    %v1602 = vmul.f32 %v1521, %v1586
    %v1603 = vmul.f32 %v1523, %v1587
    %1604 = vrot.lane.b32.xlu0 %v156, 64
    %v1605 = vpop.permute.xlu0 %1604
    %v1608 = vsel %vm1427, %v1588, 0
    %1610 = vmatprep.subr.mxu0 0.0
    %1611 = vmatpush1.msra.mxu0 0.0
    %1612 = vmatprep.subr.mxu0 0.0
    %1613 = vmatpush1.msra.mxu0 0.0
    %1614 = vmatprep.subr.mxu0 0.0
    %1615 = vmatpush1.msra.mxu0 0.0
    %1616 = vmatprep.subr.mxu0 0.0
    %1617 = vmatpush1.msra.mxu0 0.0
    %1618 = vmatprep.subr.mxu0 0.0
    %1619 = vmatpush1.msra.mxu0 0.0
    %1620 = vmatprep.subr.mxu0 0.0
    %1621 = vmatpush1.msra.mxu0 0.0
    %1622 = vmatprep.subr.mxu0 0.0
    %1623 = vmatpush1.msra.mxu0 0.0
    %1624 = vmatprep.subr.mxu0 0.0
    %1625 = vmatpush1.msra.mxu0 0.0
    %1626 = vmatprep.subr.mxu0 0.0
    %1627 = vmatpush1.msra.mxu0 0.0
    %1628 = vmatprep.subr.mxu0 0.0
    %1629 = vmatpush1.msra.mxu0 0.0
    %1630 = vmatprep.subr.mxu0 0.0
    %1631 = vmatpush1.msra.mxu0 0.0
    %1632 = vmatprep.subr.mxu0 0.0
    %1633 = vmatpush1.msra.mxu0 0.0
    %1634 = vmatprep.subr.mxu0 0.0
    %1635 = vmatpush1.msra.mxu0 0.0
    %1636 = vmatprep.subr.mxu0 0.0
    %1637 = vmatpush1.msra.mxu0 0.0
    %1638 = vmatprep.subr.mxu0 0.0
    %1639 = vmatpush1.msra.mxu0 0.0
    %1640 = vmatprep.subr.mxu0 0.0
    %1641 = vmatpush1.msra.mxu0 %v1605
    %1642 = vmatprep.subr.mxu0 0.0
    %1643 = vmatpush2.msra.mxu0 0.0
    %1644 = vmatprep.subr.mxu0 0.0
    %1645 = vmatpush2.msra.mxu0 0.0
    %1646 = vmatprep.subr.mxu0 0.0
    %1647 = vmatpush2.msra.mxu0 0.0
    %1648 = vmatprep.subr.mxu0 0.0
    %1649 = vmatpush2.msra.mxu0 0.0
    %1650 = vmatprep.subr.mxu0 0.0
    %1651 = vmatpush2.msra.mxu0 0.0
    %1652 = vmatprep.subr.mxu0 0.0
    %1653 = vmatpush2.msra.mxu0 0.0
    %1654 = vmatprep.subr.mxu0 0.0
    %1655 = vmatpush2.msra.mxu0 0.0
    %1656 = vmatprep.subr.mxu0 0.0
    %1657 = vmatpush2.msra.mxu0 0.0
    %1658 = vmatprep.subr.mxu0 0.0
    %1659 = vmatpush2.msra.mxu0 0.0
    %1660 = vmatprep.subr.mxu0 0.0
    %1661 = vmatpush2.msra.mxu0 0.0
    %1662 = vmatprep.subr.mxu0 0.0
    %1663 = vmatpush2.msra.mxu0 0.0
    %1664 = vmatprep.subr.mxu0 0.0
    %1665 = vmatpush2.msra.mxu0 0.0
    %1666 = vmatprep.subr.mxu0 0.0
    %1667 = vmatpush2.msra.mxu0 0.0
    %1668 = vmatprep.subr.mxu0 0.0
    %1669 = vmatpush2.msra.mxu0 0.0
    %1670 = vmatprep.subr.mxu0 0.0
    %1671 = vmatpush2.msra.mxu0 0.0
    %1672 = vmatprep.subr.mxu0 0.0
    %1673 = vmatpush2.msra.mxu0 0.0
    %1674 = vmatprep.mubr.f32.mxu0 0.0
    %1675 = vmatmul.mubr.f32.gmra.mxu0 %v1608
    %v1676 = vpop.f32.mrf.mxu0
    %v1677 = vadd.f32 0.0, %v1676
    %v1678 = vpop.f32.mrf.mxu0
    %1679 = vdwg.mxu0
    %1680 = vrot.lane.b32.xlu0 %v166, 64
    %v1681 = vpop.permute.xlu0 %1680
    %v1684 = vsel %vm1427, %v1589, 0
    %1686 = vmatprep.subr.mxu0 0.0
    %1687 = vmatpush1.msra.mxu0 0.0
    %1688 = vmatprep.subr.mxu0 0.0
    %1689 = vmatpush1.msra.mxu0 0.0
    %1690 = vmatprep.subr.mxu0 0.0
    %1691 = vmatpush1.msra.mxu0 0.0
    %1692 = vmatprep.subr.mxu0 0.0
    %1693 = vmatpush1.msra.mxu0 0.0
    %1694 = vmatprep.subr.mxu0 0.0
    %1695 = vmatpush1.msra.mxu0 0.0
    %1696 = vmatprep.subr.mxu0 0.0
    %1697 = vmatpush1.msra.mxu0 0.0
    %1698 = vmatprep.subr.mxu0 0.0
    %1699 = vmatpush1.msra.mxu0 0.0
    %1700 = vmatprep.subr.mxu0 0.0
    %1701 = vmatpush1.msra.mxu0 0.0
    %1702 = vmatprep.subr.mxu0 0.0
    %1703 = vmatpush1.msra.mxu0 0.0
    %1704 = vmatprep.subr.mxu0 0.0
    %1705 = vmatpush1.msra.mxu0 0.0
    %1706 = vmatprep.subr.mxu0 0.0
    %1707 = vmatpush1.msra.mxu0 0.0
    %1708 = vmatprep.subr.mxu0 0.0
    %1709 = vmatpush1.msra.mxu0 0.0
    %1710 = vmatprep.subr.mxu0 0.0
    %1711 = vmatpush1.msra.mxu0 0.0
    %1712 = vmatprep.subr.mxu0 0.0
    %1713 = vmatpush1.msra.mxu0 0.0
    %1714 = vmatprep.subr.mxu0 0.0
    %1715 = vmatpush1.msra.mxu0 0.0
    %1716 = vmatprep.subr.mxu0 0.0
    %1717 = vmatpush1.msra.mxu0 %v1681
    %1718 = vmatprep.subr.mxu0 0.0
    %1719 = vmatpush2.msra.mxu0 0.0
    %1720 = vmatprep.subr.mxu0 0.0
    %1721 = vmatpush2.msra.mxu0 0.0
    %1722 = vmatprep.subr.mxu0 0.0
    %1723 = vmatpush2.msra.mxu0 0.0
    %1724 = vmatprep.subr.mxu0 0.0
    %1725 = vmatpush2.msra.mxu0 0.0
    %1726 = vmatprep.subr.mxu0 0.0
    %1727 = vmatpush2.msra.mxu0 0.0
    %1728 = vmatprep.subr.mxu0 0.0
    %1729 = vmatpush2.msra.mxu0 0.0
    %1730 = vmatprep.subr.mxu0 0.0
    %1731 = vmatpush2.msra.mxu0 0.0
    %1732 = vmatprep.subr.mxu0 0.0
    %1733 = vmatpush2.msra.mxu0 0.0
    %1734 = vmatprep.subr.mxu0 0.0
    %1735 = vmatpush2.msra.mxu0 0.0
    %1736 = vmatprep.subr.mxu0 0.0
    %1737 = vmatpush2.msra.mxu0 0.0
    %1738 = vmatprep.subr.mxu0 0.0
    %1739 = vmatpush2.msra.mxu0 0.0
    %1740 = vmatprep.subr.mxu0 0.0
    %1741 = vmatpush2.msra.mxu0 0.0
    %1742 = vmatprep.subr.mxu0 0.0
    %1743 = vmatpush2.msra.mxu0 0.0
    %1744 = vmatprep.subr.mxu0 0.0
    %1745 = vmatpush2.msra.mxu0 0.0
    %1746 = vmatprep.subr.mxu0 0.0
    %1747 = vmatpush2.msra.mxu0 0.0
    %1748 = vmatprep.subr.mxu0 0.0
    %1749 = vmatpush2.msra.mxu0 0.0
    %1750 = vmatprep.mubr.f32.mxu0 0.0
    %1751 = vmatmul.mubr.f32.gmra.mxu0 %v1684
    %v1752 = vpop.f32.mrf.mxu0
    %v1753 = vadd.f32 0.0, %v1752
    %v1754 = vpop.f32.mrf.mxu0
    %1755 = vdwg.mxu0
    %1756 = vrot.lane.b32.xlu0 %v168, 64
    %v1757 = vpop.permute.xlu0 %1756
    %v1760 = vsel %vm1427, %v1590, 0
    %1762 = vmatprep.subr.mxu0 0.0
    %1763 = vmatpush1.msra.mxu0 0.0
    %1764 = vmatprep.subr.mxu0 0.0
    %1765 = vmatpush1.msra.mxu0 0.0
    %1766 = vmatprep.subr.mxu0 0.0
    %1767 = vmatpush1.msra.mxu0 0.0
    %1768 = vmatprep.subr.mxu0 0.0
    %1769 = vmatpush1.msra.mxu0 0.0
    %1770 = vmatprep.subr.mxu0 0.0
    %1771 = vmatpush1.msra.mxu0 0.0
    %1772 = vmatprep.subr.mxu0 0.0
    %1773 = vmatpush1.msra.mxu0 0.0
    %1774 = vmatprep.subr.mxu0 0.0
    %1775 = vmatpush1.msra.mxu0 0.0
    %1776 = vmatprep.subr.mxu0 0.0
    %1777 = vmatpush1.msra.mxu0 0.0
    %1778 = vmatprep.subr.mxu0 0.0
    %1779 = vmatpush1.msra.mxu0 0.0
    %1780 = vmatprep.subr.mxu0 0.0
    %1781 = vmatpush1.msra.mxu0 0.0
    %1782 = vmatprep.subr.mxu0 0.0
    %1783 = vmatpush1.msra.mxu0 0.0
    %1784 = vmatprep.subr.mxu0 0.0
    %1785 = vmatpush1.msra.mxu0 0.0
    %1786 = vmatprep.subr.mxu0 0.0
    %1787 = vmatpush1.msra.mxu0 0.0
    %1788 = vmatprep.subr.mxu0 0.0
    %1789 = vmatpush1.msra.mxu0 0.0
    %1790 = vmatprep.subr.mxu0 0.0
    %1791 = vmatpush1.msra.mxu0 0.0
    %1792 = vmatprep.subr.mxu0 0.0
    %1793 = vmatpush1.msra.mxu0 %v1757
    %1794 = vmatprep.subr.mxu0 0.0
    %1795 = vmatpush2.msra.mxu0 0.0
    %1796 = vmatprep.subr.mxu0 0.0
    %1797 = vmatpush2.msra.mxu0 0.0
    %1798 = vmatprep.subr.mxu0 0.0
    %1799 = vmatpush2.msra.mxu0 0.0
    %1800 = vmatprep.subr.mxu0 0.0
    %1801 = vmatpush2.msra.mxu0 0.0
    %1802 = vmatprep.subr.mxu0 0.0
    %1803 = vmatpush2.msra.mxu0 0.0
    %1804 = vmatprep.subr.mxu0 0.0
    %1805 = vmatpush2.msra.mxu0 0.0
    %1806 = vmatprep.subr.mxu0 0.0
    %1807 = vmatpush2.msra.mxu0 0.0
    %1808 = vmatprep.subr.mxu0 0.0
    %1809 = vmatpush2.msra.mxu0 0.0
    %1810 = vmatprep.subr.mxu0 0.0
    %1811 = vmatpush2.msra.mxu0 0.0
    %1812 = vmatprep.subr.mxu0 0.0
    %1813 = vmatpush2.msra.mxu0 0.0
    %1814 = vmatprep.subr.mxu0 0.0
    %1815 = vmatpush2.msra.mxu0 0.0
    %1816 = vmatprep.subr.mxu0 0.0
    %1817 = vmatpush2.msra.mxu0 0.0
    %1818 = vmatprep.subr.mxu0 0.0
    %1819 = vmatpush2.msra.mxu0 0.0
    %1820 = vmatprep.subr.mxu0 0.0
    %1821 = vmatpush2.msra.mxu0 0.0
    %1822 = vmatprep.subr.mxu0 0.0
    %1823 = vmatpush2.msra.mxu0 0.0
    %1824 = vmatprep.subr.mxu0 0.0
    %1825 = vmatpush2.msra.mxu0 0.0
    %1826 = vmatprep.mubr.f32.mxu0 0.0
    %1827 = vmatmul.mubr.f32.gmra.mxu0 %v1760
    %v1828 = vpop.f32.mrf.mxu0
    %v1829 = vadd.f32 0.0, %v1828
    %v1830 = vpop.f32.mrf.mxu0
    %1831 = vdwg.mxu0
    %1832 = vrot.lane.b32.xlu0 %v170, 64
    %v1833 = vpop.permute.xlu0 %1832
    %v1836 = vsel %vm1427, %v1591, 0
    %1838 = vmatprep.subr.mxu0 0.0
    %1839 = vmatpush1.msra.mxu0 0.0
    %1840 = vmatprep.subr.mxu0 0.0
    %1841 = vmatpush1.msra.mxu0 0.0
    %1842 = vmatprep.subr.mxu0 0.0
    %1843 = vmatpush1.msra.mxu0 0.0
    %1844 = vmatprep.subr.mxu0 0.0
    %1845 = vmatpush1.msra.mxu0 0.0
    %1846 = vmatprep.subr.mxu0 0.0
    %1847 = vmatpush1.msra.mxu0 0.0
    %1848 = vmatprep.subr.mxu0 0.0
    %1849 = vmatpush1.msra.mxu0 0.0
    %1850 = vmatprep.subr.mxu0 0.0
    %1851 = vmatpush1.msra.mxu0 0.0
    %1852 = vmatprep.subr.mxu0 0.0
    %1853 = vmatpush1.msra.mxu0 0.0
    %1854 = vmatprep.subr.mxu0 0.0
    %1855 = vmatpush1.msra.mxu0 0.0
    %1856 = vmatprep.subr.mxu0 0.0
    %1857 = vmatpush1.msra.mxu0 0.0
    %1858 = vmatprep.subr.mxu0 0.0
    %1859 = vmatpush1.msra.mxu0 0.0
    %1860 = vmatprep.subr.mxu0 0.0
    %1861 = vmatpush1.msra.mxu0 0.0
    %1862 = vmatprep.subr.mxu0 0.0
    %1863 = vmatpush1.msra.mxu0 0.0
    %1864 = vmatprep.subr.mxu0 0.0
    %1865 = vmatpush1.msra.mxu0 0.0
    %1866 = vmatprep.subr.mxu0 0.0
    %1867 = vmatpush1.msra.mxu0 0.0
    %1868 = vmatprep.subr.mxu0 0.0
    %1869 = vmatpush1.msra.mxu0 %v1833
    %1870 = vmatprep.subr.mxu0 0.0
    %1871 = vmatpush2.msra.mxu0 0.0
    %1872 = vmatprep.subr.mxu0 0.0
    %1873 = vmatpush2.msra.mxu0 0.0
    %1874 = vmatprep.subr.mxu0 0.0
    %1875 = vmatpush2.msra.mxu0 0.0
    %1876 = vmatprep.subr.mxu0 0.0
    %1877 = vmatpush2.msra.mxu0 0.0
    %1878 = vmatprep.subr.mxu0 0.0
    %1879 = vmatpush2.msra.mxu0 0.0
    %1880 = vmatprep.subr.mxu0 0.0
    %1881 = vmatpush2.msra.mxu0 0.0
    %1882 = vmatprep.subr.mxu0 0.0
    %1883 = vmatpush2.msra.mxu0 0.0
    %1884 = vmatprep.subr.mxu0 0.0
    %1885 = vmatpush2.msra.mxu0 0.0
    %1886 = vmatprep.subr.mxu0 0.0
    %1887 = vmatpush2.msra.mxu0 0.0
    %1888 = vmatprep.subr.mxu0 0.0
    %1889 = vmatpush2.msra.mxu0 0.0
    %1890 = vmatprep.subr.mxu0 0.0
    %1891 = vmatpush2.msra.mxu0 0.0
    %1892 = vmatprep.subr.mxu0 0.0
    %1893 = vmatpush2.msra.mxu0 0.0
    %1894 = vmatprep.subr.mxu0 0.0
    %1895 = vmatpush2.msra.mxu0 0.0
    %1896 = vmatprep.subr.mxu0 0.0
    %1897 = vmatpush2.msra.mxu0 0.0
    %1898 = vmatprep.subr.mxu0 0.0
    %1899 = vmatpush2.msra.mxu0 0.0
    %1900 = vmatprep.subr.mxu0 0.0
    %1901 = vmatpush2.msra.mxu0 0.0
    %1902 = vmatprep.mubr.f32.mxu0 0.0
    %1903 = vmatmul.mubr.f32.gmra.mxu0 %v1836
    %v1904 = vpop.f32.mrf.mxu0
    %v1905 = vadd.f32 0.0, %v1904
    %v1906 = vpop.f32.mrf.mxu0
    %1907 = vdwg.mxu0
    %1908 = vrot.lane.b32.xlu0 %v172, 64
    %v1909 = vpop.permute.xlu0 %1908
    %v1912 = vsel %vm1427, %v1592, 0
    %1914 = vmatprep.subr.mxu0 0.0
    %1915 = vmatpush1.msra.mxu0 0.0
    %1916 = vmatprep.subr.mxu0 0.0
    %1917 = vmatpush1.msra.mxu0 0.0
    %1918 = vmatprep.subr.mxu0 0.0
    %1919 = vmatpush1.msra.mxu0 0.0
    %1920 = vmatprep.subr.mxu0 0.0
    %1921 = vmatpush1.msra.mxu0 0.0
    %1922 = vmatprep.subr.mxu0 0.0
    %1923 = vmatpush1.msra.mxu0 0.0
    %1924 = vmatprep.subr.mxu0 0.0
    %1925 = vmatpush1.msra.mxu0 0.0
    %1926 = vmatprep.subr.mxu0 0.0
    %1927 = vmatpush1.msra.mxu0 0.0
    %1928 = vmatprep.subr.mxu0 0.0
    %1929 = vmatpush1.msra.mxu0 0.0
    %1930 = vmatprep.subr.mxu0 0.0
    %1931 = vmatpush1.msra.mxu0 0.0
    %1932 = vmatprep.subr.mxu0 0.0
    %1933 = vmatpush1.msra.mxu0 0.0
    %1934 = vmatprep.subr.mxu0 0.0
    %1935 = vmatpush1.msra.mxu0 0.0
    %1936 = vmatprep.subr.mxu0 0.0
    %1937 = vmatpush1.msra.mxu0 0.0
    %1938 = vmatprep.subr.mxu0 0.0
    %1939 = vmatpush1.msra.mxu0 0.0
    %1940 = vmatprep.subr.mxu0 0.0
    %1941 = vmatpush1.msra.mxu0 0.0
    %1942 = vmatprep.subr.mxu0 0.0
    %1943 = vmatpush1.msra.mxu0 0.0
    %1944 = vmatprep.subr.mxu0 0.0
    %1945 = vmatpush1.msra.mxu0 %v1909
    %1946 = vmatprep.subr.mxu0 0.0
    %1947 = vmatpush2.msra.mxu0 0.0
    %1948 = vmatprep.subr.mxu0 0.0
    %1949 = vmatpush2.msra.mxu0 0.0
    %1950 = vmatprep.subr.mxu0 0.0
    %1951 = vmatpush2.msra.mxu0 0.0
    %1952 = vmatprep.subr.mxu0 0.0
    %1953 = vmatpush2.msra.mxu0 0.0
    %1954 = vmatprep.subr.mxu0 0.0
    %1955 = vmatpush2.msra.mxu0 0.0
    %1956 = vmatprep.subr.mxu0 0.0
    %1957 = vmatpush2.msra.mxu0 0.0
    %1958 = vmatprep.subr.mxu0 0.0
    %1959 = vmatpush2.msra.mxu0 0.0
    %1960 = vmatprep.subr.mxu0 0.0
    %1961 = vmatpush2.msra.mxu0 0.0
    %1962 = vmatprep.subr.mxu0 0.0
    %1963 = vmatpush2.msra.mxu0 0.0
    %1964 = vmatprep.subr.mxu0 0.0
    %1965 = vmatpush2.msra.mxu0 0.0
    %1966 = vmatprep.subr.mxu0 0.0
    %1967 = vmatpush2.msra.mxu0 0.0
    %1968 = vmatprep.subr.mxu0 0.0
    %1969 = vmatpush2.msra.mxu0 0.0
    %1970 = vmatprep.subr.mxu0 0.0
    %1971 = vmatpush2.msra.mxu0 0.0
    %1972 = vmatprep.subr.mxu0 0.0
    %1973 = vmatpush2.msra.mxu0 0.0
    %1974 = vmatprep.subr.mxu0 0.0
    %1975 = vmatpush2.msra.mxu0 0.0
    %1976 = vmatprep.subr.mxu0 0.0
    %1977 = vmatpush2.msra.mxu0 0.0
    %1978 = vmatprep.mubr.f32.mxu0 0.0
    %1979 = vmatmul.mubr.f32.gmra.mxu0 %v1912
    %v1980 = vpop.f32.mrf.mxu0
    %v1981 = vadd.f32 0.0, %v1980
    %v1982 = vpop.f32.mrf.mxu0
    %1983 = vdwg.mxu0
    %1984 = vrot.lane.b32.xlu0 %v174, 64
    %v1985 = vpop.permute.xlu0 %1984
    %v1988 = vsel %vm1427, %v1593, 0
    %1990 = vmatprep.subr.mxu0 0.0
    %1991 = vmatpush1.msra.mxu0 0.0
    %1992 = vmatprep.subr.mxu0 0.0
    %1993 = vmatpush1.msra.mxu0 0.0
    %1994 = vmatprep.subr.mxu0 0.0
    %1995 = vmatpush1.msra.mxu0 0.0
    %1996 = vmatprep.subr.mxu0 0.0
    %1997 = vmatpush1.msra.mxu0 0.0
    %1998 = vmatprep.subr.mxu0 0.0
    %1999 = vmatpush1.msra.mxu0 0.0
    %2000 = vmatprep.subr.mxu0 0.0
    %2001 = vmatpush1.msra.mxu0 0.0
    %2002 = vmatprep.subr.mxu0 0.0
    %2003 = vmatpush1.msra.mxu0 0.0
    %2004 = vmatprep.subr.mxu0 0.0
    %2005 = vmatpush1.msra.mxu0 0.0
    %2006 = vmatprep.subr.mxu0 0.0
    %2007 = vmatpush1.msra.mxu0 0.0
    %2008 = vmatprep.subr.mxu0 0.0
    %2009 = vmatpush1.msra.mxu0 0.0
    %2010 = vmatprep.subr.mxu0 0.0
    %2011 = vmatpush1.msra.mxu0 0.0
    %2012 = vmatprep.subr.mxu0 0.0
    %2013 = vmatpush1.msra.mxu0 0.0
    %2014 = vmatprep.subr.mxu0 0.0
    %2015 = vmatpush1.msra.mxu0 0.0
    %2016 = vmatprep.subr.mxu0 0.0
    %2017 = vmatpush1.msra.mxu0 0.0
    %2018 = vmatprep.subr.mxu0 0.0
    %2019 = vmatpush1.msra.mxu0 0.0
    %2020 = vmatprep.subr.mxu0 0.0
    %2021 = vmatpush1.msra.mxu0 %v1985
    %2022 = vmatprep.subr.mxu0 0.0
    %2023 = vmatpush2.msra.mxu0 0.0
    %2024 = vmatprep.subr.mxu0 0.0
    %2025 = vmatpush2.msra.mxu0 0.0
    %2026 = vmatprep.subr.mxu0 0.0
    %2027 = vmatpush2.msra.mxu0 0.0
    %2028 = vmatprep.subr.mxu0 0.0
    %2029 = vmatpush2.msra.mxu0 0.0
    %2030 = vmatprep.subr.mxu0 0.0
    %2031 = vmatpush2.msra.mxu0 0.0
    %2032 = vmatprep.subr.mxu0 0.0
    %2033 = vmatpush2.msra.mxu0 0.0
    %2034 = vmatprep.subr.mxu0 0.0
    %2035 = vmatpush2.msra.mxu0 0.0
    %2036 = vmatprep.subr.mxu0 0.0
    %2037 = vmatpush2.msra.mxu0 0.0
    %2038 = vmatprep.subr.mxu0 0.0
    %2039 = vmatpush2.msra.mxu0 0.0
    %2040 = vmatprep.subr.mxu0 0.0
    %2041 = vmatpush2.msra.mxu0 0.0
    %2042 = vmatprep.subr.mxu0 0.0
    %2043 = vmatpush2.msra.mxu0 0.0
    %2044 = vmatprep.subr.mxu0 0.0
    %2045 = vmatpush2.msra.mxu0 0.0
    %2046 = vmatprep.subr.mxu0 0.0
    %2047 = vmatpush2.msra.mxu0 0.0
    %2048 = vmatprep.subr.mxu0 0.0
    %2049 = vmatpush2.msra.mxu0 0.0
    %2050 = vmatprep.subr.mxu0 0.0
    %2051 = vmatpush2.msra.mxu0 0.0
    %2052 = vmatprep.subr.mxu0 0.0
    %2053 = vmatpush2.msra.mxu0 0.0
    %2054 = vmatprep.mubr.f32.mxu0 0.0
    %2055 = vmatmul.mubr.f32.gmra.mxu0 %v1988
    %v2056 = vpop.f32.mrf.mxu0
    %v2057 = vadd.f32 0.0, %v2056
    %v2058 = vpop.f32.mrf.mxu0
    %2059 = vdwg.mxu0
    %2060 = vrot.lane.b32.xlu0 %v176, 64
    %v2061 = vpop.permute.xlu0 %2060
    %v2064 = vsel %vm1427, %v1594, 0
    %2066 = vmatprep.subr.mxu0 0.0
    %2067 = vmatpush1.msra.mxu0 0.0
    %2068 = vmatprep.subr.mxu0 0.0
    %2069 = vmatpush1.msra.mxu0 0.0
    %2070 = vmatprep.subr.mxu0 0.0
    %2071 = vmatpush1.msra.mxu0 0.0
    %2072 = vmatprep.subr.mxu0 0.0
    %2073 = vmatpush1.msra.mxu0 0.0
    %2074 = vmatprep.subr.mxu0 0.0
    %2075 = vmatpush1.msra.mxu0 0.0
    %2076 = vmatprep.subr.mxu0 0.0
    %2077 = vmatpush1.msra.mxu0 0.0
    %2078 = vmatprep.subr.mxu0 0.0
    %2079 = vmatpush1.msra.mxu0 0.0
    %2080 = vmatprep.subr.mxu0 0.0
    %2081 = vmatpush1.msra.mxu0 0.0
    %2082 = vmatprep.subr.mxu0 0.0
    %2083 = vmatpush1.msra.mxu0 0.0
    %2084 = vmatprep.subr.mxu0 0.0
    %2085 = vmatpush1.msra.mxu0 0.0
    %2086 = vmatprep.subr.mxu0 0.0
    %2087 = vmatpush1.msra.mxu0 0.0
    %2088 = vmatprep.subr.mxu0 0.0
    %2089 = vmatpush1.msra.mxu0 0.0
    %2090 = vmatprep.subr.mxu0 0.0
    %2091 = vmatpush1.msra.mxu0 0.0
    %2092 = vmatprep.subr.mxu0 0.0
    %2093 = vmatpush1.msra.mxu0 0.0
    %2094 = vmatprep.subr.mxu0 0.0
    %2095 = vmatpush1.msra.mxu0 0.0
    %2096 = vmatprep.subr.mxu0 0.0
    %2097 = vmatpush1.msra.mxu0 %v2061
    %2098 = vmatprep.subr.mxu0 0.0
    %2099 = vmatpush2.msra.mxu0 0.0
    %2100 = vmatprep.subr.mxu0 0.0
    %2101 = vmatpush2.msra.mxu0 0.0
    %2102 = vmatprep.subr.mxu0 0.0
    %2103 = vmatpush2.msra.mxu0 0.0
    %2104 = vmatprep.subr.mxu0 0.0
    %2105 = vmatpush2.msra.mxu0 0.0
    %2106 = vmatprep.subr.mxu0 0.0
    %2107 = vmatpush2.msra.mxu0 0.0
    %2108 = vmatprep.subr.mxu0 0.0
    %2109 = vmatpush2.msra.mxu0 0.0
    %2110 = vmatprep.subr.mxu0 0.0
    %2111 = vmatpush2.msra.mxu0 0.0
    %2112 = vmatprep.subr.mxu0 0.0
    %2113 = vmatpush2.msra.mxu0 0.0
    %2114 = vmatprep.subr.mxu0 0.0
    %2115 = vmatpush2.msra.mxu0 0.0
    %2116 = vmatprep.subr.mxu0 0.0
    %2117 = vmatpush2.msra.mxu0 0.0
    %2118 = vmatprep.subr.mxu0 0.0
    %2119 = vmatpush2.msra.mxu0 0.0
    %2120 = vmatprep.subr.mxu0 0.0
    %2121 = vmatpush2.msra.mxu0 0.0
    %2122 = vmatprep.subr.mxu0 0.0
    %2123 = vmatpush2.msra.mxu0 0.0
    %2124 = vmatprep.subr.mxu0 0.0
    %2125 = vmatpush2.msra.mxu0 0.0
    %2126 = vmatprep.subr.mxu0 0.0
    %2127 = vmatpush2.msra.mxu0 0.0
    %2128 = vmatprep.subr.mxu0 0.0
    %2129 = vmatpush2.msra.mxu0 0.0
    %2130 = vmatprep.mubr.f32.mxu0 0.0
    %2131 = vmatmul.mubr.f32.gmra.mxu0 %v2064
    %v2132 = vpop.f32.mrf.mxu0
    %v2133 = vadd.f32 0.0, %v2132
    %v2134 = vpop.f32.mrf.mxu0
    %2135 = vdwg.mxu0
    %2136 = vrot.lane.b32.xlu0 %v178, 64
    %v2137 = vpop.permute.xlu0 %2136
    %v2140 = vsel %vm1427, %v1595, 0
    %2142 = vmatprep.subr.mxu0 0.0
    %2143 = vmatpush1.msra.mxu0 0.0
    %2144 = vmatprep.subr.mxu0 0.0
    %2145 = vmatpush1.msra.mxu0 0.0
    %2146 = vmatprep.subr.mxu0 0.0
    %2147 = vmatpush1.msra.mxu0 0.0
    %2148 = vmatprep.subr.mxu0 0.0
    %2149 = vmatpush1.msra.mxu0 0.0
    %2150 = vmatprep.subr.mxu0 0.0
    %2151 = vmatpush1.msra.mxu0 0.0
    %2152 = vmatprep.subr.mxu0 0.0
    %2153 = vmatpush1.msra.mxu0 0.0
    %2154 = vmatprep.subr.mxu0 0.0
    %2155 = vmatpush1.msra.mxu0 0.0
    %2156 = vmatprep.subr.mxu0 0.0
    %2157 = vmatpush1.msra.mxu0 0.0
    %2158 = vmatprep.subr.mxu0 0.0
    %2159 = vmatpush1.msra.mxu0 0.0
    %2160 = vmatprep.subr.mxu0 0.0
    %2161 = vmatpush1.msra.mxu0 0.0
    %2162 = vmatprep.subr.mxu0 0.0
    %2163 = vmatpush1.msra.mxu0 0.0
    %2164 = vmatprep.subr.mxu0 0.0
    %2165 = vmatpush1.msra.mxu0 0.0
    %2166 = vmatprep.subr.mxu0 0.0
    %2167 = vmatpush1.msra.mxu0 0.0
    %2168 = vmatprep.subr.mxu0 0.0
    %2169 = vmatpush1.msra.mxu0 0.0
    %2170 = vmatprep.subr.mxu0 0.0
    %2171 = vmatpush1.msra.mxu0 0.0
    %2172 = vmatprep.subr.mxu0 0.0
    %2173 = vmatpush1.msra.mxu0 %v2137
    %2174 = vmatprep.subr.mxu0 0.0
    %2175 = vmatpush2.msra.mxu0 0.0
    %2176 = vmatprep.subr.mxu0 0.0
    %2177 = vmatpush2.msra.mxu0 0.0
    %2178 = vmatprep.subr.mxu0 0.0
    %2179 = vmatpush2.msra.mxu0 0.0
    %2180 = vmatprep.subr.mxu0 0.0
    %2181 = vmatpush2.msra.mxu0 0.0
    %2182 = vmatprep.subr.mxu0 0.0
    %2183 = vmatpush2.msra.mxu0 0.0
    %2184 = vmatprep.subr.mxu0 0.0
    %2185 = vmatpush2.msra.mxu0 0.0
    %2186 = vmatprep.subr.mxu0 0.0
    %2187 = vmatpush2.msra.mxu0 0.0
    %2188 = vmatprep.subr.mxu0 0.0
    %2189 = vmatpush2.msra.mxu0 0.0
    %2190 = vmatprep.subr.mxu0 0.0
    %2191 = vmatpush2.msra.mxu0 0.0
    %2192 = vmatprep.subr.mxu0 0.0
    %2193 = vmatpush2.msra.mxu0 0.0
    %2194 = vmatprep.subr.mxu0 0.0
    %2195 = vmatpush2.msra.mxu0 0.0
    %2196 = vmatprep.subr.mxu0 0.0
    %2197 = vmatpush2.msra.mxu0 0.0
    %2198 = vmatprep.subr.mxu0 0.0
    %2199 = vmatpush2.msra.mxu0 0.0
    %2200 = vmatprep.subr.mxu0 0.0
    %2201 = vmatpush2.msra.mxu0 0.0
    %2202 = vmatprep.subr.mxu0 0.0
    %2203 = vmatpush2.msra.mxu0 0.0
    %2204 = vmatprep.subr.mxu0 0.0
    %2205 = vmatpush2.msra.mxu0 0.0
    %2206 = vmatprep.mubr.f32.mxu0 0.0
    %2207 = vmatmul.mubr.f32.gmra.mxu0 %v2140
    %v2208 = vpop.f32.mrf.mxu0
    %v2209 = vadd.f32 0.0, %v2208
    %v2210 = vpop.f32.mrf.mxu0
    %2211 = vdwg.mxu0
    %2212 = vrot.lane.b32.xlu0 %v161, 64
    %v2213 = vpop.permute.xlu0 %2212
    %v2216 = vsel %vm1427, %v1596, 0
    %2218 = vmatprep.subr.mxu0 0.0
    %2219 = vmatpush1.msra.mxu0 0.0
    %2220 = vmatprep.subr.mxu0 0.0
    %2221 = vmatpush1.msra.mxu0 0.0
    %2222 = vmatprep.subr.mxu0 0.0
    %2223 = vmatpush1.msra.mxu0 0.0
    %2224 = vmatprep.subr.mxu0 0.0
    %2225 = vmatpush1.msra.mxu0 0.0
    %2226 = vmatprep.subr.mxu0 0.0
    %2227 = vmatpush1.msra.mxu0 0.0
    %2228 = vmatprep.subr.mxu0 0.0
    %2229 = vmatpush1.msra.mxu0 0.0
    %2230 = vmatprep.subr.mxu0 0.0
    %2231 = vmatpush1.msra.mxu0 0.0
    %2232 = vmatprep.subr.mxu0 0.0
    %2233 = vmatpush1.msra.mxu0 0.0
    %2234 = vmatprep.subr.mxu0 0.0
    %2235 = vmatpush1.msra.mxu0 0.0
    %2236 = vmatprep.subr.mxu0 0.0
    %2237 = vmatpush1.msra.mxu0 0.0
    %2238 = vmatprep.subr.mxu0 0.0
    %2239 = vmatpush1.msra.mxu0 0.0
    %2240 = vmatprep.subr.mxu0 0.0
    %2241 = vmatpush1.msra.mxu0 0.0
    %2242 = vmatprep.subr.mxu0 0.0
    %2243 = vmatpush1.msra.mxu0 0.0
    %2244 = vmatprep.subr.mxu0 0.0
    %2245 = vmatpush1.msra.mxu0 0.0
    %2246 = vmatprep.subr.mxu0 0.0
    %2247 = vmatpush1.msra.mxu0 0.0
    %2248 = vmatprep.subr.mxu0 0.0
    %2249 = vmatpush1.msra.mxu0 %v2213
    %2250 = vmatprep.subr.mxu0 0.0
    %2251 = vmatpush2.msra.mxu0 0.0
    %2252 = vmatprep.subr.mxu0 0.0
    %2253 = vmatpush2.msra.mxu0 0.0
    %2254 = vmatprep.subr.mxu0 0.0
    %2255 = vmatpush2.msra.mxu0 0.0
    %2256 = vmatprep.subr.mxu0 0.0
    %2257 = vmatpush2.msra.mxu0 0.0
    %2258 = vmatprep.subr.mxu0 0.0
    %2259 = vmatpush2.msra.mxu0 0.0
    %2260 = vmatprep.subr.mxu0 0.0
    %2261 = vmatpush2.msra.mxu0 0.0
    %2262 = vmatprep.subr.mxu0 0.0
    %2263 = vmatpush2.msra.mxu0 0.0
    %2264 = vmatprep.subr.mxu0 0.0
    %2265 = vmatpush2.msra.mxu0 0.0
    %2266 = vmatprep.subr.mxu0 0.0
    %2267 = vmatpush2.msra.mxu0 0.0
    %2268 = vmatprep.subr.mxu0 0.0
    %2269 = vmatpush2.msra.mxu0 0.0
    %2270 = vmatprep.subr.mxu0 0.0
    %2271 = vmatpush2.msra.mxu0 0.0
    %2272 = vmatprep.subr.mxu0 0.0
    %2273 = vmatpush2.msra.mxu0 0.0
    %2274 = vmatprep.subr.mxu0 0.0
    %2275 = vmatpush2.msra.mxu0 0.0
    %2276 = vmatprep.subr.mxu0 0.0
    %2277 = vmatpush2.msra.mxu0 0.0
    %2278 = vmatprep.subr.mxu0 0.0
    %2279 = vmatpush2.msra.mxu0 0.0
    %2280 = vmatprep.subr.mxu0 0.0
    %2281 = vmatpush2.msra.mxu0 0.0
    %2282 = vmatprep.mubr.f32.mxu0 0.0
    %2283 = vmatmul.mubr.f32.gmra.mxu0 %v2216
    %v2284 = vpop.f32.mrf.mxu0
    %v2285 = vadd.f32 0.0, %v2284
    %v2286 = vpop.f32.mrf.mxu0
    %2287 = vdwg.mxu0
    %2288 = vrot.lane.b32.xlu0 %v181, 64
    %v2289 = vpop.permute.xlu0 %2288
    %v2292 = vsel %vm1427, %v1597, 0
    %2294 = vmatprep.subr.mxu0 0.0
    %2295 = vmatpush1.msra.mxu0 0.0
    %2296 = vmatprep.subr.mxu0 0.0
    %2297 = vmatpush1.msra.mxu0 0.0
    %2298 = vmatprep.subr.mxu0 0.0
    %2299 = vmatpush1.msra.mxu0 0.0
    %2300 = vmatprep.subr.mxu0 0.0
    %2301 = vmatpush1.msra.mxu0 0.0
    %2302 = vmatprep.subr.mxu0 0.0
    %2303 = vmatpush1.msra.mxu0 0.0
    %2304 = vmatprep.subr.mxu0 0.0
    %2305 = vmatpush1.msra.mxu0 0.0
    %2306 = vmatprep.subr.mxu0 0.0
    %2307 = vmatpush1.msra.mxu0 0.0
    %2308 = vmatprep.subr.mxu0 0.0
    %2309 = vmatpush1.msra.mxu0 0.0
    %2310 = vmatprep.subr.mxu0 0.0
    %2311 = vmatpush1.msra.mxu0 0.0
    %2312 = vmatprep.subr.mxu0 0.0
    %2313 = vmatpush1.msra.mxu0 0.0
    %2314 = vmatprep.subr.mxu0 0.0
    %2315 = vmatpush1.msra.mxu0 0.0
    %2316 = vmatprep.subr.mxu0 0.0
    %2317 = vmatpush1.msra.mxu0 0.0
    %2318 = vmatprep.subr.mxu0 0.0
    %2319 = vmatpush1.msra.mxu0 0.0
    %2320 = vmatprep.subr.mxu0 0.0
    %2321 = vmatpush1.msra.mxu0 0.0
    %2322 = vmatprep.subr.mxu0 0.0
    %2323 = vmatpush1.msra.mxu0 0.0
    %2324 = vmatprep.subr.mxu0 0.0
    %2325 = vmatpush1.msra.mxu0 %v2289
    %2326 = vmatprep.subr.mxu0 0.0
    %2327 = vmatpush2.msra.mxu0 0.0
    %2328 = vmatprep.subr.mxu0 0.0
    %2329 = vmatpush2.msra.mxu0 0.0
    %2330 = vmatprep.subr.mxu0 0.0
    %2331 = vmatpush2.msra.mxu0 0.0
    %2332 = vmatprep.subr.mxu0 0.0
    %2333 = vmatpush2.msra.mxu0 0.0
    %2334 = vmatprep.subr.mxu0 0.0
    %2335 = vmatpush2.msra.mxu0 0.0
    %2336 = vmatprep.subr.mxu0 0.0
    %2337 = vmatpush2.msra.mxu0 0.0
    %2338 = vmatprep.subr.mxu0 0.0
    %2339 = vmatpush2.msra.mxu0 0.0
    %2340 = vmatprep.subr.mxu0 0.0
    %2341 = vmatpush2.msra.mxu0 0.0
    %2342 = vmatprep.subr.mxu0 0.0
    %2343 = vmatpush2.msra.mxu0 0.0
    %2344 = vmatprep.subr.mxu0 0.0
    %2345 = vmatpush2.msra.mxu0 0.0
    %2346 = vmatprep.subr.mxu0 0.0
    %2347 = vmatpush2.msra.mxu0 0.0
    %2348 = vmatprep.subr.mxu0 0.0
    %2349 = vmatpush2.msra.mxu0 0.0
    %2350 = vmatprep.subr.mxu0 0.0
    %2351 = vmatpush2.msra.mxu0 0.0
    %2352 = vmatprep.subr.mxu0 0.0
    %2353 = vmatpush2.msra.mxu0 0.0
    %2354 = vmatprep.subr.mxu0 0.0
    %2355 = vmatpush2.msra.mxu0 0.0
    %2356 = vmatprep.subr.mxu0 0.0
    %2357 = vmatpush2.msra.mxu0 0.0
    %2358 = vmatprep.mubr.f32.mxu0 0.0
    %2359 = vmatmul.mubr.f32.gmra.mxu0 %v2292
    %v2360 = vpop.f32.mrf.mxu0
    %v2361 = vadd.f32 0.0, %v2360
    %v2362 = vpop.f32.mrf.mxu0
    %2363 = vdwg.mxu0
    %2364 = vrot.lane.b32.xlu0 %v183, 64
    %v2365 = vpop.permute.xlu0 %2364
    %v2368 = vsel %vm1427, %v1598, 0
    %2370 = vmatprep.subr.mxu0 0.0
    %2371 = vmatpush1.msra.mxu0 0.0
    %2372 = vmatprep.subr.mxu0 0.0
    %2373 = vmatpush1.msra.mxu0 0.0
    %2374 = vmatprep.subr.mxu0 0.0
    %2375 = vmatpush1.msra.mxu0 0.0
    %2376 = vmatprep.subr.mxu0 0.0
    %2377 = vmatpush1.msra.mxu0 0.0
    %2378 = vmatprep.subr.mxu0 0.0
    %2379 = vmatpush1.msra.mxu0 0.0
    %2380 = vmatprep.subr.mxu0 0.0
    %2381 = vmatpush1.msra.mxu0 0.0
    %2382 = vmatprep.subr.mxu0 0.0
    %2383 = vmatpush1.msra.mxu0 0.0
    %2384 = vmatprep.subr.mxu0 0.0
    %2385 = vmatpush1.msra.mxu0 0.0
    %2386 = vmatprep.subr.mxu0 0.0
    %2387 = vmatpush1.msra.mxu0 0.0
    %2388 = vmatprep.subr.mxu0 0.0
    %2389 = vmatpush1.msra.mxu0 0.0
    %2390 = vmatprep.subr.mxu0 0.0
    %2391 = vmatpush1.msra.mxu0 0.0
    %2392 = vmatprep.subr.mxu0 0.0
    %2393 = vmatpush1.msra.mxu0 0.0
    %2394 = vmatprep.subr.mxu0 0.0
    %2395 = vmatpush1.msra.mxu0 0.0
    %2396 = vmatprep.subr.mxu0 0.0
    %2397 = vmatpush1.msra.mxu0 0.0
    %2398 = vmatprep.subr.mxu0 0.0
    %2399 = vmatpush1.msra.mxu0 0.0
    %2400 = vmatprep.subr.mxu0 0.0
    %2401 = vmatpush1.msra.mxu0 %v2365
    %2402 = vmatprep.subr.mxu0 0.0
    %2403 = vmatpush2.msra.mxu0 0.0
    %2404 = vmatprep.subr.mxu0 0.0
    %2405 = vmatpush2.msra.mxu0 0.0
    %2406 = vmatprep.subr.mxu0 0.0
    %2407 = vmatpush2.msra.mxu0 0.0
    %2408 = vmatprep.subr.mxu0 0.0
    %2409 = vmatpush2.msra.mxu0 0.0
    %2410 = vmatprep.subr.mxu0 0.0
    %2411 = vmatpush2.msra.mxu0 0.0
    %2412 = vmatprep.subr.mxu0 0.0
    %2413 = vmatpush2.msra.mxu0 0.0
    %2414 = vmatprep.subr.mxu0 0.0
    %2415 = vmatpush2.msra.mxu0 0.0
    %2416 = vmatprep.subr.mxu0 0.0
    %2417 = vmatpush2.msra.mxu0 0.0
    %2418 = vmatprep.subr.mxu0 0.0
    %2419 = vmatpush2.msra.mxu0 0.0
    %2420 = vmatprep.subr.mxu0 0.0
    %2421 = vmatpush2.msra.mxu0 0.0
    %2422 = vmatprep.subr.mxu0 0.0
    %2423 = vmatpush2.msra.mxu0 0.0
    %2424 = vmatprep.subr.mxu0 0.0
    %2425 = vmatpush2.msra.mxu0 0.0
    %2426 = vmatprep.subr.mxu0 0.0
    %2427 = vmatpush2.msra.mxu0 0.0
    %2428 = vmatprep.subr.mxu0 0.0
    %2429 = vmatpush2.msra.mxu0 0.0
    %2430 = vmatprep.subr.mxu0 0.0
    %2431 = vmatpush2.msra.mxu0 0.0
    %2432 = vmatprep.subr.mxu0 0.0
    %2433 = vmatpush2.msra.mxu0 0.0
    %2434 = vmatprep.mubr.f32.mxu0 0.0
    %2435 = vmatmul.mubr.f32.gmra.mxu0 %v2368
    %v2436 = vpop.f32.mrf.mxu0
    %v2437 = vadd.f32 0.0, %v2436
    %v2438 = vpop.f32.mrf.mxu0
    %2439 = vdwg.mxu0
    %2440 = vrot.lane.b32.xlu0 %v185, 64
    %v2441 = vpop.permute.xlu0 %2440
    %v2444 = vsel %vm1427, %v1599, 0
    %2446 = vmatprep.subr.mxu0 0.0
    %2447 = vmatpush1.msra.mxu0 0.0
    %2448 = vmatprep.subr.mxu0 0.0
    %2449 = vmatpush1.msra.mxu0 0.0
    %2450 = vmatprep.subr.mxu0 0.0
    %2451 = vmatpush1.msra.mxu0 0.0
    %2452 = vmatprep.subr.mxu0 0.0
    %2453 = vmatpush1.msra.mxu0 0.0
    %2454 = vmatprep.subr.mxu0 0.0
    %2455 = vmatpush1.msra.mxu0 0.0
    %2456 = vmatprep.subr.mxu0 0.0
    %2457 = vmatpush1.msra.mxu0 0.0
    %2458 = vmatprep.subr.mxu0 0.0
    %2459 = vmatpush1.msra.mxu0 0.0
    %2460 = vmatprep.subr.mxu0 0.0
    %2461 = vmatpush1.msra.mxu0 0.0
    %2462 = vmatprep.subr.mxu0 0.0
    %2463 = vmatpush1.msra.mxu0 0.0
    %2464 = vmatprep.subr.mxu0 0.0
    %2465 = vmatpush1.msra.mxu0 0.0
    %2466 = vmatprep.subr.mxu0 0.0
    %2467 = vmatpush1.msra.mxu0 0.0
    %2468 = vmatprep.subr.mxu0 0.0
    %2469 = vmatpush1.msra.mxu0 0.0
    %2470 = vmatprep.subr.mxu0 0.0
    %2471 = vmatpush1.msra.mxu0 0.0
    %2472 = vmatprep.subr.mxu0 0.0
    %2473 = vmatpush1.msra.mxu0 0.0
    %2474 = vmatprep.subr.mxu0 0.0
    %2475 = vmatpush1.msra.mxu0 0.0
    %2476 = vmatprep.subr.mxu0 0.0
    %2477 = vmatpush1.msra.mxu0 %v2441
    %2478 = vmatprep.subr.mxu0 0.0
    %2479 = vmatpush2.msra.mxu0 0.0
    %2480 = vmatprep.subr.mxu0 0.0
    %2481 = vmatpush2.msra.mxu0 0.0
    %2482 = vmatprep.subr.mxu0 0.0
    %2483 = vmatpush2.msra.mxu0 0.0
    %2484 = vmatprep.subr.mxu0 0.0
    %2485 = vmatpush2.msra.mxu0 0.0
    %2486 = vmatprep.subr.mxu0 0.0
    %2487 = vmatpush2.msra.mxu0 0.0
    %2488 = vmatprep.subr.mxu0 0.0
    %2489 = vmatpush2.msra.mxu0 0.0
    %2490 = vmatprep.subr.mxu0 0.0
    %2491 = vmatpush2.msra.mxu0 0.0
    %2492 = vmatprep.subr.mxu0 0.0
    %2493 = vmatpush2.msra.mxu0 0.0
    %2494 = vmatprep.subr.mxu0 0.0
    %2495 = vmatpush2.msra.mxu0 0.0
    %2496 = vmatprep.subr.mxu0 0.0
    %2497 = vmatpush2.msra.mxu0 0.0
    %2498 = vmatprep.subr.mxu0 0.0
    %2499 = vmatpush2.msra.mxu0 0.0
    %2500 = vmatprep.subr.mxu0 0.0
    %2501 = vmatpush2.msra.mxu0 0.0
    %2502 = vmatprep.subr.mxu0 0.0
    %2503 = vmatpush2.msra.mxu0 0.0
    %2504 = vmatprep.subr.mxu0 0.0
    %2505 = vmatpush2.msra.mxu0 0.0
    %2506 = vmatprep.subr.mxu0 0.0
    %2507 = vmatpush2.msra.mxu0 0.0
    %2508 = vmatprep.subr.mxu0 0.0
    %2509 = vmatpush2.msra.mxu0 0.0
    %2510 = vmatprep.mubr.f32.mxu0 0.0
    %2511 = vmatmul.mubr.f32.gmra.mxu0 %v2444
    %v2512 = vpop.f32.mrf.mxu0
    %v2513 = vadd.f32 0.0, %v2512
    %v2514 = vpop.f32.mrf.mxu0
    %2515 = vdwg.mxu0
    %2516 = vrot.lane.b32.xlu0 %v187, 64
    %v2517 = vpop.permute.xlu0 %2516
    %v2520 = vsel %vm1427, %v1600, 0
    %2522 = vmatprep.subr.mxu0 0.0
    %2523 = vmatpush1.msra.mxu0 0.0
    %2524 = vmatprep.subr.mxu0 0.0
    %2525 = vmatpush1.msra.mxu0 0.0
    %2526 = vmatprep.subr.mxu0 0.0
    %2527 = vmatpush1.msra.mxu0 0.0
    %2528 = vmatprep.subr.mxu0 0.0
    %2529 = vmatpush1.msra.mxu0 0.0
    %2530 = vmatprep.subr.mxu0 0.0
    %2531 = vmatpush1.msra.mxu0 0.0
    %2532 = vmatprep.subr.mxu0 0.0
    %2533 = vmatpush1.msra.mxu0 0.0
    %2534 = vmatprep.subr.mxu0 0.0
    %2535 = vmatpush1.msra.mxu0 0.0
    %2536 = vmatprep.subr.mxu0 0.0
    %2537 = vmatpush1.msra.mxu0 0.0
    %2538 = vmatprep.subr.mxu0 0.0
    %2539 = vmatpush1.msra.mxu0 0.0
    %2540 = vmatprep.subr.mxu0 0.0
    %2541 = vmatpush1.msra.mxu0 0.0
    %2542 = vmatprep.subr.mxu0 0.0
    %2543 = vmatpush1.msra.mxu0 0.0
    %2544 = vmatprep.subr.mxu0 0.0
    %2545 = vmatpush1.msra.mxu0 0.0
    %2546 = vmatprep.subr.mxu0 0.0
    %2547 = vmatpush1.msra.mxu0 0.0
    %2548 = vmatprep.subr.mxu0 0.0
    %2549 = vmatpush1.msra.mxu0 0.0
    %2550 = vmatprep.subr.mxu0 0.0
    %2551 = vmatpush1.msra.mxu0 0.0
    %2552 = vmatprep.subr.mxu0 0.0
    %2553 = vmatpush1.msra.mxu0 %v2517
    %2554 = vmatprep.subr.mxu0 0.0
    %2555 = vmatpush2.msra.mxu0 0.0
    %2556 = vmatprep.subr.mxu0 0.0
    %2557 = vmatpush2.msra.mxu0 0.0
    %2558 = vmatprep.subr.mxu0 0.0
    %2559 = vmatpush2.msra.mxu0 0.0
    %2560 = vmatprep.subr.mxu0 0.0
    %2561 = vmatpush2.msra.mxu0 0.0
    %2562 = vmatprep.subr.mxu0 0.0
    %2563 = vmatpush2.msra.mxu0 0.0
    %2564 = vmatprep.subr.mxu0 0.0
    %2565 = vmatpush2.msra.mxu0 0.0
    %2566 = vmatprep.subr.mxu0 0.0
    %2567 = vmatpush2.msra.mxu0 0.0
    %2568 = vmatprep.subr.mxu0 0.0
    %2569 = vmatpush2.msra.mxu0 0.0
    %2570 = vmatprep.subr.mxu0 0.0
    %2571 = vmatpush2.msra.mxu0 0.0
    %2572 = vmatprep.subr.mxu0 0.0
    %2573 = vmatpush2.msra.mxu0 0.0
    %2574 = vmatprep.subr.mxu0 0.0
    %2575 = vmatpush2.msra.mxu0 0.0
    %2576 = vmatprep.subr.mxu0 0.0
    %2577 = vmatpush2.msra.mxu0 0.0
    %2578 = vmatprep.subr.mxu0 0.0
    %2579 = vmatpush2.msra.mxu0 0.0
    %2580 = vmatprep.subr.mxu0 0.0
    %2581 = vmatpush2.msra.mxu0 0.0
    %2582 = vmatprep.subr.mxu0 0.0
    %2583 = vmatpush2.msra.mxu0 0.0
    %2584 = vmatprep.subr.mxu0 0.0
    %2585 = vmatpush2.msra.mxu0 0.0
    %2586 = vmatprep.mubr.f32.mxu0 0.0
    %2587 = vmatmul.mubr.f32.gmra.mxu0 %v2520
    %v2588 = vpop.f32.mrf.mxu0
    %v2589 = vadd.f32 0.0, %v2588
    %v2590 = vpop.f32.mrf.mxu0
    %2591 = vdwg.mxu0
    %2592 = vrot.lane.b32.xlu0 %v189, 64
    %v2593 = vpop.permute.xlu0 %2592
    %v2596 = vsel %vm1427, %v1601, 0
    %2598 = vmatprep.subr.mxu0 0.0
    %2599 = vmatpush1.msra.mxu0 0.0
    %2600 = vmatprep.subr.mxu0 0.0
    %2601 = vmatpush1.msra.mxu0 0.0
    %2602 = vmatprep.subr.mxu0 0.0
    %2603 = vmatpush1.msra.mxu0 0.0
    %2604 = vmatprep.subr.mxu0 0.0
    %2605 = vmatpush1.msra.mxu0 0.0
    %2606 = vmatprep.subr.mxu0 0.0
    %2607 = vmatpush1.msra.mxu0 0.0
    %2608 = vmatprep.subr.mxu0 0.0
    %2609 = vmatpush1.msra.mxu0 0.0
    %2610 = vmatprep.subr.mxu0 0.0
    %2611 = vmatpush1.msra.mxu0 0.0
    %2612 = vmatprep.subr.mxu0 0.0
    %2613 = vmatpush1.msra.mxu0 0.0
    %2614 = vmatprep.subr.mxu0 0.0
    %2615 = vmatpush1.msra.mxu0 0.0
    %2616 = vmatprep.subr.mxu0 0.0
    %2617 = vmatpush1.msra.mxu0 0.0
    %2618 = vmatprep.subr.mxu0 0.0
    %2619 = vmatpush1.msra.mxu0 0.0
    %2620 = vmatprep.subr.mxu0 0.0
    %2621 = vmatpush1.msra.mxu0 0.0
    %2622 = vmatprep.subr.mxu0 0.0
    %2623 = vmatpush1.msra.mxu0 0.0
    %2624 = vmatprep.subr.mxu0 0.0
    %2625 = vmatpush1.msra.mxu0 0.0
    %2626 = vmatprep.subr.mxu0 0.0
    %2627 = vmatpush1.msra.mxu0 0.0
    %2628 = vmatprep.subr.mxu0 0.0
    %2629 = vmatpush1.msra.mxu0 %v2593
    %2630 = vmatprep.subr.mxu0 0.0
    %2631 = vmatpush2.msra.mxu0 0.0
    %2632 = vmatprep.subr.mxu0 0.0
    %2633 = vmatpush2.msra.mxu0 0.0
    %2634 = vmatprep.subr.mxu0 0.0
    %2635 = vmatpush2.msra.mxu0 0.0
    %2636 = vmatprep.subr.mxu0 0.0
    %2637 = vmatpush2.msra.mxu0 0.0
    %2638 = vmatprep.subr.mxu0 0.0
    %2639 = vmatpush2.msra.mxu0 0.0
    %2640 = vmatprep.subr.mxu0 0.0
    %2641 = vmatpush2.msra.mxu0 0.0
    %2642 = vmatprep.subr.mxu0 0.0
    %2643 = vmatpush2.msra.mxu0 0.0
    %2644 = vmatprep.subr.mxu0 0.0
    %2645 = vmatpush2.msra.mxu0 0.0
    %2646 = vmatprep.subr.mxu0 0.0
    %2647 = vmatpush2.msra.mxu0 0.0
    %2648 = vmatprep.subr.mxu0 0.0
    %2649 = vmatpush2.msra.mxu0 0.0
    %2650 = vmatprep.subr.mxu0 0.0
    %2651 = vmatpush2.msra.mxu0 0.0
    %2652 = vmatprep.subr.mxu0 0.0
    %2653 = vmatpush2.msra.mxu0 0.0
    %2654 = vmatprep.subr.mxu0 0.0
    %2655 = vmatpush2.msra.mxu0 0.0
    %2656 = vmatprep.subr.mxu0 0.0
    %2657 = vmatpush2.msra.mxu0 0.0
    %2658 = vmatprep.subr.mxu0 0.0
    %2659 = vmatpush2.msra.mxu0 0.0
    %2660 = vmatprep.subr.mxu0 0.0
    %2661 = vmatpush2.msra.mxu0 0.0
    %2662 = vmatprep.mubr.f32.mxu0 0.0
    %2663 = vmatmul.mubr.f32.gmra.mxu0 %v2596
    %v2664 = vpop.f32.mrf.mxu0
    %v2665 = vadd.f32 0.0, %v2664
    %v2666 = vpop.f32.mrf.mxu0
    %2667 = vdwg.mxu0
    %2668 = vrot.lane.b32.xlu0 %v191, 64
    %v2669 = vpop.permute.xlu0 %2668
    %v2672 = vsel %vm1427, %v1602, 0
    %2674 = vmatprep.subr.mxu0 0.0
    %2675 = vmatpush1.msra.mxu0 0.0
    %2676 = vmatprep.subr.mxu0 0.0
    %2677 = vmatpush1.msra.mxu0 0.0
    %2678 = vmatprep.subr.mxu0 0.0
    %2679 = vmatpush1.msra.mxu0 0.0
    %2680 = vmatprep.subr.mxu0 0.0
    %2681 = vmatpush1.msra.mxu0 0.0
    %2682 = vmatprep.subr.mxu0 0.0
    %2683 = vmatpush1.msra.mxu0 0.0
    %2684 = vmatprep.subr.mxu0 0.0
    %2685 = vmatpush1.msra.mxu0 0.0
    %2686 = vmatprep.subr.mxu0 0.0
    %2687 = vmatpush1.msra.mxu0 0.0
    %2688 = vmatprep.subr.mxu0 0.0
    %2689 = vmatpush1.msra.mxu0 0.0
    %2690 = vmatprep.subr.mxu0 0.0
    %2691 = vmatpush1.msra.mxu0 0.0
    %2692 = vmatprep.subr.mxu0 0.0
    %2693 = vmatpush1.msra.mxu0 0.0
    %2694 = vmatprep.subr.mxu0 0.0
    %2695 = vmatpush1.msra.mxu0 0.0
    %2696 = vmatprep.subr.mxu0 0.0
    %2697 = vmatpush1.msra.mxu0 0.0
    %2698 = vmatprep.subr.mxu0 0.0
    %2699 = vmatpush1.msra.mxu0 0.0
    %2700 = vmatprep.subr.mxu0 0.0
    %2701 = vmatpush1.msra.mxu0 0.0
    %2702 = vmatprep.subr.mxu0 0.0
    %2703 = vmatpush1.msra.mxu0 0.0
    %2704 = vmatprep.subr.mxu0 0.0
    %2705 = vmatpush1.msra.mxu0 %v2669
    %2706 = vmatprep.subr.mxu0 0.0
    %2707 = vmatpush2.msra.mxu0 0.0
    %2708 = vmatprep.subr.mxu0 0.0
    %2709 = vmatpush2.msra.mxu0 0.0
    %2710 = vmatprep.subr.mxu0 0.0
    %2711 = vmatpush2.msra.mxu0 0.0
    %2712 = vmatprep.subr.mxu0 0.0
    %2713 = vmatpush2.msra.mxu0 0.0
    %2714 = vmatprep.subr.mxu0 0.0
    %2715 = vmatpush2.msra.mxu0 0.0
    %2716 = vmatprep.subr.mxu0 0.0
    %2717 = vmatpush2.msra.mxu0 0.0
    %2718 = vmatprep.subr.mxu0 0.0
    %2719 = vmatpush2.msra.mxu0 0.0
    %2720 = vmatprep.subr.mxu0 0.0
    %2721 = vmatpush2.msra.mxu0 0.0
    %2722 = vmatprep.subr.mxu0 0.0
    %2723 = vmatpush2.msra.mxu0 0.0
    %2724 = vmatprep.subr.mxu0 0.0
    %2725 = vmatpush2.msra.mxu0 0.0
    %2726 = vmatprep.subr.mxu0 0.0
    %2727 = vmatpush2.msra.mxu0 0.0
    %2728 = vmatprep.subr.mxu0 0.0
    %2729 = vmatpush2.msra.mxu0 0.0
    %2730 = vmatprep.subr.mxu0 0.0
    %2731 = vmatpush2.msra.mxu0 0.0
    %2732 = vmatprep.subr.mxu0 0.0
    %2733 = vmatpush2.msra.mxu0 0.0
    %2734 = vmatprep.subr.mxu0 0.0
    %2735 = vmatpush2.msra.mxu0 0.0
    %2736 = vmatprep.subr.mxu0 0.0
    %2737 = vmatpush2.msra.mxu0 0.0
    %2738 = vmatprep.mubr.f32.mxu0 0.0
    %2739 = vmatmul.mubr.f32.gmra.mxu0 %v2672
    %v2740 = vpop.f32.mrf.mxu0
    %v2741 = vadd.f32 0.0, %v2740
    %v2742 = vpop.f32.mrf.mxu0
    %2743 = vdwg.mxu0
    %2744 = vrot.lane.b32.xlu0 %v193, 64
    %v2745 = vpop.permute.xlu0 %2744
    %v2748 = vsel %vm1427, %v1603, 0
    %2750 = vmatprep.subr.mxu0 0.0
    %2751 = vmatpush1.msra.mxu0 0.0
    %2752 = vmatprep.subr.mxu0 0.0
    %2753 = vmatpush1.msra.mxu0 0.0
    %2754 = vmatprep.subr.mxu0 0.0
    %2755 = vmatpush1.msra.mxu0 0.0
    %2756 = vmatprep.subr.mxu0 0.0
    %2757 = vmatpush1.msra.mxu0 0.0
    %2758 = vmatprep.subr.mxu0 0.0
    %2759 = vmatpush1.msra.mxu0 0.0
    %2760 = vmatprep.subr.mxu0 0.0
    %2761 = vmatpush1.msra.mxu0 0.0
    %2762 = vmatprep.subr.mxu0 0.0
    %2763 = vmatpush1.msra.mxu0 0.0
    %2764 = vmatprep.subr.mxu0 0.0
    %2765 = vmatpush1.msra.mxu0 0.0
    %2766 = vmatprep.subr.mxu0 0.0
    %2767 = vmatpush1.msra.mxu0 0.0
    %2768 = vmatprep.subr.mxu0 0.0
    %2769 = vmatpush1.msra.mxu0 0.0
    %2770 = vmatprep.subr.mxu0 0.0
    %2771 = vmatpush1.msra.mxu0 0.0
    %2772 = vmatprep.subr.mxu0 0.0
    %2773 = vmatpush1.msra.mxu0 0.0
    %2774 = vmatprep.subr.mxu0 0.0
    %2775 = vmatpush1.msra.mxu0 0.0
    %2776 = vmatprep.subr.mxu0 0.0
    %2777 = vmatpush1.msra.mxu0 0.0
    %2778 = vmatprep.subr.mxu0 0.0
    %2779 = vmatpush1.msra.mxu0 0.0
    %2780 = vmatprep.subr.mxu0 0.0
    %2781 = vmatpush1.msra.mxu0 %v2745
    %2782 = vmatprep.subr.mxu0 0.0
    %2783 = vmatpush2.msra.mxu0 0.0
    %2784 = vmatprep.subr.mxu0 0.0
    %2785 = vmatpush2.msra.mxu0 0.0
    %2786 = vmatprep.subr.mxu0 0.0
    %2787 = vmatpush2.msra.mxu0 0.0
    %2788 = vmatprep.subr.mxu0 0.0
    %2789 = vmatpush2.msra.mxu0 0.0
    %2790 = vmatprep.subr.mxu0 0.0
    %2791 = vmatpush2.msra.mxu0 0.0
    %2792 = vmatprep.subr.mxu0 0.0
    %2793 = vmatpush2.msra.mxu0 0.0
    %2794 = vmatprep.subr.mxu0 0.0
    %2795 = vmatpush2.msra.mxu0 0.0
    %2796 = vmatprep.subr.mxu0 0.0
    %2797 = vmatpush2.msra.mxu0 0.0
    %2798 = vmatprep.subr.mxu0 0.0
    %2799 = vmatpush2.msra.mxu0 0.0
    %2800 = vmatprep.subr.mxu0 0.0
    %2801 = vmatpush2.msra.mxu0 0.0
    %2802 = vmatprep.subr.mxu0 0.0
    %2803 = vmatpush2.msra.mxu0 0.0
    %2804 = vmatprep.subr.mxu0 0.0
    %2805 = vmatpush2.msra.mxu0 0.0
    %2806 = vmatprep.subr.mxu0 0.0
    %2807 = vmatpush2.msra.mxu0 0.0
    %2808 = vmatprep.subr.mxu0 0.0
    %2809 = vmatpush2.msra.mxu0 0.0
    %2810 = vmatprep.subr.mxu0 0.0
    %2811 = vmatpush2.msra.mxu0 0.0
    %2812 = vmatprep.subr.mxu0 0.0
    %2813 = vmatpush2.msra.mxu0 0.0
    %2814 = vmatprep.mubr.f32.mxu0 0.0
    %2815 = vmatmul.mubr.f32.gmra.mxu0 %v2748
    %v2816 = vpop.f32.mrf.mxu0
    %v2817 = vadd.f32 0.0, %v2816
    %v2818 = vpop.f32.mrf.mxu0
    %2819 = vdwg.mxu0
    %2821 = vrot.lane.b32.xlu0 %v1753, 4
    %v2822 = vpop.permute.xlu0 %2821
    %2825 = vrot.lane.b32.xlu0 %v1829, 8
    %v2826 = vpop.permute.xlu0 %2825
    %2829 = vrot.lane.b32.xlu0 %v1905, 12
    %v2830 = vpop.permute.xlu0 %2829
    %2833 = vrot.lane.b32.xlu0 %v1981, 16
    %v2834 = vpop.permute.xlu0 %2833
    %2837 = vrot.lane.b32.xlu0 %v2057, 20
    %v2838 = vpop.permute.xlu0 %2837
    %2841 = vrot.lane.b32.xlu0 %v2133, 24
    %v2842 = vpop.permute.xlu0 %2841
    %2845 = vrot.lane.b32.xlu0 %v2209, 28
    %v2846 = vpop.permute.xlu0 %2845
    %v2848 = vsel %vm196, %v1677, %v2822
    %v2849 = vsel %vm1427, %v2848, %v2826
    %vm2850 = vcmask 97280
    %v2851 = vsel %vm2850, %v2849, %v2830
    %vm2852 = vcmask 130048
    %v2853 = vsel %vm2852, %v2851, %v2834
    %vm2854 = vcmask 162816
    %v2855 = vsel %vm2854, %v2853, %v2838
    %vm2856 = vcmask 195584
    %v2857 = vsel %vm2856, %v2855, %v2842
    %vm2858 = vcmask 228352
    %v2859 = vsel %vm2858, %v2857, %v2846
    %2861 = vrot.lane.b32.xlu0 %v2361, 4
    %v2862 = vpop.permute.xlu0 %2861
    %2865 = vrot.lane.b32.xlu0 %v2437, 8
    %v2866 = vpop.permute.xlu0 %2865
    %2869 = vrot.lane.b32.xlu0 %v2513, 12
    %v2870 = vpop.permute.xlu0 %2869
    %2873 = vrot.lane.b32.xlu0 %v2589, 16
    %v2874 = vpop.permute.xlu0 %2873
    %2877 = vrot.lane.b32.xlu0 %v2665, 20
    %v2878 = vpop.permute.xlu0 %2877
    %2881 = vrot.lane.b32.xlu0 %v2741, 24
    %v2882 = vpop.permute.xlu0 %2881
    %2885 = vrot.lane.b32.xlu0 %v2817, 28
    %v2886 = vpop.permute.xlu0 %2885
    %v2888 = vsel %vm196, %v2285, %v2862
    %v2889 = vsel %vm1427, %v2888, %v2866
    %v2890 = vsel %vm2850, %v2889, %v2870
    %v2891 = vsel %vm2852, %v2890, %v2874
    %v2892 = vsel %vm2854, %v2891, %v2878
    %v2893 = vsel %vm2856, %v2892, %v2882
    %v2894 = vsel %vm2858, %v2893, %v2886
    %v2895 = vadd.f32 %v76, %v2859
    %v2896 = vadd.f32 %v77, %v2894
    %v2897 = vld [vmem:[#allocation7] sm:$0xff]
    %v2898 = vld [vmem:[#allocation7 + $0x8] sm:$0xff]
    %v2899 = vld [vmem:[#allocation7 + $0x10] sm:$0xff]
    %v2900 = vld [vmem:[#allocation7 + $0x18] sm:$0xff]
    %v2902 = vsel %vm82, %v2895, 0
    %v2905 = vsel %vm82, %v2896, 0
    %2907 = vmatprep.subr.mxu0 0.0
    %2908 = vmatpush1.msra.mxu0 0.0
    %2909 = vmatprep.subr.mxu0 0.0
    %2910 = vmatpush1.msra.mxu0 0.0
    %2911 = vmatprep.subr.mxu0 0.0
    %2912 = vmatpush1.msra.mxu0 0.0
    %2913 = vmatprep.subr.mxu0 0.0
    %2914 = vmatpush1.msra.mxu0 0.0
    %2915 = vmatprep.subr.mxu0 0.0
    %2916 = vmatpush1.msra.mxu0 0.0
    %2917 = vmatprep.subr.mxu0 0.0
    %2918 = vmatpush1.msra.mxu0 0.0
    %2919 = vmatprep.subr.mxu0 0.0
    %2920 = vmatpush1.msra.mxu0 0.0
    %2921 = vmatprep.subr.mxu0 0.0
    %2922 = vmatpush1.msra.mxu0 0.0
    %2923 = vmatprep.subr.mxu0 0.0
    %2924 = vmatpush1.msra.mxu0 0.0
    %2925 = vmatprep.subr.mxu0 0.0
    %2926 = vmatpush1.msra.mxu0 0.0
    %2927 = vmatprep.subr.mxu0 0.0
    %2928 = vmatpush1.msra.mxu0 0.0
    %2929 = vmatprep.subr.mxu0 0.0
    %2930 = vmatpush1.msra.mxu0 0.0
    %2931 = vmatprep.subr.mxu0 0.0
    %2932 = vmatpush1.msra.mxu0 %v2900
    %2933 = vmatprep.subr.mxu0 0.0
    %2934 = vmatpush1.msra.mxu0 %v2899
    %2935 = vmatprep.subr.mxu0 0.0
    %2936 = vmatpush1.msra.mxu0 %v2898
    %2937 = vmatprep.subr.mxu0 0.0
    %2938 = vmatpush1.msra.mxu0 %v2897
    %2939 = vmatprep.subr.mxu0 0.0
    %2940 = vmatpush2.msra.mxu0 0.0
    %2941 = vmatprep.subr.mxu0 0.0
    %2942 = vmatpush2.msra.mxu0 0.0
    %2943 = vmatprep.subr.mxu0 0.0
    %2944 = vmatpush2.msra.mxu0 0.0
    %2945 = vmatprep.subr.mxu0 0.0
    %2946 = vmatpush2.msra.mxu0 0.0
    %2947 = vmatprep.subr.mxu0 0.0
    %2948 = vmatpush2.msra.mxu0 0.0
    %2949 = vmatprep.subr.mxu0 0.0
    %2950 = vmatpush2.msra.mxu0 0.0
    %2951 = vmatprep.subr.mxu0 0.0
    %2952 = vmatpush2.msra.mxu0 0.0
    %2953 = vmatprep.subr.mxu0 0.0
    %2954 = vmatpush2.msra.mxu0 0.0
    %2955 = vmatprep.subr.mxu0 0.0
    %2956 = vmatpush2.msra.mxu0 0.0
    %2957 = vmatprep.subr.mxu0 0.0
    %2958 = vmatpush2.msra.mxu0 0.0
    %2959 = vmatprep.subr.mxu0 0.0
    %2960 = vmatpush2.msra.mxu0 0.0
    %2961 = vmatprep.subr.mxu0 0.0
    %2962 = vmatpush2.msra.mxu0 0.0
    %2963 = vmatprep.subr.mxu0 0.0
    %2964 = vmatpush2.msra.mxu0 0.0
    %2965 = vmatprep.subr.mxu0 0.0
    %2966 = vmatpush2.msra.mxu0 0.0
    %2967 = vmatprep.subr.mxu0 0.0
    %2968 = vmatpush2.msra.mxu0 0.0
    %2969 = vmatprep.subr.mxu0 0.0
    %2970 = vmatpush2.msra.mxu0 0.0
    %2971 = vmatprep.mubr.f32.mxu0 0.0
    %2972 = vmatmul.mubr.f32.gmra.mxu0 %v2902
    %v2973 = vpop.f32.mrf.mxu0
    %v2974 = vadd.f32 0.0, %v2973
    %v2975 = vpop.f32.mrf.mxu0
    %2976 = vmatprep.mubr.f32.mxu0 0.0
    %2977 = vmatmul.mubr.f32.gmra.mxu0 %v2905
    %v2978 = vpop.f32.mrf.mxu0
    %v2979 = vadd.f32 0.0, %v2978
    %v2980 = vpop.f32.mrf.mxu0
    %2981 = vdwg.mxu0
    %2983 = vrot.lane.b32.xlu0 %v2974, 124
    %v2984 = vpop.permute.xlu0 %2983
    %2985 = vrot.lane.b32.xlu0 %v2974, 120
    %v2986 = vpop.permute.xlu0 %2985
    %2987 = vrot.lane.b32.xlu0 %v2974, 116
    %v2988 = vpop.permute.xlu0 %2987
    %2989 = vrot.lane.b32.xlu0 %v2974, 112
    %v2990 = vpop.permute.xlu0 %2989
    %2991 = vrot.lane.b32.xlu0 %v2974, 108
    %v2992 = vpop.permute.xlu0 %2991
    %2993 = vrot.lane.b32.xlu0 %v2974, 104
    %v2994 = vpop.permute.xlu0 %2993
    %2995 = vrot.lane.b32.xlu0 %v2974, 100
    %v2996 = vpop.permute.xlu0 %2995
    %2998 = vrot.lane.b32.xlu0 %v2979, 124
    %v2999 = vpop.permute.xlu0 %2998
    %3000 = vrot.lane.b32.xlu0 %v2979, 120
    %v3001 = vpop.permute.xlu0 %3000
    %3002 = vrot.lane.b32.xlu0 %v2979, 116
    %v3003 = vpop.permute.xlu0 %3002
    %3004 = vrot.lane.b32.xlu0 %v2979, 112
    %v3005 = vpop.permute.xlu0 %3004
    %3006 = vrot.lane.b32.xlu0 %v2979, 108
    %v3007 = vpop.permute.xlu0 %3006
    %3008 = vrot.lane.b32.xlu0 %v2979, 104
    %v3009 = vpop.permute.xlu0 %3008
    %3010 = vrot.lane.b32.xlu0 %v2979, 100
    %v3011 = vpop.permute.xlu0 %3010
    %3012 = vrot.lane.b32.xlu0 %v2974, 96
    %v3013 = vpop.permute.xlu0 %3012
    %v3014 = vsel %vm196, %v2974, 0
    %v3016 = vsel %vm196, %v3013, 0
    %3018 = vmatprep.subr.mxu0 0.0
    %3019 = vmatpush1.xpose.msra.mxu0 0.0
    %3020 = vmatprep.subr.mxu0 0.0
    %3021 = vmatpush1.xpose.msra.mxu0 0.0
    %3022 = vmatprep.subr.mxu0 0.0
    %3023 = vmatpush1.xpose.msra.mxu0 0.0
    %3024 = vmatprep.subr.mxu0 0.0
    %3025 = vmatpush1.xpose.msra.mxu0 0.0
    %3026 = vmatprep.subr.mxu0 0.0
    %3027 = vmatpush1.xpose.msra.mxu0 0.0
    %3028 = vmatprep.subr.mxu0 0.0
    %3029 = vmatpush1.xpose.msra.mxu0 0.0
    %3030 = vmatprep.subr.mxu0 0.0
    %3031 = vmatpush1.xpose.msra.mxu0 0.0
    %3032 = vmatprep.subr.mxu0 0.0
    %3033 = vmatpush1.xpose.msra.mxu0 0.0
    %3034 = vmatprep.subr.mxu0 0.0
    %3035 = vmatpush1.xpose.msra.mxu0 0.0
    %3036 = vmatprep.subr.mxu0 0.0
    %3037 = vmatpush1.xpose.msra.mxu0 0.0
    %3038 = vmatprep.subr.mxu0 0.0
    %3039 = vmatpush1.xpose.msra.mxu0 0.0
    %3040 = vmatprep.subr.mxu0 0.0
    %3041 = vmatpush1.xpose.msra.mxu0 0.0
    %3042 = vmatprep.subr.mxu0 0.0
    %3043 = vmatpush1.xpose.msra.mxu0 0.0
    %3044 = vmatprep.subr.mxu0 0.0
    %3045 = vmatpush1.xpose.msra.mxu0 0.0
    %3046 = vmatprep.subr.mxu0 0.0
    %3047 = vmatpush1.xpose.msra.mxu0 0.0
    %3048 = vmatprep.subr.mxu0 0.0
    %3049 = vmatpush1.xpose.msra.mxu0 %v3016
    %3050 = vmatprep.subr.mxu0 0.0
    %3051 = vmatpush2.xpose.msra.mxu0 0.0
    %3052 = vmatprep.subr.mxu0 0.0
    %3053 = vmatpush2.xpose.msra.mxu0 0.0
    %3054 = vmatprep.subr.mxu0 0.0
    %3055 = vmatpush2.xpose.msra.mxu0 0.0
    %3056 = vmatprep.subr.mxu0 0.0
    %3057 = vmatpush2.xpose.msra.mxu0 0.0
    %3058 = vmatprep.subr.mxu0 0.0
    %3059 = vmatpush2.xpose.msra.mxu0 0.0
    %3060 = vmatprep.subr.mxu0 0.0
    %3061 = vmatpush2.xpose.msra.mxu0 0.0
    %3062 = vmatprep.subr.mxu0 0.0
    %3063 = vmatpush2.xpose.msra.mxu0 0.0
    %3064 = vmatprep.subr.mxu0 0.0
    %3065 = vmatpush2.xpose.msra.mxu0 0.0
    %3066 = vmatprep.subr.mxu0 0.0
    %3067 = vmatpush2.xpose.msra.mxu0 0.0
    %3068 = vmatprep.subr.mxu0 0.0
    %3069 = vmatpush2.xpose.msra.mxu0 0.0
    %3070 = vmatprep.subr.mxu0 0.0
    %3071 = vmatpush2.xpose.msra.mxu0 0.0
    %3072 = vmatprep.subr.mxu0 0.0
    %3073 = vmatpush2.xpose.msra.mxu0 0.0
    %3074 = vmatprep.subr.mxu0 0.0
    %3075 = vmatpush2.xpose.msra.mxu0 0.0
    %3076 = vmatprep.subr.mxu0 0.0
    %3077 = vmatpush2.xpose.msra.mxu0 0.0
    %3078 = vmatprep.subr.mxu0 0.0
    %3079 = vmatpush2.xpose.msra.mxu0 0.0
    %3080 = vmatprep.subr.mxu0 0.0
    %3081 = vmatpush2.xpose.msra.mxu0 0.0
    %3082 = vmatprep.mubr.f32.mxu0 0.0
    %3083 = vmatmul.mubr.f32.gmra.mxu0 %v3014
    %v3084 = vpop.f32.mrf.mxu0
    %v3085 = vadd.f32 0.0, %v3084
    %v3086 = vpop.f32.mrf.mxu0
    %3087 = vdwg.mxu0
    %3088 = vrot.lane.b32.xlu0 %v2984, 96
    %v3089 = vpop.permute.xlu0 %3088
    %v3090 = vsel %vm196, %v2984, 0
    %v3092 = vsel %vm196, %v3089, 0
    %3094 = vmatprep.subr.mxu0 0.0
    %3095 = vmatpush1.xpose.msra.mxu0 0.0
    %3096 = vmatprep.subr.mxu0 0.0
    %3097 = vmatpush1.xpose.msra.mxu0 0.0
    %3098 = vmatprep.subr.mxu0 0.0
    %3099 = vmatpush1.xpose.msra.mxu0 0.0
    %3100 = vmatprep.subr.mxu0 0.0
    %3101 = vmatpush1.xpose.msra.mxu0 0.0
    %3102 = vmatprep.subr.mxu0 0.0
    %3103 = vmatpush1.xpose.msra.mxu0 0.0
    %3104 = vmatprep.subr.mxu0 0.0
    %3105 = vmatpush1.xpose.msra.mxu0 0.0
    %3106 = vmatprep.subr.mxu0 0.0
    %3107 = vmatpush1.xpose.msra.mxu0 0.0
    %3108 = vmatprep.subr.mxu0 0.0
    %3109 = vmatpush1.xpose.msra.mxu0 0.0
    %3110 = vmatprep.subr.mxu0 0.0
    %3111 = vmatpush1.xpose.msra.mxu0 0.0
    %3112 = vmatprep.subr.mxu0 0.0
    %3113 = vmatpush1.xpose.msra.mxu0 0.0
    %3114 = vmatprep.subr.mxu0 0.0
    %3115 = vmatpush1.xpose.msra.mxu0 0.0
    %3116 = vmatprep.subr.mxu0 0.0
    %3117 = vmatpush1.xpose.msra.mxu0 0.0
    %3118 = vmatprep.subr.mxu0 0.0
    %3119 = vmatpush1.xpose.msra.mxu0 0.0
    %3120 = vmatprep.subr.mxu0 0.0
    %3121 = vmatpush1.xpose.msra.mxu0 0.0
    %3122 = vmatprep.subr.mxu0 0.0
    %3123 = vmatpush1.xpose.msra.mxu0 0.0
    %3124 = vmatprep.subr.mxu0 0.0
    %3125 = vmatpush1.xpose.msra.mxu0 %v3092
    %3126 = vmatprep.subr.mxu0 0.0
    %3127 = vmatpush2.xpose.msra.mxu0 0.0
    %3128 = vmatprep.subr.mxu0 0.0
    %3129 = vmatpush2.xpose.msra.mxu0 0.0
    %3130 = vmatprep.subr.mxu0 0.0
    %3131 = vmatpush2.xpose.msra.mxu0 0.0
    %3132 = vmatprep.subr.mxu0 0.0
    %3133 = vmatpush2.xpose.msra.mxu0 0.0
    %3134 = vmatprep.subr.mxu0 0.0
    %3135 = vmatpush2.xpose.msra.mxu0 0.0
    %3136 = vmatprep.subr.mxu0 0.0
    %3137 = vmatpush2.xpose.msra.mxu0 0.0
    %3138 = vmatprep.subr.mxu0 0.0
    %3139 = vmatpush2.xpose.msra.mxu0 0.0
    %3140 = vmatprep.subr.mxu0 0.0
    %3141 = vmatpush2.xpose.msra.mxu0 0.0
    %3142 = vmatprep.subr.mxu0 0.0
    %3143 = vmatpush2.xpose.msra.mxu0 0.0
    %3144 = vmatprep.subr.mxu0 0.0
    %3145 = vmatpush2.xpose.msra.mxu0 0.0
    %3146 = vmatprep.subr.mxu0 0.0
    %3147 = vmatpush2.xpose.msra.mxu0 0.0
    %3148 = vmatprep.subr.mxu0 0.0
    %3149 = vmatpush2.xpose.msra.mxu0 0.0
    %3150 = vmatprep.subr.mxu0 0.0
    %3151 = vmatpush2.xpose.msra.mxu0 0.0
    %3152 = vmatprep.subr.mxu0 0.0
    %3153 = vmatpush2.xpose.msra.mxu0 0.0
    %3154 = vmatprep.subr.mxu0 0.0
    %3155 = vmatpush2.xpose.msra.mxu0 0.0
    %3156 = vmatprep.subr.mxu0 0.0
    %3157 = vmatpush2.xpose.msra.mxu0 0.0
    %3158 = vmatprep.mubr.f32.mxu0 0.0
    %3159 = vmatmul.mubr.f32.gmra.mxu0 %v3090
    %v3160 = vpop.f32.mrf.mxu0
    %v3161 = vadd.f32 0.0, %v3160
    %v3162 = vpop.f32.mrf.mxu0
    %3163 = vdwg.mxu0
    %3164 = vrot.lane.b32.xlu0 %v2986, 96
    %v3165 = vpop.permute.xlu0 %3164
    %v3166 = vsel %vm196, %v2986, 0
    %v3168 = vsel %vm196, %v3165, 0
    %3170 = vmatprep.subr.mxu0 0.0
    %3171 = vmatpush1.xpose.msra.mxu0 0.0
    %3172 = vmatprep.subr.mxu0 0.0
    %3173 = vmatpush1.xpose.msra.mxu0 0.0
    %3174 = vmatprep.subr.mxu0 0.0
    %3175 = vmatpush1.xpose.msra.mxu0 0.0
    %3176 = vmatprep.subr.mxu0 0.0
    %3177 = vmatpush1.xpose.msra.mxu0 0.0
    %3178 = vmatprep.subr.mxu0 0.0
    %3179 = vmatpush1.xpose.msra.mxu0 0.0
    %3180 = vmatprep.subr.mxu0 0.0
    %3181 = vmatpush1.xpose.msra.mxu0 0.0
    %3182 = vmatprep.subr.mxu0 0.0
    %3183 = vmatpush1.xpose.msra.mxu0 0.0
    %3184 = vmatprep.subr.mxu0 0.0
    %3185 = vmatpush1.xpose.msra.mxu0 0.0
    %3186 = vmatprep.subr.mxu0 0.0
    %3187 = vmatpush1.xpose.msra.mxu0 0.0
    %3188 = vmatprep.subr.mxu0 0.0
    %3189 = vmatpush1.xpose.msra.mxu0 0.0
    %3190 = vmatprep.subr.mxu0 0.0
    %3191 = vmatpush1.xpose.msra.mxu0 0.0
    %3192 = vmatprep.subr.mxu0 0.0
    %3193 = vmatpush1.xpose.msra.mxu0 0.0
    %3194 = vmatprep.subr.mxu0 0.0
    %3195 = vmatpush1.xpose.msra.mxu0 0.0
    %3196 = vmatprep.subr.mxu0 0.0
    %3197 = vmatpush1.xpose.msra.mxu0 0.0
    %3198 = vmatprep.subr.mxu0 0.0
    %3199 = vmatpush1.xpose.msra.mxu0 0.0
    %3200 = vmatprep.subr.mxu0 0.0
    %3201 = vmatpush1.xpose.msra.mxu0 %v3168
    %3202 = vmatprep.subr.mxu0 0.0
    %3203 = vmatpush2.xpose.msra.mxu0 0.0
    %3204 = vmatprep.subr.mxu0 0.0
    %3205 = vmatpush2.xpose.msra.mxu0 0.0
    %3206 = vmatprep.subr.mxu0 0.0
    %3207 = vmatpush2.xpose.msra.mxu0 0.0
    %3208 = vmatprep.subr.mxu0 0.0
    %3209 = vmatpush2.xpose.msra.mxu0 0.0
    %3210 = vmatprep.subr.mxu0 0.0
    %3211 = vmatpush2.xpose.msra.mxu0 0.0
    %3212 = vmatprep.subr.mxu0 0.0
    %3213 = vmatpush2.xpose.msra.mxu0 0.0
    %3214 = vmatprep.subr.mxu0 0.0
    %3215 = vmatpush2.xpose.msra.mxu0 0.0
    %3216 = vmatprep.subr.mxu0 0.0
    %3217 = vmatpush2.xpose.msra.mxu0 0.0
    %3218 = vmatprep.subr.mxu0 0.0
    %3219 = vmatpush2.xpose.msra.mxu0 0.0
    %3220 = vmatprep.subr.mxu0 0.0
    %3221 = vmatpush2.xpose.msra.mxu0 0.0
    %3222 = vmatprep.subr.mxu0 0.0
    %3223 = vmatpush2.xpose.msra.mxu0 0.0
    %3224 = vmatprep.subr.mxu0 0.0
    %3225 = vmatpush2.xpose.msra.mxu0 0.0
    %3226 = vmatprep.subr.mxu0 0.0
    %3227 = vmatpush2.xpose.msra.mxu0 0.0
    %3228 = vmatprep.subr.mxu0 0.0
    %3229 = vmatpush2.xpose.msra.mxu0 0.0
    %3230 = vmatprep.subr.mxu0 0.0
    %3231 = vmatpush2.xpose.msra.mxu0 0.0
    %3232 = vmatprep.subr.mxu0 0.0
    %3233 = vmatpush2.xpose.msra.mxu0 0.0
    %3234 = vmatprep.mubr.f32.mxu0 0.0
    %3235 = vmatmul.mubr.f32.gmra.mxu0 %v3166
    %v3236 = vpop.f32.mrf.mxu0
    %v3237 = vadd.f32 0.0, %v3236
    %v3238 = vpop.f32.mrf.mxu0
    %3239 = vdwg.mxu0
    %3240 = vrot.lane.b32.xlu0 %v2988, 96
    %v3241 = vpop.permute.xlu0 %3240
    %v3242 = vsel %vm196, %v2988, 0
    %v3244 = vsel %vm196, %v3241, 0
    %3246 = vmatprep.subr.mxu0 0.0
    %3247 = vmatpush1.xpose.msra.mxu0 0.0
    %3248 = vmatprep.subr.mxu0 0.0
    %3249 = vmatpush1.xpose.msra.mxu0 0.0
    %3250 = vmatprep.subr.mxu0 0.0
    %3251 = vmatpush1.xpose.msra.mxu0 0.0
    %3252 = vmatprep.subr.mxu0 0.0
    %3253 = vmatpush1.xpose.msra.mxu0 0.0
    %3254 = vmatprep.subr.mxu0 0.0
    %3255 = vmatpush1.xpose.msra.mxu0 0.0
    %3256 = vmatprep.subr.mxu0 0.0
    %3257 = vmatpush1.xpose.msra.mxu0 0.0
    %3258 = vmatprep.subr.mxu0 0.0
    %3259 = vmatpush1.xpose.msra.mxu0 0.0
    %3260 = vmatprep.subr.mxu0 0.0
    %3261 = vmatpush1.xpose.msra.mxu0 0.0
    %3262 = vmatprep.subr.mxu0 0.0
    %3263 = vmatpush1.xpose.msra.mxu0 0.0
    %3264 = vmatprep.subr.mxu0 0.0
    %3265 = vmatpush1.xpose.msra.mxu0 0.0
    %3266 = vmatprep.subr.mxu0 0.0
    %3267 = vmatpush1.xpose.msra.mxu0 0.0
    %3268 = vmatprep.subr.mxu0 0.0
    %3269 = vmatpush1.xpose.msra.mxu0 0.0
    %3270 = vmatprep.subr.mxu0 0.0
    %3271 = vmatpush1.xpose.msra.mxu0 0.0
    %3272 = vmatprep.subr.mxu0 0.0
    %3273 = vmatpush1.xpose.msra.mxu0 0.0
    %3274 = vmatprep.subr.mxu0 0.0
    %3275 = vmatpush1.xpose.msra.mxu0 0.0
    %3276 = vmatprep.subr.mxu0 0.0
    %3277 = vmatpush1.xpose.msra.mxu0 %v3244
    %3278 = vmatprep.subr.mxu0 0.0
    %3279 = vmatpush2.xpose.msra.mxu0 0.0
    %3280 = vmatprep.subr.mxu0 0.0
    %3281 = vmatpush2.xpose.msra.mxu0 0.0
    %3282 = vmatprep.subr.mxu0 0.0
    %3283 = vmatpush2.xpose.msra.mxu0 0.0
    %3284 = vmatprep.subr.mxu0 0.0
    %3285 = vmatpush2.xpose.msra.mxu0 0.0
    %3286 = vmatprep.subr.mxu0 0.0
    %3287 = vmatpush2.xpose.msra.mxu0 0.0
    %3288 = vmatprep.subr.mxu0 0.0
    %3289 = vmatpush2.xpose.msra.mxu0 0.0
    %3290 = vmatprep.subr.mxu0 0.0
    %3291 = vmatpush2.xpose.msra.mxu0 0.0
    %3292 = vmatprep.subr.mxu0 0.0
    %3293 = vmatpush2.xpose.msra.mxu0 0.0
    %3294 = vmatprep.subr.mxu0 0.0
    %3295 = vmatpush2.xpose.msra.mxu0 0.0
    %3296 = vmatprep.subr.mxu0 0.0
    %3297 = vmatpush2.xpose.msra.mxu0 0.0
    %3298 = vmatprep.subr.mxu0 0.0
    %3299 = vmatpush2.xpose.msra.mxu0 0.0
    %3300 = vmatprep.subr.mxu0 0.0
    %3301 = vmatpush2.xpose.msra.mxu0 0.0
    %3302 = vmatprep.subr.mxu0 0.0
    %3303 = vmatpush2.xpose.msra.mxu0 0.0
    %3304 = vmatprep.subr.mxu0 0.0
    %3305 = vmatpush2.xpose.msra.mxu0 0.0
    %3306 = vmatprep.subr.mxu0 0.0
    %3307 = vmatpush2.xpose.msra.mxu0 0.0
    %3308 = vmatprep.subr.mxu0 0.0
    %3309 = vmatpush2.xpose.msra.mxu0 0.0
    %3310 = vmatprep.mubr.f32.mxu0 0.0
    %3311 = vmatmul.mubr.f32.gmra.mxu0 %v3242
    %v3312 = vpop.f32.mrf.mxu0
    %v3313 = vadd.f32 0.0, %v3312
    %v3314 = vpop.f32.mrf.mxu0
    %3315 = vdwg.mxu0
    %3316 = vrot.lane.b32.xlu0 %v2990, 96
    %v3317 = vpop.permute.xlu0 %3316
    %v3318 = vsel %vm196, %v2990, 0
    %v3320 = vsel %vm196, %v3317, 0
    %3322 = vmatprep.subr.mxu0 0.0
    %3323 = vmatpush1.xpose.msra.mxu0 0.0
    %3324 = vmatprep.subr.mxu0 0.0
    %3325 = vmatpush1.xpose.msra.mxu0 0.0
    %3326 = vmatprep.subr.mxu0 0.0
    %3327 = vmatpush1.xpose.msra.mxu0 0.0
    %3328 = vmatprep.subr.mxu0 0.0
    %3329 = vmatpush1.xpose.msra.mxu0 0.0
    %3330 = vmatprep.subr.mxu0 0.0
    %3331 = vmatpush1.xpose.msra.mxu0 0.0
    %3332 = vmatprep.subr.mxu0 0.0
    %3333 = vmatpush1.xpose.msra.mxu0 0.0
    %3334 = vmatprep.subr.mxu0 0.0
    %3335 = vmatpush1.xpose.msra.mxu0 0.0
    %3336 = vmatprep.subr.mxu0 0.0
    %3337 = vmatpush1.xpose.msra.mxu0 0.0
    %3338 = vmatprep.subr.mxu0 0.0
    %3339 = vmatpush1.xpose.msra.mxu0 0.0
    %3340 = vmatprep.subr.mxu0 0.0
    %3341 = vmatpush1.xpose.msra.mxu0 0.0
    %3342 = vmatprep.subr.mxu0 0.0
    %3343 = vmatpush1.xpose.msra.mxu0 0.0
    %3344 = vmatprep.subr.mxu0 0.0
    %3345 = vmatpush1.xpose.msra.mxu0 0.0
    %3346 = vmatprep.subr.mxu0 0.0
    %3347 = vmatpush1.xpose.msra.mxu0 0.0
    %3348 = vmatprep.subr.mxu0 0.0
    %3349 = vmatpush1.xpose.msra.mxu0 0.0
    %3350 = vmatprep.subr.mxu0 0.0
    %3351 = vmatpush1.xpose.msra.mxu0 0.0
    %3352 = vmatprep.subr.mxu0 0.0
    %3353 = vmatpush1.xpose.msra.mxu0 %v3320
    %3354 = vmatprep.subr.mxu0 0.0
    %3355 = vmatpush2.xpose.msra.mxu0 0.0
    %3356 = vmatprep.subr.mxu0 0.0
    %3357 = vmatpush2.xpose.msra.mxu0 0.0
    %3358 = vmatprep.subr.mxu0 0.0
    %3359 = vmatpush2.xpose.msra.mxu0 0.0
    %3360 = vmatprep.subr.mxu0 0.0
    %3361 = vmatpush2.xpose.msra.mxu0 0.0
    %3362 = vmatprep.subr.mxu0 0.0
    %3363 = vmatpush2.xpose.msra.mxu0 0.0
    %3364 = vmatprep.subr.mxu0 0.0
    %3365 = vmatpush2.xpose.msra.mxu0 0.0
    %3366 = vmatprep.subr.mxu0 0.0
    %3367 = vmatpush2.xpose.msra.mxu0 0.0
    %3368 = vmatprep.subr.mxu0 0.0
    %3369 = vmatpush2.xpose.msra.mxu0 0.0
    %3370 = vmatprep.subr.mxu0 0.0
    %3371 = vmatpush2.xpose.msra.mxu0 0.0
    %3372 = vmatprep.subr.mxu0 0.0
    %3373 = vmatpush2.xpose.msra.mxu0 0.0
    %3374 = vmatprep.subr.mxu0 0.0
    %3375 = vmatpush2.xpose.msra.mxu0 0.0
    %3376 = vmatprep.subr.mxu0 0.0
    %3377 = vmatpush2.xpose.msra.mxu0 0.0
    %3378 = vmatprep.subr.mxu0 0.0
    %3379 = vmatpush2.xpose.msra.mxu0 0.0
    %3380 = vmatprep.subr.mxu0 0.0
    %3381 = vmatpush2.xpose.msra.mxu0 0.0
    %3382 = vmatprep.subr.mxu0 0.0
    %3383 = vmatpush2.xpose.msra.mxu0 0.0
    %3384 = vmatprep.subr.mxu0 0.0
    %3385 = vmatpush2.xpose.msra.mxu0 0.0
    %3386 = vmatprep.mubr.f32.mxu0 0.0
    %3387 = vmatmul.mubr.f32.gmra.mxu0 %v3318
    %v3388 = vpop.f32.mrf.mxu0
    %v3389 = vadd.f32 0.0, %v3388
    %v3390 = vpop.f32.mrf.mxu0
    %3391 = vdwg.mxu0
    %3392 = vrot.lane.b32.xlu0 %v2992, 96
    %v3393 = vpop.permute.xlu0 %3392
    %v3394 = vsel %vm196, %v2992, 0
    %v3396 = vsel %vm196, %v3393, 0
    %3398 = vmatprep.subr.mxu0 0.0
    %3399 = vmatpush1.xpose.msra.mxu0 0.0
    %3400 = vmatprep.subr.mxu0 0.0
    %3401 = vmatpush1.xpose.msra.mxu0 0.0
    %3402 = vmatprep.subr.mxu0 0.0
    %3403 = vmatpush1.xpose.msra.mxu0 0.0
    %3404 = vmatprep.subr.mxu0 0.0
    %3405 = vmatpush1.xpose.msra.mxu0 0.0
    %3406 = vmatprep.subr.mxu0 0.0
    %3407 = vmatpush1.xpose.msra.mxu0 0.0
    %3408 = vmatprep.subr.mxu0 0.0
    %3409 = vmatpush1.xpose.msra.mxu0 0.0
    %3410 = vmatprep.subr.mxu0 0.0
    %3411 = vmatpush1.xpose.msra.mxu0 0.0
    %3412 = vmatprep.subr.mxu0 0.0
    %3413 = vmatpush1.xpose.msra.mxu0 0.0
    %3414 = vmatprep.subr.mxu0 0.0
    %3415 = vmatpush1.xpose.msra.mxu0 0.0
    %3416 = vmatprep.subr.mxu0 0.0
    %3417 = vmatpush1.xpose.msra.mxu0 0.0
    %3418 = vmatprep.subr.mxu0 0.0
    %3419 = vmatpush1.xpose.msra.mxu0 0.0
    %3420 = vmatprep.subr.mxu0 0.0
    %3421 = vmatpush1.xpose.msra.mxu0 0.0
    %3422 = vmatprep.subr.mxu0 0.0
    %3423 = vmatpush1.xpose.msra.mxu0 0.0
    %3424 = vmatprep.subr.mxu0 0.0
    %3425 = vmatpush1.xpose.msra.mxu0 0.0
    %3426 = vmatprep.subr.mxu0 0.0
    %3427 = vmatpush1.xpose.msra.mxu0 0.0
    %3428 = vmatprep.subr.mxu0 0.0
    %3429 = vmatpush1.xpose.msra.mxu0 %v3396
    %3430 = vmatprep.subr.mxu0 0.0
    %3431 = vmatpush2.xpose.msra.mxu0 0.0
    %3432 = vmatprep.subr.mxu0 0.0
    %3433 = vmatpush2.xpose.msra.mxu0 0.0
    %3434 = vmatprep.subr.mxu0 0.0
    %3435 = vmatpush2.xpose.msra.mxu0 0.0
    %3436 = vmatprep.subr.mxu0 0.0
    %3437 = vmatpush2.xpose.msra.mxu0 0.0
    %3438 = vmatprep.subr.mxu0 0.0
    %3439 = vmatpush2.xpose.msra.mxu0 0.0
    %3440 = vmatprep.subr.mxu0 0.0
    %3441 = vmatpush2.xpose.msra.mxu0 0.0
    %3442 = vmatprep.subr.mxu0 0.0
    %3443 = vmatpush2.xpose.msra.mxu0 0.0
    %3444 = vmatprep.subr.mxu0 0.0
    %3445 = vmatpush2.xpose.msra.mxu0 0.0
    %3446 = vmatprep.subr.mxu0 0.0
    %3447 = vmatpush2.xpose.msra.mxu0 0.0
    %3448 = vmatprep.subr.mxu0 0.0
    %3449 = vmatpush2.xpose.msra.mxu0 0.0
    %3450 = vmatprep.subr.mxu0 0.0
    %3451 = vmatpush2.xpose.msra.mxu0 0.0
    %3452 = vmatprep.subr.mxu0 0.0
    %3453 = vmatpush2.xpose.msra.mxu0 0.0
    %3454 = vmatprep.subr.mxu0 0.0
    %3455 = vmatpush2.xpose.msra.mxu0 0.0
    %3456 = vmatprep.subr.mxu0 0.0
    %3457 = vmatpush2.xpose.msra.mxu0 0.0
    %3458 = vmatprep.subr.mxu0 0.0
    %3459 = vmatpush2.xpose.msra.mxu0 0.0
    %3460 = vmatprep.subr.mxu0 0.0
    %3461 = vmatpush2.xpose.msra.mxu0 0.0
    %3462 = vmatprep.mubr.f32.mxu0 0.0
    %3463 = vmatmul.mubr.f32.gmra.mxu0 %v3394
    %v3464 = vpop.f32.mrf.mxu0
    %v3465 = vadd.f32 0.0, %v3464
    %v3466 = vpop.f32.mrf.mxu0
    %3467 = vdwg.mxu0
    %3468 = vrot.lane.b32.xlu0 %v2994, 96
    %v3469 = vpop.permute.xlu0 %3468
    %v3470 = vsel %vm196, %v2994, 0
    %v3472 = vsel %vm196, %v3469, 0
    %3474 = vmatprep.subr.mxu0 0.0
    %3475 = vmatpush1.xpose.msra.mxu0 0.0
    %3476 = vmatprep.subr.mxu0 0.0
    %3477 = vmatpush1.xpose.msra.mxu0 0.0
    %3478 = vmatprep.subr.mxu0 0.0
    %3479 = vmatpush1.xpose.msra.mxu0 0.0
    %3480 = vmatprep.subr.mxu0 0.0
    %3481 = vmatpush1.xpose.msra.mxu0 0.0
    %3482 = vmatprep.subr.mxu0 0.0
    %3483 = vmatpush1.xpose.msra.mxu0 0.0
    %3484 = vmatprep.subr.mxu0 0.0
    %3485 = vmatpush1.xpose.msra.mxu0 0.0
    %3486 = vmatprep.subr.mxu0 0.0
    %3487 = vmatpush1.xpose.msra.mxu0 0.0
    %3488 = vmatprep.subr.mxu0 0.0
    %3489 = vmatpush1.xpose.msra.mxu0 0.0
    %3490 = vmatprep.subr.mxu0 0.0
    %3491 = vmatpush1.xpose.msra.mxu0 0.0
    %3492 = vmatprep.subr.mxu0 0.0
    %3493 = vmatpush1.xpose.msra.mxu0 0.0
    %3494 = vmatprep.subr.mxu0 0.0
    %3495 = vmatpush1.xpose.msra.mxu0 0.0
    %3496 = vmatprep.subr.mxu0 0.0
    %3497 = vmatpush1.xpose.msra.mxu0 0.0
    %3498 = vmatprep.subr.mxu0 0.0
    %3499 = vmatpush1.xpose.msra.mxu0 0.0
    %3500 = vmatprep.subr.mxu0 0.0
    %3501 = vmatpush1.xpose.msra.mxu0 0.0
    %3502 = vmatprep.subr.mxu0 0.0
    %3503 = vmatpush1.xpose.msra.mxu0 0.0
    %3504 = vmatprep.subr.mxu0 0.0
    %3505 = vmatpush1.xpose.msra.mxu0 %v3472
    %3506 = vmatprep.subr.mxu0 0.0
    %3507 = vmatpush2.xpose.msra.mxu0 0.0
    %3508 = vmatprep.subr.mxu0 0.0
    %3509 = vmatpush2.xpose.msra.mxu0 0.0
    %3510 = vmatprep.subr.mxu0 0.0
    %3511 = vmatpush2.xpose.msra.mxu0 0.0
    %3512 = vmatprep.subr.mxu0 0.0
    %3513 = vmatpush2.xpose.msra.mxu0 0.0
    %3514 = vmatprep.subr.mxu0 0.0
    %3515 = vmatpush2.xpose.msra.mxu0 0.0
    %3516 = vmatprep.subr.mxu0 0.0
    %3517 = vmatpush2.xpose.msra.mxu0 0.0
    %3518 = vmatprep.subr.mxu0 0.0
    %3519 = vmatpush2.xpose.msra.mxu0 0.0
    %3520 = vmatprep.subr.mxu0 0.0
    %3521 = vmatpush2.xpose.msra.mxu0 0.0
    %3522 = vmatprep.subr.mxu0 0.0
    %3523 = vmatpush2.xpose.msra.mxu0 0.0
    %3524 = vmatprep.subr.mxu0 0.0
    %3525 = vmatpush2.xpose.msra.mxu0 0.0
    %3526 = vmatprep.subr.mxu0 0.0
    %3527 = vmatpush2.xpose.msra.mxu0 0.0
    %3528 = vmatprep.subr.mxu0 0.0
    %3529 = vmatpush2.xpose.msra.mxu0 0.0
    %3530 = vmatprep.subr.mxu0 0.0
    %3531 = vmatpush2.xpose.msra.mxu0 0.0
    %3532 = vmatprep.subr.mxu0 0.0
    %3533 = vmatpush2.xpose.msra.mxu0 0.0
    %3534 = vmatprep.subr.mxu0 0.0
    %3535 = vmatpush2.xpose.msra.mxu0 0.0
    %3536 = vmatprep.subr.mxu0 0.0
    %3537 = vmatpush2.xpose.msra.mxu0 0.0
    %3538 = vmatprep.mubr.f32.mxu0 0.0
    %3539 = vmatmul.mubr.f32.gmra.mxu0 %v3470
    %v3540 = vpop.f32.mrf.mxu0
    %v3541 = vadd.f32 0.0, %v3540
    %v3542 = vpop.f32.mrf.mxu0
    %3543 = vdwg.mxu0
    %3544 = vrot.lane.b32.xlu0 %v2996, 96
    %v3545 = vpop.permute.xlu0 %3544
    %v3546 = vsel %vm196, %v2996, 0
    %v3548 = vsel %vm196, %v3545, 0
    %3550 = vmatprep.subr.mxu0 0.0
    %3551 = vmatpush1.xpose.msra.mxu0 0.0
    %3552 = vmatprep.subr.mxu0 0.0
    %3553 = vmatpush1.xpose.msra.mxu0 0.0
    %3554 = vmatprep.subr.mxu0 0.0
    %3555 = vmatpush1.xpose.msra.mxu0 0.0
    %3556 = vmatprep.subr.mxu0 0.0
    %3557 = vmatpush1.xpose.msra.mxu0 0.0
    %3558 = vmatprep.subr.mxu0 0.0
    %3559 = vmatpush1.xpose.msra.mxu0 0.0
    %3560 = vmatprep.subr.mxu0 0.0
    %3561 = vmatpush1.xpose.msra.mxu0 0.0
    %3562 = vmatprep.subr.mxu0 0.0
    %3563 = vmatpush1.xpose.msra.mxu0 0.0
    %3564 = vmatprep.subr.mxu0 0.0
    %3565 = vmatpush1.xpose.msra.mxu0 0.0
    %3566 = vmatprep.subr.mxu0 0.0
    %3567 = vmatpush1.xpose.msra.mxu0 0.0
    %3568 = vmatprep.subr.mxu0 0.0
    %3569 = vmatpush1.xpose.msra.mxu0 0.0
    %3570 = vmatprep.subr.mxu0 0.0
    %3571 = vmatpush1.xpose.msra.mxu0 0.0
    %3572 = vmatprep.subr.mxu0 0.0
    %3573 = vmatpush1.xpose.msra.mxu0 0.0
    %3574 = vmatprep.subr.mxu0 0.0
    %3575 = vmatpush1.xpose.msra.mxu0 0.0
    %3576 = vmatprep.subr.mxu0 0.0
    %3577 = vmatpush1.xpose.msra.mxu0 0.0
    %3578 = vmatprep.subr.mxu0 0.0
    %3579 = vmatpush1.xpose.msra.mxu0 0.0
    %3580 = vmatprep.subr.mxu0 0.0
    %3581 = vmatpush1.xpose.msra.mxu0 %v3548
    %3582 = vmatprep.subr.mxu0 0.0
    %3583 = vmatpush2.xpose.msra.mxu0 0.0
    %3584 = vmatprep.subr.mxu0 0.0
    %3585 = vmatpush2.xpose.msra.mxu0 0.0
    %3586 = vmatprep.subr.mxu0 0.0
    %3587 = vmatpush2.xpose.msra.mxu0 0.0
    %3588 = vmatprep.subr.mxu0 0.0
    %3589 = vmatpush2.xpose.msra.mxu0 0.0
    %3590 = vmatprep.subr.mxu0 0.0
    %3591 = vmatpush2.xpose.msra.mxu0 0.0
    %3592 = vmatprep.subr.mxu0 0.0
    %3593 = vmatpush2.xpose.msra.mxu0 0.0
    %3594 = vmatprep.subr.mxu0 0.0
    %3595 = vmatpush2.xpose.msra.mxu0 0.0
    %3596 = vmatprep.subr.mxu0 0.0
    %3597 = vmatpush2.xpose.msra.mxu0 0.0
    %3598 = vmatprep.subr.mxu0 0.0
    %3599 = vmatpush2.xpose.msra.mxu0 0.0
    %3600 = vmatprep.subr.mxu0 0.0
    %3601 = vmatpush2.xpose.msra.mxu0 0.0
    %3602 = vmatprep.subr.mxu0 0.0
    %3603 = vmatpush2.xpose.msra.mxu0 0.0
    %3604 = vmatprep.subr.mxu0 0.0
    %3605 = vmatpush2.xpose.msra.mxu0 0.0
    %3606 = vmatprep.subr.mxu0 0.0
    %3607 = vmatpush2.xpose.msra.mxu0 0.0
    %3608 = vmatprep.subr.mxu0 0.0
    %3609 = vmatpush2.xpose.msra.mxu0 0.0
    %3610 = vmatprep.subr.mxu0 0.0
    %3611 = vmatpush2.xpose.msra.mxu0 0.0
    %3612 = vmatprep.subr.mxu0 0.0
    %3613 = vmatpush2.xpose.msra.mxu0 0.0
    %3614 = vmatprep.mubr.f32.mxu0 0.0
    %3615 = vmatmul.mubr.f32.gmra.mxu0 %v3546
    %v3616 = vpop.f32.mrf.mxu0
    %v3617 = vadd.f32 0.0, %v3616
    %v3618 = vpop.f32.mrf.mxu0
    %3619 = vdwg.mxu0
    %3620 = vrot.lane.b32.xlu0 %v2979, 96
    %v3621 = vpop.permute.xlu0 %3620
    %v3622 = vsel %vm196, %v2979, 0
    %v3624 = vsel %vm196, %v3621, 0
    %3626 = vmatprep.subr.mxu0 0.0
    %3627 = vmatpush1.xpose.msra.mxu0 0.0
    %3628 = vmatprep.subr.mxu0 0.0
    %3629 = vmatpush1.xpose.msra.mxu0 0.0
    %3630 = vmatprep.subr.mxu0 0.0
    %3631 = vmatpush1.xpose.msra.mxu0 0.0
    %3632 = vmatprep.subr.mxu0 0.0
    %3633 = vmatpush1.xpose.msra.mxu0 0.0
    %3634 = vmatprep.subr.mxu0 0.0
    %3635 = vmatpush1.xpose.msra.mxu0 0.0
    %3636 = vmatprep.subr.mxu0 0.0
    %3637 = vmatpush1.xpose.msra.mxu0 0.0
    %3638 = vmatprep.subr.mxu0 0.0
    %3639 = vmatpush1.xpose.msra.mxu0 0.0
    %3640 = vmatprep.subr.mxu0 0.0
    %3641 = vmatpush1.xpose.msra.mxu0 0.0
    %3642 = vmatprep.subr.mxu0 0.0
    %3643 = vmatpush1.xpose.msra.mxu0 0.0
    %3644 = vmatprep.subr.mxu0 0.0
    %3645 = vmatpush1.xpose.msra.mxu0 0.0
    %3646 = vmatprep.subr.mxu0 0.0
    %3647 = vmatpush1.xpose.msra.mxu0 0.0
    %3648 = vmatprep.subr.mxu0 0.0
    %3649 = vmatpush1.xpose.msra.mxu0 0.0
    %3650 = vmatprep.subr.mxu0 0.0
    %3651 = vmatpush1.xpose.msra.mxu0 0.0
    %3652 = vmatprep.subr.mxu0 0.0
    %3653 = vmatpush1.xpose.msra.mxu0 0.0
    %3654 = vmatprep.subr.mxu0 0.0
    %3655 = vmatpush1.xpose.msra.mxu0 0.0
    %3656 = vmatprep.subr.mxu0 0.0
    %3657 = vmatpush1.xpose.msra.mxu0 %v3624
    %3658 = vmatprep.subr.mxu0 0.0
    %3659 = vmatpush2.xpose.msra.mxu0 0.0
    %3660 = vmatprep.subr.mxu0 0.0
    %3661 = vmatpush2.xpose.msra.mxu0 0.0
    %3662 = vmatprep.subr.mxu0 0.0
    %3663 = vmatpush2.xpose.msra.mxu0 0.0
    %3664 = vmatprep.subr.mxu0 0.0
    %3665 = vmatpush2.xpose.msra.mxu0 0.0
    %3666 = vmatprep.subr.mxu0 0.0
    %3667 = vmatpush2.xpose.msra.mxu0 0.0
    %3668 = vmatprep.subr.mxu0 0.0
    %3669 = vmatpush2.xpose.msra.mxu0 0.0
    %3670 = vmatprep.subr.mxu0 0.0
    %3671 = vmatpush2.xpose.msra.mxu0 0.0
    %3672 = vmatprep.subr.mxu0 0.0
    %3673 = vmatpush2.xpose.msra.mxu0 0.0
    %3674 = vmatprep.subr.mxu0 0.0
    %3675 = vmatpush2.xpose.msra.mxu0 0.0
    %3676 = vmatprep.subr.mxu0 0.0
    %3677 = vmatpush2.xpose.msra.mxu0 0.0
    %3678 = vmatprep.subr.mxu0 0.0
    %3679 = vmatpush2.xpose.msra.mxu0 0.0
    %3680 = vmatprep.subr.mxu0 0.0
    %3681 = vmatpush2.xpose.msra.mxu0 0.0
    %3682 = vmatprep.subr.mxu0 0.0
    %3683 = vmatpush2.xpose.msra.mxu0 0.0
    %3684 = vmatprep.subr.mxu0 0.0
    %3685 = vmatpush2.xpose.msra.mxu0 0.0
    %3686 = vmatprep.subr.mxu0 0.0
    %3687 = vmatpush2.xpose.msra.mxu0 0.0
    %3688 = vmatprep.subr.mxu0 0.0
    %3689 = vmatpush2.xpose.msra.mxu0 0.0
    %3690 = vmatprep.mubr.f32.mxu0 0.0
    %3691 = vmatmul.mubr.f32.gmra.mxu0 %v3622
    %v3692 = vpop.f32.mrf.mxu0
    %v3693 = vadd.f32 0.0, %v3692
    %v3694 = vpop.f32.mrf.mxu0
    %3695 = vdwg.mxu0
    %3696 = vrot.lane.b32.xlu0 %v2999, 96
    %v3697 = vpop.permute.xlu0 %3696
    %v3698 = vsel %vm196, %v2999, 0
    %v3700 = vsel %vm196, %v3697, 0
    %3702 = vmatprep.subr.mxu0 0.0
    %3703 = vmatpush1.xpose.msra.mxu0 0.0
    %3704 = vmatprep.subr.mxu0 0.0
    %3705 = vmatpush1.xpose.msra.mxu0 0.0
    %3706 = vmatprep.subr.mxu0 0.0
    %3707 = vmatpush1.xpose.msra.mxu0 0.0
    %3708 = vmatprep.subr.mxu0 0.0
    %3709 = vmatpush1.xpose.msra.mxu0 0.0
    %3710 = vmatprep.subr.mxu0 0.0
    %3711 = vmatpush1.xpose.msra.mxu0 0.0
    %3712 = vmatprep.subr.mxu0 0.0
    %3713 = vmatpush1.xpose.msra.mxu0 0.0
    %3714 = vmatprep.subr.mxu0 0.0
    %3715 = vmatpush1.xpose.msra.mxu0 0.0
    %3716 = vmatprep.subr.mxu0 0.0
    %3717 = vmatpush1.xpose.msra.mxu0 0.0
    %3718 = vmatprep.subr.mxu0 0.0
    %3719 = vmatpush1.xpose.msra.mxu0 0.0
    %3720 = vmatprep.subr.mxu0 0.0
    %3721 = vmatpush1.xpose.msra.mxu0 0.0
    %3722 = vmatprep.subr.mxu0 0.0
    %3723 = vmatpush1.xpose.msra.mxu0 0.0
    %3724 = vmatprep.subr.mxu0 0.0
    %3725 = vmatpush1.xpose.msra.mxu0 0.0
    %3726 = vmatprep.subr.mxu0 0.0
    %3727 = vmatpush1.xpose.msra.mxu0 0.0
    %3728 = vmatprep.subr.mxu0 0.0
    %3729 = vmatpush1.xpose.msra.mxu0 0.0
    %3730 = vmatprep.subr.mxu0 0.0
    %3731 = vmatpush1.xpose.msra.mxu0 0.0
    %3732 = vmatprep.subr.mxu0 0.0
    %3733 = vmatpush1.xpose.msra.mxu0 %v3700
    %3734 = vmatprep.subr.mxu0 0.0
    %3735 = vmatpush2.xpose.msra.mxu0 0.0
    %3736 = vmatprep.subr.mxu0 0.0
    %3737 = vmatpush2.xpose.msra.mxu0 0.0
    %3738 = vmatprep.subr.mxu0 0.0
    %3739 = vmatpush2.xpose.msra.mxu0 0.0
    %3740 = vmatprep.subr.mxu0 0.0
    %3741 = vmatpush2.xpose.msra.mxu0 0.0
    %3742 = vmatprep.subr.mxu0 0.0
    %3743 = vmatpush2.xpose.msra.mxu0 0.0
    %3744 = vmatprep.subr.mxu0 0.0
    %3745 = vmatpush2.xpose.msra.mxu0 0.0
    %3746 = vmatprep.subr.mxu0 0.0
    %3747 = vmatpush2.xpose.msra.mxu0 0.0
    %3748 = vmatprep.subr.mxu0 0.0
    %3749 = vmatpush2.xpose.msra.mxu0 0.0
    %3750 = vmatprep.subr.mxu0 0.0
    %3751 = vmatpush2.xpose.msra.mxu0 0.0
    %3752 = vmatprep.subr.mxu0 0.0
    %3753 = vmatpush2.xpose.msra.mxu0 0.0
    %3754 = vmatprep.subr.mxu0 0.0
    %3755 = vmatpush2.xpose.msra.mxu0 0.0
    %3756 = vmatprep.subr.mxu0 0.0
    %3757 = vmatpush2.xpose.msra.mxu0 0.0
    %3758 = vmatprep.subr.mxu0 0.0
    %3759 = vmatpush2.xpose.msra.mxu0 0.0
    %3760 = vmatprep.subr.mxu0 0.0
    %3761 = vmatpush2.xpose.msra.mxu0 0.0
    %3762 = vmatprep.subr.mxu0 0.0
    %3763 = vmatpush2.xpose.msra.mxu0 0.0
    %3764 = vmatprep.subr.mxu0 0.0
    %3765 = vmatpush2.xpose.msra.mxu0 0.0
    %3766 = vmatprep.mubr.f32.mxu0 0.0
    %3767 = vmatmul.mubr.f32.gmra.mxu0 %v3698
    %v3768 = vpop.f32.mrf.mxu0
    %v3769 = vadd.f32 0.0, %v3768
    %v3770 = vpop.f32.mrf.mxu0
    %3771 = vdwg.mxu0
    %3772 = vrot.lane.b32.xlu0 %v3001, 96
    %v3773 = vpop.permute.xlu0 %3772
    %v3774 = vsel %vm196, %v3001, 0
    %v3776 = vsel %vm196, %v3773, 0
    %3778 = vmatprep.subr.mxu0 0.0
    %3779 = vmatpush1.xpose.msra.mxu0 0.0
    %3780 = vmatprep.subr.mxu0 0.0
    %3781 = vmatpush1.xpose.msra.mxu0 0.0
    %3782 = vmatprep.subr.mxu0 0.0
    %3783 = vmatpush1.xpose.msra.mxu0 0.0
    %3784 = vmatprep.subr.mxu0 0.0
    %3785 = vmatpush1.xpose.msra.mxu0 0.0
    %3786 = vmatprep.subr.mxu0 0.0
    %3787 = vmatpush1.xpose.msra.mxu0 0.0
    %3788 = vmatprep.subr.mxu0 0.0
    %3789 = vmatpush1.xpose.msra.mxu0 0.0
    %3790 = vmatprep.subr.mxu0 0.0
    %3791 = vmatpush1.xpose.msra.mxu0 0.0
    %3792 = vmatprep.subr.mxu0 0.0
    %3793 = vmatpush1.xpose.msra.mxu0 0.0
    %3794 = vmatprep.subr.mxu0 0.0
    %3795 = vmatpush1.xpose.msra.mxu0 0.0
    %3796 = vmatprep.subr.mxu0 0.0
    %3797 = vmatpush1.xpose.msra.mxu0 0.0
    %3798 = vmatprep.subr.mxu0 0.0
    %3799 = vmatpush1.xpose.msra.mxu0 0.0
    %3800 = vmatprep.subr.mxu0 0.0
    %3801 = vmatpush1.xpose.msra.mxu0 0.0
    %3802 = vmatprep.subr.mxu0 0.0
    %3803 = vmatpush1.xpose.msra.mxu0 0.0
    %3804 = vmatprep.subr.mxu0 0.0
    %3805 = vmatpush1.xpose.msra.mxu0 0.0
    %3806 = vmatprep.subr.mxu0 0.0
    %3807 = vmatpush1.xpose.msra.mxu0 0.0
    %3808 = vmatprep.subr.mxu0 0.0
    %3809 = vmatpush1.xpose.msra.mxu0 %v3776
    %3810 = vmatprep.subr.mxu0 0.0
    %3811 = vmatpush2.xpose.msra.mxu0 0.0
    %3812 = vmatprep.subr.mxu0 0.0
    %3813 = vmatpush2.xpose.msra.mxu0 0.0
    %3814 = vmatprep.subr.mxu0 0.0
    %3815 = vmatpush2.xpose.msra.mxu0 0.0
    %3816 = vmatprep.subr.mxu0 0.0
    %3817 = vmatpush2.xpose.msra.mxu0 0.0
    %3818 = vmatprep.subr.mxu0 0.0
    %3819 = vmatpush2.xpose.msra.mxu0 0.0
    %3820 = vmatprep.subr.mxu0 0.0
    %3821 = vmatpush2.xpose.msra.mxu0 0.0
    %3822 = vmatprep.subr.mxu0 0.0
    %3823 = vmatpush2.xpose.msra.mxu0 0.0
    %3824 = vmatprep.subr.mxu0 0.0
    %3825 = vmatpush2.xpose.msra.mxu0 0.0
    %3826 = vmatprep.subr.mxu0 0.0
    %3827 = vmatpush2.xpose.msra.mxu0 0.0
    %3828 = vmatprep.subr.mxu0 0.0
    %3829 = vmatpush2.xpose.msra.mxu0 0.0
    %3830 = vmatprep.subr.mxu0 0.0
    %3831 = vmatpush2.xpose.msra.mxu0 0.0
    %3832 = vmatprep.subr.mxu0 0.0
    %3833 = vmatpush2.xpose.msra.mxu0 0.0
    %3834 = vmatprep.subr.mxu0 0.0
    %3835 = vmatpush2.xpose.msra.mxu0 0.0
    %3836 = vmatprep.subr.mxu0 0.0
    %3837 = vmatpush2.xpose.msra.mxu0 0.0
    %3838 = vmatprep.subr.mxu0 0.0
    %3839 = vmatpush2.xpose.msra.mxu0 0.0
    %3840 = vmatprep.subr.mxu0 0.0
    %3841 = vmatpush2.xpose.msra.mxu0 0.0
    %3842 = vmatprep.mubr.f32.mxu0 0.0
    %3843 = vmatmul.mubr.f32.gmra.mxu0 %v3774
    %v3844 = vpop.f32.mrf.mxu0
    %v3845 = vadd.f32 0.0, %v3844
    %v3846 = vpop.f32.mrf.mxu0
    %3847 = vdwg.mxu0
    %3848 = vrot.lane.b32.xlu0 %v3003, 96
    %v3849 = vpop.permute.xlu0 %3848
    %v3850 = vsel %vm196, %v3003, 0
    %v3852 = vsel %vm196, %v3849, 0
    %3854 = vmatprep.subr.mxu0 0.0
    %3855 = vmatpush1.xpose.msra.mxu0 0.0
    %3856 = vmatprep.subr.mxu0 0.0
    %3857 = vmatpush1.xpose.msra.mxu0 0.0
    %3858 = vmatprep.subr.mxu0 0.0
    %3859 = vmatpush1.xpose.msra.mxu0 0.0
    %3860 = vmatprep.subr.mxu0 0.0
    %3861 = vmatpush1.xpose.msra.mxu0 0.0
    %3862 = vmatprep.subr.mxu0 0.0
    %3863 = vmatpush1.xpose.msra.mxu0 0.0
    %3864 = vmatprep.subr.mxu0 0.0
    %3865 = vmatpush1.xpose.msra.mxu0 0.0
    %3866 = vmatprep.subr.mxu0 0.0
    %3867 = vmatpush1.xpose.msra.mxu0 0.0
    %3868 = vmatprep.subr.mxu0 0.0
    %3869 = vmatpush1.xpose.msra.mxu0 0.0
    %3870 = vmatprep.subr.mxu0 0.0
    %3871 = vmatpush1.xpose.msra.mxu0 0.0
    %3872 = vmatprep.subr.mxu0 0.0
    %3873 = vmatpush1.xpose.msra.mxu0 0.0
    %3874 = vmatprep.subr.mxu0 0.0
    %3875 = vmatpush1.xpose.msra.mxu0 0.0
    %3876 = vmatprep.subr.mxu0 0.0
    %3877 = vmatpush1.xpose.msra.mxu0 0.0
    %3878 = vmatprep.subr.mxu0 0.0
    %3879 = vmatpush1.xpose.msra.mxu0 0.0
    %3880 = vmatprep.subr.mxu0 0.0
    %3881 = vmatpush1.xpose.msra.mxu0 0.0
    %3882 = vmatprep.subr.mxu0 0.0
    %3883 = vmatpush1.xpose.msra.mxu0 0.0
    %3884 = vmatprep.subr.mxu0 0.0
    %3885 = vmatpush1.xpose.msra.mxu0 %v3852
    %3886 = vmatprep.subr.mxu0 0.0
    %3887 = vmatpush2.xpose.msra.mxu0 0.0
    %3888 = vmatprep.subr.mxu0 0.0
    %3889 = vmatpush2.xpose.msra.mxu0 0.0
    %3890 = vmatprep.subr.mxu0 0.0
    %3891 = vmatpush2.xpose.msra.mxu0 0.0
    %3892 = vmatprep.subr.mxu0 0.0
    %3893 = vmatpush2.xpose.msra.mxu0 0.0
    %3894 = vmatprep.subr.mxu0 0.0
    %3895 = vmatpush2.xpose.msra.mxu0 0.0
    %3896 = vmatprep.subr.mxu0 0.0
    %3897 = vmatpush2.xpose.msra.mxu0 0.0
    %3898 = vmatprep.subr.mxu0 0.0
    %3899 = vmatpush2.xpose.msra.mxu0 0.0
    %3900 = vmatprep.subr.mxu0 0.0
    %3901 = vmatpush2.xpose.msra.mxu0 0.0
    %3902 = vmatprep.subr.mxu0 0.0
    %3903 = vmatpush2.xpose.msra.mxu0 0.0
    %3904 = vmatprep.subr.mxu0 0.0
    %3905 = vmatpush2.xpose.msra.mxu0 0.0
    %3906 = vmatprep.subr.mxu0 0.0
    %3907 = vmatpush2.xpose.msra.mxu0 0.0
    %3908 = vmatprep.subr.mxu0 0.0
    %3909 = vmatpush2.xpose.msra.mxu0 0.0
    %3910 = vmatprep.subr.mxu0 0.0
    %3911 = vmatpush2.xpose.msra.mxu0 0.0
    %3912 = vmatprep.subr.mxu0 0.0
    %3913 = vmatpush2.xpose.msra.mxu0 0.0
    %3914 = vmatprep.subr.mxu0 0.0
    %3915 = vmatpush2.xpose.msra.mxu0 0.0
    %3916 = vmatprep.subr.mxu0 0.0
    %3917 = vmatpush2.xpose.msra.mxu0 0.0
    %3918 = vmatprep.mubr.f32.mxu0 0.0
    %3919 = vmatmul.mubr.f32.gmra.mxu0 %v3850
    %v3920 = vpop.f32.mrf.mxu0
    %v3921 = vadd.f32 0.0, %v3920
    %v3922 = vpop.f32.mrf.mxu0
    %3923 = vdwg.mxu0
    %3924 = vrot.lane.b32.xlu0 %v3005, 96
    %v3925 = vpop.permute.xlu0 %3924
    %v3926 = vsel %vm196, %v3005, 0
    %v3928 = vsel %vm196, %v3925, 0
    %3930 = vmatprep.subr.mxu0 0.0
    %3931 = vmatpush1.xpose.msra.mxu0 0.0
    %3932 = vmatprep.subr.mxu0 0.0
    %3933 = vmatpush1.xpose.msra.mxu0 0.0
    %3934 = vmatprep.subr.mxu0 0.0
    %3935 = vmatpush1.xpose.msra.mxu0 0.0
    %3936 = vmatprep.subr.mxu0 0.0
    %3937 = vmatpush1.xpose.msra.mxu0 0.0
    %3938 = vmatprep.subr.mxu0 0.0
    %3939 = vmatpush1.xpose.msra.mxu0 0.0
    %3940 = vmatprep.subr.mxu0 0.0
    %3941 = vmatpush1.xpose.msra.mxu0 0.0
    %3942 = vmatprep.subr.mxu0 0.0
    %3943 = vmatpush1.xpose.msra.mxu0 0.0
    %3944 = vmatprep.subr.mxu0 0.0
    %3945 = vmatpush1.xpose.msra.mxu0 0.0
    %3946 = vmatprep.subr.mxu0 0.0
    %3947 = vmatpush1.xpose.msra.mxu0 0.0
    %3948 = vmatprep.subr.mxu0 0.0
    %3949 = vmatpush1.xpose.msra.mxu0 0.0
    %3950 = vmatprep.subr.mxu0 0.0
    %3951 = vmatpush1.xpose.msra.mxu0 0.0
    %3952 = vmatprep.subr.mxu0 0.0
    %3953 = vmatpush1.xpose.msra.mxu0 0.0
    %3954 = vmatprep.subr.mxu0 0.0
    %3955 = vmatpush1.xpose.msra.mxu0 0.0
    %3956 = vmatprep.subr.mxu0 0.0
    %3957 = vmatpush1.xpose.msra.mxu0 0.0
    %3958 = vmatprep.subr.mxu0 0.0
    %3959 = vmatpush1.xpose.msra.mxu0 0.0
    %3960 = vmatprep.subr.mxu0 0.0
    %3961 = vmatpush1.xpose.msra.mxu0 %v3928
    %3962 = vmatprep.subr.mxu0 0.0
    %3963 = vmatpush2.xpose.msra.mxu0 0.0
    %3964 = vmatprep.subr.mxu0 0.0
    %3965 = vmatpush2.xpose.msra.mxu0 0.0
    %3966 = vmatprep.subr.mxu0 0.0
    %3967 = vmatpush2.xpose.msra.mxu0 0.0
    %3968 = vmatprep.subr.mxu0 0.0
    %3969 = vmatpush2.xpose.msra.mxu0 0.0
    %3970 = vmatprep.subr.mxu0 0.0
    %3971 = vmatpush2.xpose.msra.mxu0 0.0
    %3972 = vmatprep.subr.mxu0 0.0
    %3973 = vmatpush2.xpose.msra.mxu0 0.0
    %3974 = vmatprep.subr.mxu0 0.0
    %3975 = vmatpush2.xpose.msra.mxu0 0.0
    %3976 = vmatprep.subr.mxu0 0.0
    %3977 = vmatpush2.xpose.msra.mxu0 0.0
    %3978 = vmatprep.subr.mxu0 0.0
    %3979 = vmatpush2.xpose.msra.mxu0 0.0
    %3980 = vmatprep.subr.mxu0 0.0
    %3981 = vmatpush2.xpose.msra.mxu0 0.0
    %3982 = vmatprep.subr.mxu0 0.0
    %3983 = vmatpush2.xpose.msra.mxu0 0.0
    %3984 = vmatprep.subr.mxu0 0.0
    %3985 = vmatpush2.xpose.msra.mxu0 0.0
    %3986 = vmatprep.subr.mxu0 0.0
    %3987 = vmatpush2.xpose.msra.mxu0 0.0
    %3988 = vmatprep.subr.mxu0 0.0
    %3989 = vmatpush2.xpose.msra.mxu0 0.0
    %3990 = vmatprep.subr.mxu0 0.0
    %3991 = vmatpush2.xpose.msra.mxu0 0.0
    %3992 = vmatprep.subr.mxu0 0.0
    %3993 = vmatpush2.xpose.msra.mxu0 0.0
    %3994 = vmatprep.mubr.f32.mxu0 0.0
    %3995 = vmatmul.mubr.f32.gmra.mxu0 %v3926
    %v3996 = vpop.f32.mrf.mxu0
    %v3997 = vadd.f32 0.0, %v3996
    %v3998 = vpop.f32.mrf.mxu0
    %3999 = vdwg.mxu0
    %4000 = vrot.lane.b32.xlu0 %v3007, 96
    %v4001 = vpop.permute.xlu0 %4000
    %v4002 = vsel %vm196, %v3007, 0
    %v4004 = vsel %vm196, %v4001, 0
    %4006 = vmatprep.subr.mxu0 0.0
    %4007 = vmatpush1.xpose.msra.mxu0 0.0
    %4008 = vmatprep.subr.mxu0 0.0
    %4009 = vmatpush1.xpose.msra.mxu0 0.0
    %4010 = vmatprep.subr.mxu0 0.0
    %4011 = vmatpush1.xpose.msra.mxu0 0.0
    %4012 = vmatprep.subr.mxu0 0.0
    %4013 = vmatpush1.xpose.msra.mxu0 0.0
    %4014 = vmatprep.subr.mxu0 0.0
    %4015 = vmatpush1.xpose.msra.mxu0 0.0
    %4016 = vmatprep.subr.mxu0 0.0
    %4017 = vmatpush1.xpose.msra.mxu0 0.0
    %4018 = vmatprep.subr.mxu0 0.0
    %4019 = vmatpush1.xpose.msra.mxu0 0.0
    %4020 = vmatprep.subr.mxu0 0.0
    %4021 = vmatpush1.xpose.msra.mxu0 0.0
    %4022 = vmatprep.subr.mxu0 0.0
    %4023 = vmatpush1.xpose.msra.mxu0 0.0
    %4024 = vmatprep.subr.mxu0 0.0
    %4025 = vmatpush1.xpose.msra.mxu0 0.0
    %4026 = vmatprep.subr.mxu0 0.0
    %4027 = vmatpush1.xpose.msra.mxu0 0.0
    %4028 = vmatprep.subr.mxu0 0.0
    %4029 = vmatpush1.xpose.msra.mxu0 0.0
    %4030 = vmatprep.subr.mxu0 0.0
    %4031 = vmatpush1.xpose.msra.mxu0 0.0
    %4032 = vmatprep.subr.mxu0 0.0
    %4033 = vmatpush1.xpose.msra.mxu0 0.0
    %4034 = vmatprep.subr.mxu0 0.0
    %4035 = vmatpush1.xpose.msra.mxu0 0.0
    %4036 = vmatprep.subr.mxu0 0.0
    %4037 = vmatpush1.xpose.msra.mxu0 %v4004
    %4038 = vmatprep.subr.mxu0 0.0
    %4039 = vmatpush2.xpose.msra.mxu0 0.0
    %4040 = vmatprep.subr.mxu0 0.0
    %4041 = vmatpush2.xpose.msra.mxu0 0.0
    %4042 = vmatprep.subr.mxu0 0.0
    %4043 = vmatpush2.xpose.msra.mxu0 0.0
    %4044 = vmatprep.subr.mxu0 0.0
    %4045 = vmatpush2.xpose.msra.mxu0 0.0
    %4046 = vmatprep.subr.mxu0 0.0
    %4047 = vmatpush2.xpose.msra.mxu0 0.0
    %4048 = vmatprep.subr.mxu0 0.0
    %4049 = vmatpush2.xpose.msra.mxu0 0.0
    %4050 = vmatprep.subr.mxu0 0.0
    %4051 = vmatpush2.xpose.msra.mxu0 0.0
    %4052 = vmatprep.subr.mxu0 0.0
    %4053 = vmatpush2.xpose.msra.mxu0 0.0
    %4054 = vmatprep.subr.mxu0 0.0
    %4055 = vmatpush2.xpose.msra.mxu0 0.0
    %4056 = vmatprep.subr.mxu0 0.0
    %4057 = vmatpush2.xpose.msra.mxu0 0.0
    %4058 = vmatprep.subr.mxu0 0.0
    %4059 = vmatpush2.xpose.msra.mxu0 0.0
    %4060 = vmatprep.subr.mxu0 0.0
    %4061 = vmatpush2.xpose.msra.mxu0 0.0
    %4062 = vmatprep.subr.mxu0 0.0
    %4063 = vmatpush2.xpose.msra.mxu0 0.0
    %4064 = vmatprep.subr.mxu0 0.0
    %4065 = vmatpush2.xpose.msra.mxu0 0.0
    %4066 = vmatprep.subr.mxu0 0.0
    %4067 = vmatpush2.xpose.msra.mxu0 0.0
    %4068 = vmatprep.subr.mxu0 0.0
    %4069 = vmatpush2.xpose.msra.mxu0 0.0
    %4070 = vmatprep.mubr.f32.mxu0 0.0
    %4071 = vmatmul.mubr.f32.gmra.mxu0 %v4002
    %v4072 = vpop.f32.mrf.mxu0
    %v4073 = vadd.f32 0.0, %v4072
    %v4074 = vpop.f32.mrf.mxu0
    %4075 = vdwg.mxu0
    %4076 = vrot.lane.b32.xlu0 %v3009, 96
    %v4077 = vpop.permute.xlu0 %4076
    %v4078 = vsel %vm196, %v3009, 0
    %v4080 = vsel %vm196, %v4077, 0
    %4082 = vmatprep.subr.mxu0 0.0
    %4083 = vmatpush1.xpose.msra.mxu0 0.0
    %4084 = vmatprep.subr.mxu0 0.0
    %4085 = vmatpush1.xpose.msra.mxu0 0.0
    %4086 = vmatprep.subr.mxu0 0.0
    %4087 = vmatpush1.xpose.msra.mxu0 0.0
    %4088 = vmatprep.subr.mxu0 0.0
    %4089 = vmatpush1.xpose.msra.mxu0 0.0
    %4090 = vmatprep.subr.mxu0 0.0
    %4091 = vmatpush1.xpose.msra.mxu0 0.0
    %4092 = vmatprep.subr.mxu0 0.0
    %4093 = vmatpush1.xpose.msra.mxu0 0.0
    %4094 = vmatprep.subr.mxu0 0.0
    %4095 = vmatpush1.xpose.msra.mxu0 0.0
    %4096 = vmatprep.subr.mxu0 0.0
    %4097 = vmatpush1.xpose.msra.mxu0 0.0
    %4098 = vmatprep.subr.mxu0 0.0
    %4099 = vmatpush1.xpose.msra.mxu0 0.0
    %4100 = vmatprep.subr.mxu0 0.0
    %4101 = vmatpush1.xpose.msra.mxu0 0.0
    %4102 = vmatprep.subr.mxu0 0.0
    %4103 = vmatpush1.xpose.msra.mxu0 0.0
    %4104 = vmatprep.subr.mxu0 0.0
    %4105 = vmatpush1.xpose.msra.mxu0 0.0
    %4106 = vmatprep.subr.mxu0 0.0
    %4107 = vmatpush1.xpose.msra.mxu0 0.0
    %4108 = vmatprep.subr.mxu0 0.0
    %4109 = vmatpush1.xpose.msra.mxu0 0.0
    %4110 = vmatprep.subr.mxu0 0.0
    %4111 = vmatpush1.xpose.msra.mxu0 0.0
    %4112 = vmatprep.subr.mxu0 0.0
    %4113 = vmatpush1.xpose.msra.mxu0 %v4080
    %4114 = vmatprep.subr.mxu0 0.0
    %4115 = vmatpush2.xpose.msra.mxu0 0.0
    %4116 = vmatprep.subr.mxu0 0.0
    %4117 = vmatpush2.xpose.msra.mxu0 0.0
    %4118 = vmatprep.subr.mxu0 0.0
    %4119 = vmatpush2.xpose.msra.mxu0 0.0
    %4120 = vmatprep.subr.mxu0 0.0
    %4121 = vmatpush2.xpose.msra.mxu0 0.0
    %4122 = vmatprep.subr.mxu0 0.0
    %4123 = vmatpush2.xpose.msra.mxu0 0.0
    %4124 = vmatprep.subr.mxu0 0.0
    %4125 = vmatpush2.xpose.msra.mxu0 0.0
    %4126 = vmatprep.subr.mxu0 0.0
    %4127 = vmatpush2.xpose.msra.mxu0 0.0
    %4128 = vmatprep.subr.mxu0 0.0
    %4129 = vmatpush2.xpose.msra.mxu0 0.0
    %4130 = vmatprep.subr.mxu0 0.0
    %4131 = vmatpush2.xpose.msra.mxu0 0.0
    %4132 = vmatprep.subr.mxu0 0.0
    %4133 = vmatpush2.xpose.msra.mxu0 0.0
    %4134 = vmatprep.subr.mxu0 0.0
    %4135 = vmatpush2.xpose.msra.mxu0 0.0
    %4136 = vmatprep.subr.mxu0 0.0
    %4137 = vmatpush2.xpose.msra.mxu0 0.0
    %4138 = vmatprep.subr.mxu0 0.0
    %4139 = vmatpush2.xpose.msra.mxu0 0.0
    %4140 = vmatprep.subr.mxu0 0.0
    %4141 = vmatpush2.xpose.msra.mxu0 0.0
    %4142 = vmatprep.subr.mxu0 0.0
    %4143 = vmatpush2.xpose.msra.mxu0 0.0
    %4144 = vmatprep.subr.mxu0 0.0
    %4145 = vmatpush2.xpose.msra.mxu0 0.0
    %4146 = vmatprep.mubr.f32.mxu0 0.0
    %4147 = vmatmul.mubr.f32.gmra.mxu0 %v4078
    %v4148 = vpop.f32.mrf.mxu0
    %v4149 = vadd.f32 0.0, %v4148
    %v4150 = vpop.f32.mrf.mxu0
    %4151 = vdwg.mxu0
    %4152 = vrot.lane.b32.xlu0 %v3011, 96
    %v4153 = vpop.permute.xlu0 %4152
    %v4154 = vsel %vm196, %v3011, 0
    %v4156 = vsel %vm196, %v4153, 0
    %4158 = vmatprep.subr.mxu0 0.0
    %4159 = vmatpush1.xpose.msra.mxu0 0.0
    %4160 = vmatprep.subr.mxu0 0.0
    %4161 = vmatpush1.xpose.msra.mxu0 0.0
    %4162 = vmatprep.subr.mxu0 0.0
    %4163 = vmatpush1.xpose.msra.mxu0 0.0
    %4164 = vmatprep.subr.mxu0 0.0
    %4165 = vmatpush1.xpose.msra.mxu0 0.0
    %4166 = vmatprep.subr.mxu0 0.0
    %4167 = vmatpush1.xpose.msra.mxu0 0.0
    %4168 = vmatprep.subr.mxu0 0.0
    %4169 = vmatpush1.xpose.msra.mxu0 0.0
    %4170 = vmatprep.subr.mxu0 0.0
    %4171 = vmatpush1.xpose.msra.mxu0 0.0
    %4172 = vmatprep.subr.mxu0 0.0
    %4173 = vmatpush1.xpose.msra.mxu0 0.0
    %4174 = vmatprep.subr.mxu0 0.0
    %4175 = vmatpush1.xpose.msra.mxu0 0.0
    %4176 = vmatprep.subr.mxu0 0.0
    %4177 = vmatpush1.xpose.msra.mxu0 0.0
    %4178 = vmatprep.subr.mxu0 0.0
    %4179 = vmatpush1.xpose.msra.mxu0 0.0
    %4180 = vmatprep.subr.mxu0 0.0
    %4181 = vmatpush1.xpose.msra.mxu0 0.0
    %4182 = vmatprep.subr.mxu0 0.0
    %4183 = vmatpush1.xpose.msra.mxu0 0.0
    %4184 = vmatprep.subr.mxu0 0.0
    %4185 = vmatpush1.xpose.msra.mxu0 0.0
    %4186 = vmatprep.subr.mxu0 0.0
    %4187 = vmatpush1.xpose.msra.mxu0 0.0
    %4188 = vmatprep.subr.mxu0 0.0
    %4189 = vmatpush1.xpose.msra.mxu0 %v4156
    %4190 = vmatprep.subr.mxu0 0.0
    %4191 = vmatpush2.xpose.msra.mxu0 0.0
    %4192 = vmatprep.subr.mxu0 0.0
    %4193 = vmatpush2.xpose.msra.mxu0 0.0
    %4194 = vmatprep.subr.mxu0 0.0
    %4195 = vmatpush2.xpose.msra.mxu0 0.0
    %4196 = vmatprep.subr.mxu0 0.0
    %4197 = vmatpush2.xpose.msra.mxu0 0.0
    %4198 = vmatprep.subr.mxu0 0.0
    %4199 = vmatpush2.xpose.msra.mxu0 0.0
    %4200 = vmatprep.subr.mxu0 0.0
    %4201 = vmatpush2.xpose.msra.mxu0 0.0
    %4202 = vmatprep.subr.mxu0 0.0
    %4203 = vmatpush2.xpose.msra.mxu0 0.0
    %4204 = vmatprep.subr.mxu0 0.0
    %4205 = vmatpush2.xpose.msra.mxu0 0.0
    %4206 = vmatprep.subr.mxu0 0.0
    %4207 = vmatpush2.xpose.msra.mxu0 0.0
    %4208 = vmatprep.subr.mxu0 0.0
    %4209 = vmatpush2.xpose.msra.mxu0 0.0
    %4210 = vmatprep.subr.mxu0 0.0
    %4211 = vmatpush2.xpose.msra.mxu0 0.0
    %4212 = vmatprep.subr.mxu0 0.0
    %4213 = vmatpush2.xpose.msra.mxu0 0.0
    %4214 = vmatprep.subr.mxu0 0.0
    %4215 = vmatpush2.xpose.msra.mxu0 0.0
    %4216 = vmatprep.subr.mxu0 0.0
    %4217 = vmatpush2.xpose.msra.mxu0 0.0
    %4218 = vmatprep.subr.mxu0 0.0
    %4219 = vmatpush2.xpose.msra.mxu0 0.0
    %4220 = vmatprep.subr.mxu0 0.0
    %4221 = vmatpush2.xpose.msra.mxu0 0.0
    %4222 = vmatprep.mubr.f32.mxu0 0.0
    %4223 = vmatmul.mubr.f32.gmra.mxu0 %v4154
    %v4224 = vpop.f32.mrf.mxu0
    %v4225 = vadd.f32 0.0, %v4224
    %v4226 = vpop.f32.mrf.mxu0
    %4227 = vdwg.mxu0
    %v4228 = vmul.f32 %v3085, 0.5
    %v4229 = vmul.f32 %v3161, 0.5
    %v4230 = vmul.f32 %v3237, 0.5
    %v4231 = vmul.f32 %v3313, 0.5
    %v4232 = vmul.f32 %v3389, 0.5
    %v4233 = vmul.f32 %v3465, 0.5
    %v4234 = vmul.f32 %v3541, 0.5
    %v4235 = vmul.f32 %v3617, 0.5
    %v4236 = vmul.f32 %v3693, 0.5
    %v4237 = vmul.f32 %v3769, 0.5
    %v4238 = vmul.f32 %v3845, 0.5
    %v4239 = vmul.f32 %v3921, 0.5
    %v4240 = vmul.f32 %v3997, 0.5
    %v4241 = vmul.f32 %v4073, 0.5
    %v4242 = vmul.f32 %v4149, 0.5
    %v4243 = vmul.f32 %v4225, 0.5
    %v4244 = vsel %vm1427, %v4228, -inf
    %4245 = vmax.xlane.f32.xlu0 %v4244
    %v4246 = vpop.xlane.xlu0 %4245
    %v4247 = vsel %vm1427, %v4229, -inf
    %4248 = vmax.xlane.f32.xlu0 %v4247
    %v4249 = vpop.xlane.xlu0 %4248
    %v4250 = vsel %vm1427, %v4230, -inf
    %4251 = vmax.xlane.f32.xlu0 %v4250
    %v4252 = vpop.xlane.xlu0 %4251
    %v4253 = vsel %vm1427, %v4231, -inf
    %4254 = vmax.xlane.f32.xlu0 %v4253
    %v4255 = vpop.xlane.xlu0 %4254
    %v4256 = vsel %vm1427, %v4232, -inf
    %4257 = vmax.xlane.f32.xlu0 %v4256
    %v4258 = vpop.xlane.xlu0 %4257
    %v4259 = vsel %vm1427, %v4233, -inf
    %4260 = vmax.xlane.f32.xlu0 %v4259
    %v4261 = vpop.xlane.xlu0 %4260
    %v4262 = vsel %vm1427, %v4234, -inf
    %4263 = vmax.xlane.f32.xlu0 %v4262
    %v4264 = vpop.xlane.xlu0 %4263
    %v4265 = vsel %vm1427, %v4235, -inf
    %4266 = vmax.xlane.f32.xlu0 %v4265
    %v4267 = vpop.xlane.xlu0 %4266
    %v4268 = vsel %vm1427, %v4236, -inf
    %4269 = vmax.xlane.f32.xlu0 %v4268
    %v4270 = vpop.xlane.xlu0 %4269
    %v4271 = vsel %vm1427, %v4237, -inf
    %4272 = vmax.xlane.f32.xlu0 %v4271
    %v4273 = vpop.xlane.xlu0 %4272
    %v4274 = vsel %vm1427, %v4238, -inf
    %4275 = vmax.xlane.f32.xlu0 %v4274
    %v4276 = vpop.xlane.xlu0 %4275
    %v4277 = vsel %vm1427, %v4239, -inf
    %4278 = vmax.xlane.f32.xlu0 %v4277
    %v4279 = vpop.xlane.xlu0 %4278
    %v4280 = vsel %vm1427, %v4240, -inf
    %4281 = vmax.xlane.f32.xlu0 %v4280
    %v4282 = vpop.xlane.xlu0 %4281
    %v4283 = vsel %vm1427, %v4241, -inf
    %4284 = vmax.xlane.f32.xlu0 %v4283
    %v4285 = vpop.xlane.xlu0 %4284
    %v4286 = vsel %vm1427, %v4242, -inf
    %4287 = vmax.xlane.f32.xlu0 %v4286
    %v4288 = vpop.xlane.xlu0 %4287
    %v4289 = vsel %vm1427, %v4243, -inf
    %4290 = vmax.xlane.f32.xlu0 %v4289
    %v4291 = vpop.xlane.xlu0 %4290
    %v4292 = vsub.f32 %v4228, %v4246
    %v4293 = vsub.f32 %v4229, %v4249
    %v4294 = vsub.f32 %v4230, %v4252
    %v4295 = vsub.f32 %v4231, %v4255
    %v4296 = vsub.f32 %v4232, %v4258
    %v4297 = vsub.f32 %v4233, %v4261
    %v4298 = vsub.f32 %v4234, %v4264
    %v4299 = vsub.f32 %v4235, %v4267
    %v4300 = vsub.f32 %v4236, %v4270
    %v4301 = vsub.f32 %v4237, %v4273
    %v4302 = vsub.f32 %v4238, %v4276
    %v4303 = vsub.f32 %v4239, %v4279
    %v4304 = vsub.f32 %v4240, %v4282
    %v4305 = vsub.f32 %v4241, %v4285
    %v4306 = vsub.f32 %v4242, %v4288
    %v4307 = vsub.f32 %v4243, %v4291
    %v4308 = vmul.f32 %v4292, 1.442695
    %v4309 = vpow.pop %v4308
    %v4310 = vmul.f32 %v4293, 1.442695
    %v4311 = vpow.pop %v4310
    %v4312 = vmul.f32 %v4294, 1.442695
    %v4313 = vpow.pop %v4312
    %v4314 = vmul.f32 %v4295, 1.442695
    %v4315 = vpow.pop %v4314
    %v4316 = vmul.f32 %v4296, 1.442695
    %v4317 = vpow.pop %v4316
    %v4318 = vmul.f32 %v4297, 1.442695
    %v4319 = vpow.pop %v4318
    %v4320 = vmul.f32 %v4298, 1.442695
    %v4321 = vpow.pop %v4320
    %v4322 = vmul.f32 %v4299, 1.442695
    %v4323 = vpow.pop %v4322
    %v4324 = vmul.f32 %v4300, 1.442695
    %v4325 = vpow.pop %v4324
    %v4326 = vmul.f32 %v4301, 1.442695
    %v4327 = vpow.pop %v4326
    %v4328 = vmul.f32 %v4302, 1.442695
    %v4329 = vpow.pop %v4328
    %v4330 = vmul.f32 %v4303, 1.442695
    %v4331 = vpow.pop %v4330
    %v4332 = vmul.f32 %v4304, 1.442695
    %v4333 = vpow.pop %v4332
    %v4334 = vmul.f32 %v4305, 1.442695
    %v4335 = vpow.pop %v4334
    %v4336 = vmul.f32 %v4306, 1.442695
    %v4337 = vpow.pop %v4336
    %v4338 = vmul.f32 %v4307, 1.442695
    %v4339 = vpow.pop %v4338
    %v4340 = vsel %vm1427, %v4309, 0.0
    %4341 = vadd.xlane.f32.xlu0 %v4340
    %v4342 = vpop.xlane.xlu0 %4341
    %v4343 = vsel %vm1427, %v4311, 0.0
    %4344 = vadd.xlane.f32.xlu0 %v4343
    %v4345 = vpop.xlane.xlu0 %4344
    %v4346 = vsel %vm1427, %v4313, 0.0
    %4347 = vadd.xlane.f32.xlu0 %v4346
    %v4348 = vpop.xlane.xlu0 %4347
    %v4349 = vsel %vm1427, %v4315, 0.0
    %4350 = vadd.xlane.f32.xlu0 %v4349
    %v4351 = vpop.xlane.xlu0 %4350
    %v4352 = vsel %vm1427, %v4317, 0.0
    %4353 = vadd.xlane.f32.xlu0 %v4352
    %v4354 = vpop.xlane.xlu0 %4353
    %v4355 = vsel %vm1427, %v4319, 0.0
    %4356 = vadd.xlane.f32.xlu0 %v4355
    %v4357 = vpop.xlane.xlu0 %4356
    %v4358 = vsel %vm1427, %v4321, 0.0
    %4359 = vadd.xlane.f32.xlu0 %v4358
    %v4360 = vpop.xlane.xlu0 %4359
    %v4361 = vsel %vm1427, %v4323, 0.0
    %4362 = vadd.xlane.f32.xlu0 %v4361
    %v4363 = vpop.xlane.xlu0 %4362
    %v4364 = vsel %vm1427, %v4325, 0.0
    %4365 = vadd.xlane.f32.xlu0 %v4364
    %v4366 = vpop.xlane.xlu0 %4365
    %v4367 = vsel %vm1427, %v4327, 0.0
    %4368 = vadd.xlane.f32.xlu0 %v4367
    %v4369 = vpop.xlane.xlu0 %4368
    %v4370 = vsel %vm1427, %v4329, 0.0
    %4371 = vadd.xlane.f32.xlu0 %v4370
    %v4372 = vpop.xlane.xlu0 %4371
    %v4373 = vsel %vm1427, %v4331, 0.0
    %4374 = vadd.xlane.f32.xlu0 %v4373
    %v4375 = vpop.xlane.xlu0 %4374
    %v4376 = vsel %vm1427, %v4333, 0.0
    %4377 = vadd.xlane.f32.xlu0 %v4376
    %v4378 = vpop.xlane.xlu0 %4377
    %v4379 = vsel %vm1427, %v4335, 0.0
    %4380 = vadd.xlane.f32.xlu0 %v4379
    %v4381 = vpop.xlane.xlu0 %4380
    %v4382 = vsel %vm1427, %v4337, 0.0
    %4383 = vadd.xlane.f32.xlu0 %v4382
    %v4384 = vpop.xlane.xlu0 %4383
    %v4385 = vsel %vm1427, %v4339, 0.0
    %4386 = vadd.xlane.f32.xlu0 %v4385
    %v4387 = vpop.xlane.xlu0 %4386
    %v4388 = vrcp.pop %v4342
    %v4389 = vrcp.pop %v4345
    %v4390 = vrcp.pop %v4348
    %v4391 = vrcp.pop %v4351
    %v4392 = vrcp.pop %v4354
    %v4393 = vrcp.pop %v4357
    %v4394 = vrcp.pop %v4360
    %v4395 = vrcp.pop %v4363
    %v4396 = vrcp.pop %v4366
    %v4397 = vrcp.pop %v4369
    %v4398 = vrcp.pop %v4372
    %v4399 = vrcp.pop %v4375
    %v4400 = vrcp.pop %v4378
    %v4401 = vrcp.pop %v4381
    %v4402 = vrcp.pop %v4384
    %v4403 = vrcp.pop %v4387
    %v4404 = vmul.f32 %v4309, %v4388
    %v4405 = vmul.f32 %v4311, %v4389
    %v4406 = vmul.f32 %v4313, %v4390
    %v4407 = vmul.f32 %v4315, %v4391
    %v4408 = vmul.f32 %v4317, %v4392
    %v4409 = vmul.f32 %v4319, %v4393
    %v4410 = vmul.f32 %v4321, %v4394
    %v4411 = vmul.f32 %v4323, %v4395
    %v4412 = vmul.f32 %v4325, %v4396
    %v4413 = vmul.f32 %v4327, %v4397
    %v4414 = vmul.f32 %v4329, %v4398
    %v4415 = vmul.f32 %v4331, %v4399
    %v4416 = vmul.f32 %v4333, %v4400
    %v4417 = vmul.f32 %v4335, %v4401
    %v4418 = vmul.f32 %v4337, %v4402
    %v4419 = vmul.f32 %v4339, %v4403
    %4420 = vrot.lane.b32.xlu0 %v2974, 64
    %v4421 = vpop.permute.xlu0 %4420
    %v4424 = vsel %vm1427, %v4404, 0
    %4426 = vmatprep.subr.mxu0 0.0
    %4427 = vmatpush1.msra.mxu0 0.0
    %4428 = vmatprep.subr.mxu0 0.0
    %4429 = vmatpush1.msra.mxu0 0.0
    %4430 = vmatprep.subr.mxu0 0.0
    %4431 = vmatpush1.msra.mxu0 0.0
    %4432 = vmatprep.subr.mxu0 0.0
    %4433 = vmatpush1.msra.mxu0 0.0
    %4434 = vmatprep.subr.mxu0 0.0
    %4435 = vmatpush1.msra.mxu0 0.0
    %4436 = vmatprep.subr.mxu0 0.0
    %4437 = vmatpush1.msra.mxu0 0.0
    %4438 = vmatprep.subr.mxu0 0.0
    %4439 = vmatpush1.msra.mxu0 0.0
    %4440 = vmatprep.subr.mxu0 0.0
    %4441 = vmatpush1.msra.mxu0 0.0
    %4442 = vmatprep.subr.mxu0 0.0
    %4443 = vmatpush1.msra.mxu0 0.0
    %4444 = vmatprep.subr.mxu0 0.0
    %4445 = vmatpush1.msra.mxu0 0.0
    %4446 = vmatprep.subr.mxu0 0.0
    %4447 = vmatpush1.msra.mxu0 0.0
    %4448 = vmatprep.subr.mxu0 0.0
    %4449 = vmatpush1.msra.mxu0 0.0
    %4450 = vmatprep.subr.mxu0 0.0
    %4451 = vmatpush1.msra.mxu0 0.0
    %4452 = vmatprep.subr.mxu0 0.0
    %4453 = vmatpush1.msra.mxu0 0.0
    %4454 = vmatprep.subr.mxu0 0.0
    %4455 = vmatpush1.msra.mxu0 0.0
    %4456 = vmatprep.subr.mxu0 0.0
    %4457 = vmatpush1.msra.mxu0 %v4421
    %4458 = vmatprep.subr.mxu0 0.0
    %4459 = vmatpush2.msra.mxu0 0.0
    %4460 = vmatprep.subr.mxu0 0.0
    %4461 = vmatpush2.msra.mxu0 0.0
    %4462 = vmatprep.subr.mxu0 0.0
    %4463 = vmatpush2.msra.mxu0 0.0
    %4464 = vmatprep.subr.mxu0 0.0
    %4465 = vmatpush2.msra.mxu0 0.0
    %4466 = vmatprep.subr.mxu0 0.0
    %4467 = vmatpush2.msra.mxu0 0.0
    %4468 = vmatprep.subr.mxu0 0.0
    %4469 = vmatpush2.msra.mxu0 0.0
    %4470 = vmatprep.subr.mxu0 0.0
    %4471 = vmatpush2.msra.mxu0 0.0
    %4472 = vmatprep.subr.mxu0 0.0
    %4473 = vmatpush2.msra.mxu0 0.0
    %4474 = vmatprep.subr.mxu0 0.0
    %4475 = vmatpush2.msra.mxu0 0.0
    %4476 = vmatprep.subr.mxu0 0.0
    %4477 = vmatpush2.msra.mxu0 0.0
    %4478 = vmatprep.subr.mxu0 0.0
    %4479 = vmatpush2.msra.mxu0 0.0
    %4480 = vmatprep.subr.mxu0 0.0
    %4481 = vmatpush2.msra.mxu0 0.0
    %4482 = vmatprep.subr.mxu0 0.0
    %4483 = vmatpush2.msra.mxu0 0.0
    %4484 = vmatprep.subr.mxu0 0.0
    %4485 = vmatpush2.msra.mxu0 0.0
    %4486 = vmatprep.subr.mxu0 0.0
    %4487 = vmatpush2.msra.mxu0 0.0
    %4488 = vmatprep.subr.mxu0 0.0
    %4489 = vmatpush2.msra.mxu0 0.0
    %4490 = vmatprep.mubr.f32.mxu0 0.0
    %4491 = vmatmul.mubr.f32.gmra.mxu0 %v4424
    %v4492 = vpop.f32.mrf.mxu0
    %v4493 = vadd.f32 0.0, %v4492
    %v4494 = vpop.f32.mrf.mxu0
    %4495 = vdwg.mxu0
    %4496 = vrot.lane.b32.xlu0 %v2984, 64
    %v4497 = vpop.permute.xlu0 %4496
    %v4500 = vsel %vm1427, %v4405, 0
    %4502 = vmatprep.subr.mxu0 0.0
    %4503 = vmatpush1.msra.mxu0 0.0
    %4504 = vmatprep.subr.mxu0 0.0
    %4505 = vmatpush1.msra.mxu0 0.0
    %4506 = vmatprep.subr.mxu0 0.0
    %4507 = vmatpush1.msra.mxu0 0.0
    %4508 = vmatprep.subr.mxu0 0.0
    %4509 = vmatpush1.msra.mxu0 0.0
    %4510 = vmatprep.subr.mxu0 0.0
    %4511 = vmatpush1.msra.mxu0 0.0
    %4512 = vmatprep.subr.mxu0 0.0
    %4513 = vmatpush1.msra.mxu0 0.0
    %4514 = vmatprep.subr.mxu0 0.0
    %4515 = vmatpush1.msra.mxu0 0.0
    %4516 = vmatprep.subr.mxu0 0.0
    %4517 = vmatpush1.msra.mxu0 0.0
    %4518 = vmatprep.subr.mxu0 0.0
    %4519 = vmatpush1.msra.mxu0 0.0
    %4520 = vmatprep.subr.mxu0 0.0
    %4521 = vmatpush1.msra.mxu0 0.0
    %4522 = vmatprep.subr.mxu0 0.0
    %4523 = vmatpush1.msra.mxu0 0.0
    %4524 = vmatprep.subr.mxu0 0.0
    %4525 = vmatpush1.msra.mxu0 0.0
    %4526 = vmatprep.subr.mxu0 0.0
    %4527 = vmatpush1.msra.mxu0 0.0
    %4528 = vmatprep.subr.mxu0 0.0
    %4529 = vmatpush1.msra.mxu0 0.0
    %4530 = vmatprep.subr.mxu0 0.0
    %4531 = vmatpush1.msra.mxu0 0.0
    %4532 = vmatprep.subr.mxu0 0.0
    %4533 = vmatpush1.msra.mxu0 %v4497
    %4534 = vmatprep.subr.mxu0 0.0
    %4535 = vmatpush2.msra.mxu0 0.0
    %4536 = vmatprep.subr.mxu0 0.0
    %4537 = vmatpush2.msra.mxu0 0.0
    %4538 = vmatprep.subr.mxu0 0.0
    %4539 = vmatpush2.msra.mxu0 0.0
    %4540 = vmatprep.subr.mxu0 0.0
    %4541 = vmatpush2.msra.mxu0 0.0
    %4542 = vmatprep.subr.mxu0 0.0
    %4543 = vmatpush2.msra.mxu0 0.0
    %4544 = vmatprep.subr.mxu0 0.0
    %4545 = vmatpush2.msra.mxu0 0.0
    %4546 = vmatprep.subr.mxu0 0.0
    %4547 = vmatpush2.msra.mxu0 0.0
    %4548 = vmatprep.subr.mxu0 0.0
    %4549 = vmatpush2.msra.mxu0 0.0
    %4550 = vmatprep.subr.mxu0 0.0
    %4551 = vmatpush2.msra.mxu0 0.0
    %4552 = vmatprep.subr.mxu0 0.0
    %4553 = vmatpush2.msra.mxu0 0.0
    %4554 = vmatprep.subr.mxu0 0.0
    %4555 = vmatpush2.msra.mxu0 0.0
    %4556 = vmatprep.subr.mxu0 0.0
    %4557 = vmatpush2.msra.mxu0 0.0
    %4558 = vmatprep.subr.mxu0 0.0
    %4559 = vmatpush2.msra.mxu0 0.0
    %4560 = vmatprep.subr.mxu0 0.0
    %4561 = vmatpush2.msra.mxu0 0.0
    %4562 = vmatprep.subr.mxu0 0.0
    %4563 = vmatpush2.msra.mxu0 0.0
    %4564 = vmatprep.subr.mxu0 0.0
    %4565 = vmatpush2.msra.mxu0 0.0
    %4566 = vmatprep.mubr.f32.mxu0 0.0
    %4567 = vmatmul.mubr.f32.gmra.mxu0 %v4500
    %v4568 = vpop.f32.mrf.mxu0
    %v4569 = vadd.f32 0.0, %v4568
    %v4570 = vpop.f32.mrf.mxu0
    %4571 = vdwg.mxu0
    %4572 = vrot.lane.b32.xlu0 %v2986, 64
    %v4573 = vpop.permute.xlu0 %4572
    %v4576 = vsel %vm1427, %v4406, 0
    %4578 = vmatprep.subr.mxu0 0.0
    %4579 = vmatpush1.msra.mxu0 0.0
    %4580 = vmatprep.subr.mxu0 0.0
    %4581 = vmatpush1.msra.mxu0 0.0
    %4582 = vmatprep.subr.mxu0 0.0
    %4583 = vmatpush1.msra.mxu0 0.0
    %4584 = vmatprep.subr.mxu0 0.0
    %4585 = vmatpush1.msra.mxu0 0.0
    %4586 = vmatprep.subr.mxu0 0.0
    %4587 = vmatpush1.msra.mxu0 0.0
    %4588 = vmatprep.subr.mxu0 0.0
    %4589 = vmatpush1.msra.mxu0 0.0
    %4590 = vmatprep.subr.mxu0 0.0
    %4591 = vmatpush1.msra.mxu0 0.0
    %4592 = vmatprep.subr.mxu0 0.0
    %4593 = vmatpush1.msra.mxu0 0.0
    %4594 = vmatprep.subr.mxu0 0.0
    %4595 = vmatpush1.msra.mxu0 0.0
    %4596 = vmatprep.subr.mxu0 0.0
    %4597 = vmatpush1.msra.mxu0 0.0
    %4598 = vmatprep.subr.mxu0 0.0
    %4599 = vmatpush1.msra.mxu0 0.0
    %4600 = vmatprep.subr.mxu0 0.0
    %4601 = vmatpush1.msra.mxu0 0.0
    %4602 = vmatprep.subr.mxu0 0.0
    %4603 = vmatpush1.msra.mxu0 0.0
    %4604 = vmatprep.subr.mxu0 0.0
    %4605 = vmatpush1.msra.mxu0 0.0
    %4606 = vmatprep.subr.mxu0 0.0
    %4607 = vmatpush1.msra.mxu0 0.0
    %4608 = vmatprep.subr.mxu0 0.0
    %4609 = vmatpush1.msra.mxu0 %v4573
    %4610 = vmatprep.subr.mxu0 0.0
    %4611 = vmatpush2.msra.mxu0 0.0
    %4612 = vmatprep.subr.mxu0 0.0
    %4613 = vmatpush2.msra.mxu0 0.0
    %4614 = vmatprep.subr.mxu0 0.0
    %4615 = vmatpush2.msra.mxu0 0.0
    %4616 = vmatprep.subr.mxu0 0.0
    %4617 = vmatpush2.msra.mxu0 0.0
    %4618 = vmatprep.subr.mxu0 0.0
    %4619 = vmatpush2.msra.mxu0 0.0
    %4620 = vmatprep.subr.mxu0 0.0
    %4621 = vmatpush2.msra.mxu0 0.0
    %4622 = vmatprep.subr.mxu0 0.0
    %4623 = vmatpush2.msra.mxu0 0.0
    %4624 = vmatprep.subr.mxu0 0.0
    %4625 = vmatpush2.msra.mxu0 0.0
    %4626 = vmatprep.subr.mxu0 0.0
    %4627 = vmatpush2.msra.mxu0 0.0
    %4628 = vmatprep.subr.mxu0 0.0
    %4629 = vmatpush2.msra.mxu0 0.0
    %4630 = vmatprep.subr.mxu0 0.0
    %4631 = vmatpush2.msra.mxu0 0.0
    %4632 = vmatprep.subr.mxu0 0.0
    %4633 = vmatpush2.msra.mxu0 0.0
    %4634 = vmatprep.subr.mxu0 0.0
    %4635 = vmatpush2.msra.mxu0 0.0
    %4636 = vmatprep.subr.mxu0 0.0
    %4637 = vmatpush2.msra.mxu0 0.0
    %4638 = vmatprep.subr.mxu0 0.0
    %4639 = vmatpush2.msra.mxu0 0.0
    %4640 = vmatprep.subr.mxu0 0.0
    %4641 = vmatpush2.msra.mxu0 0.0
    %4642 = vmatprep.mubr.f32.mxu0 0.0
    %4643 = vmatmul.mubr.f32.gmra.mxu0 %v4576
    %v4644 = vpop.f32.mrf.mxu0
    %v4645 = vadd.f32 0.0, %v4644
    %v4646 = vpop.f32.mrf.mxu0
    %4647 = vdwg.mxu0
    %4648 = vrot.lane.b32.xlu0 %v2988, 64
    %v4649 = vpop.permute.xlu0 %4648
    %v4652 = vsel %vm1427, %v4407, 0
    %4654 = vmatprep.subr.mxu0 0.0
    %4655 = vmatpush1.msra.mxu0 0.0
    %4656 = vmatprep.subr.mxu0 0.0
    %4657 = vmatpush1.msra.mxu0 0.0
    %4658 = vmatprep.subr.mxu0 0.0
    %4659 = vmatpush1.msra.mxu0 0.0
    %4660 = vmatprep.subr.mxu0 0.0
    %4661 = vmatpush1.msra.mxu0 0.0
    %4662 = vmatprep.subr.mxu0 0.0
    %4663 = vmatpush1.msra.mxu0 0.0
    %4664 = vmatprep.subr.mxu0 0.0
    %4665 = vmatpush1.msra.mxu0 0.0
    %4666 = vmatprep.subr.mxu0 0.0
    %4667 = vmatpush1.msra.mxu0 0.0
    %4668 = vmatprep.subr.mxu0 0.0
    %4669 = vmatpush1.msra.mxu0 0.0
    %4670 = vmatprep.subr.mxu0 0.0
    %4671 = vmatpush1.msra.mxu0 0.0
    %4672 = vmatprep.subr.mxu0 0.0
    %4673 = vmatpush1.msra.mxu0 0.0
    %4674 = vmatprep.subr.mxu0 0.0
    %4675 = vmatpush1.msra.mxu0 0.0
    %4676 = vmatprep.subr.mxu0 0.0
    %4677 = vmatpush1.msra.mxu0 0.0
    %4678 = vmatprep.subr.mxu0 0.0
    %4679 = vmatpush1.msra.mxu0 0.0
    %4680 = vmatprep.subr.mxu0 0.0
    %4681 = vmatpush1.msra.mxu0 0.0
    %4682 = vmatprep.subr.mxu0 0.0
    %4683 = vmatpush1.msra.mxu0 0.0
    %4684 = vmatprep.subr.mxu0 0.0
    %4685 = vmatpush1.msra.mxu0 %v4649
    %4686 = vmatprep.subr.mxu0 0.0
    %4687 = vmatpush2.msra.mxu0 0.0
    %4688 = vmatprep.subr.mxu0 0.0
    %4689 = vmatpush2.msra.mxu0 0.0
    %4690 = vmatprep.subr.mxu0 0.0
    %4691 = vmatpush2.msra.mxu0 0.0
    %4692 = vmatprep.subr.mxu0 0.0
    %4693 = vmatpush2.msra.mxu0 0.0
    %4694 = vmatprep.subr.mxu0 0.0
    %4695 = vmatpush2.msra.mxu0 0.0
    %4696 = vmatprep.subr.mxu0 0.0
    %4697 = vmatpush2.msra.mxu0 0.0
    %4698 = vmatprep.subr.mxu0 0.0
    %4699 = vmatpush2.msra.mxu0 0.0
    %4700 = vmatprep.subr.mxu0 0.0
    %4701 = vmatpush2.msra.mxu0 0.0
    %4702 = vmatprep.subr.mxu0 0.0
    %4703 = vmatpush2.msra.mxu0 0.0
    %4704 = vmatprep.subr.mxu0 0.0
    %4705 = vmatpush2.msra.mxu0 0.0
    %4706 = vmatprep.subr.mxu0 0.0
    %4707 = vmatpush2.msra.mxu0 0.0
    %4708 = vmatprep.subr.mxu0 0.0
    %4709 = vmatpush2.msra.mxu0 0.0
    %4710 = vmatprep.subr.mxu0 0.0
    %4711 = vmatpush2.msra.mxu0 0.0
    %4712 = vmatprep.subr.mxu0 0.0
    %4713 = vmatpush2.msra.mxu0 0.0
    %4714 = vmatprep.subr.mxu0 0.0
    %4715 = vmatpush2.msra.mxu0 0.0
    %4716 = vmatprep.subr.mxu0 0.0
    %4717 = vmatpush2.msra.mxu0 0.0
    %4718 = vmatprep.mubr.f32.mxu0 0.0
    %4719 = vmatmul.mubr.f32.gmra.mxu0 %v4652
    %v4720 = vpop.f32.mrf.mxu0
    %v4721 = vadd.f32 0.0, %v4720
    %v4722 = vpop.f32.mrf.mxu0
    %4723 = vdwg.mxu0
    %4724 = vrot.lane.b32.xlu0 %v2990, 64
    %v4725 = vpop.permute.xlu0 %4724
    %v4728 = vsel %vm1427, %v4408, 0
    %4730 = vmatprep.subr.mxu0 0.0
    %4731 = vmatpush1.msra.mxu0 0.0
    %4732 = vmatprep.subr.mxu0 0.0
    %4733 = vmatpush1.msra.mxu0 0.0
    %4734 = vmatprep.subr.mxu0 0.0
    %4735 = vmatpush1.msra.mxu0 0.0
    %4736 = vmatprep.subr.mxu0 0.0
    %4737 = vmatpush1.msra.mxu0 0.0
    %4738 = vmatprep.subr.mxu0 0.0
    %4739 = vmatpush1.msra.mxu0 0.0
    %4740 = vmatprep.subr.mxu0 0.0
    %4741 = vmatpush1.msra.mxu0 0.0
    %4742 = vmatprep.subr.mxu0 0.0
    %4743 = vmatpush1.msra.mxu0 0.0
    %4744 = vmatprep.subr.mxu0 0.0
    %4745 = vmatpush1.msra.mxu0 0.0
    %4746 = vmatprep.subr.mxu0 0.0
    %4747 = vmatpush1.msra.mxu0 0.0
    %4748 = vmatprep.subr.mxu0 0.0
    %4749 = vmatpush1.msra.mxu0 0.0
    %4750 = vmatprep.subr.mxu0 0.0
    %4751 = vmatpush1.msra.mxu0 0.0
    %4752 = vmatprep.subr.mxu0 0.0
    %4753 = vmatpush1.msra.mxu0 0.0
    %4754 = vmatprep.subr.mxu0 0.0
    %4755 = vmatpush1.msra.mxu0 0.0
    %4756 = vmatprep.subr.mxu0 0.0
    %4757 = vmatpush1.msra.mxu0 0.0
    %4758 = vmatprep.subr.mxu0 0.0
    %4759 = vmatpush1.msra.mxu0 0.0
    %4760 = vmatprep.subr.mxu0 0.0
    %4761 = vmatpush1.msra.mxu0 %v4725
    %4762 = vmatprep.subr.mxu0 0.0
    %4763 = vmatpush2.msra.mxu0 0.0
    %4764 = vmatprep.subr.mxu0 0.0
    %4765 = vmatpush2.msra.mxu0 0.0
    %4766 = vmatprep.subr.mxu0 0.0
    %4767 = vmatpush2.msra.mxu0 0.0
    %4768 = vmatprep.subr.mxu0 0.0
    %4769 = vmatpush2.msra.mxu0 0.0
    %4770 = vmatprep.subr.mxu0 0.0
    %4771 = vmatpush2.msra.mxu0 0.0
    %4772 = vmatprep.subr.mxu0 0.0
    %4773 = vmatpush2.msra.mxu0 0.0
    %4774 = vmatprep.subr.mxu0 0.0
    %4775 = vmatpush2.msra.mxu0 0.0
    %4776 = vmatprep.subr.mxu0 0.0
    %4777 = vmatpush2.msra.mxu0 0.0
    %4778 = vmatprep.subr.mxu0 0.0
    %4779 = vmatpush2.msra.mxu0 0.0
    %4780 = vmatprep.subr.mxu0 0.0
    %4781 = vmatpush2.msra.mxu0 0.0
    %4782 = vmatprep.subr.mxu0 0.0
    %4783 = vmatpush2.msra.mxu0 0.0
    %4784 = vmatprep.subr.mxu0 0.0
    %4785 = vmatpush2.msra.mxu0 0.0
    %4786 = vmatprep.subr.mxu0 0.0
    %4787 = vmatpush2.msra.mxu0 0.0
    %4788 = vmatprep.subr.mxu0 0.0
    %4789 = vmatpush2.msra.mxu0 0.0
    %4790 = vmatprep.subr.mxu0 0.0
    %4791 = vmatpush2.msra.mxu0 0.0
    %4792 = vmatprep.subr.mxu0 0.0
    %4793 = vmatpush2.msra.mxu0 0.0
    %4794 = vmatprep.mubr.f32.mxu0 0.0
    %4795 = vmatmul.mubr.f32.gmra.mxu0 %v4728
    %v4796 = vpop.f32.mrf.mxu0
    %v4797 = vadd.f32 0.0, %v4796
    %v4798 = vpop.f32.mrf.mxu0
    %4799 = vdwg.mxu0
    %4800 = vrot.lane.b32.xlu0 %v2992, 64
    %v4801 = vpop.permute.xlu0 %4800
    %v4804 = vsel %vm1427, %v4409, 0
    %4806 = vmatprep.subr.mxu0 0.0
    %4807 = vmatpush1.msra.mxu0 0.0
    %4808 = vmatprep.subr.mxu0 0.0
    %4809 = vmatpush1.msra.mxu0 0.0
    %4810 = vmatprep.subr.mxu0 0.0
    %4811 = vmatpush1.msra.mxu0 0.0
    %4812 = vmatprep.subr.mxu0 0.0
    %4813 = vmatpush1.msra.mxu0 0.0
    %4814 = vmatprep.subr.mxu0 0.0
    %4815 = vmatpush1.msra.mxu0 0.0
    %4816 = vmatprep.subr.mxu0 0.0
    %4817 = vmatpush1.msra.mxu0 0.0
    %4818 = vmatprep.subr.mxu0 0.0
    %4819 = vmatpush1.msra.mxu0 0.0
    %4820 = vmatprep.subr.mxu0 0.0
    %4821 = vmatpush1.msra.mxu0 0.0
    %4822 = vmatprep.subr.mxu0 0.0
    %4823 = vmatpush1.msra.mxu0 0.0
    %4824 = vmatprep.subr.mxu0 0.0
    %4825 = vmatpush1.msra.mxu0 0.0
    %4826 = vmatprep.subr.mxu0 0.0
    %4827 = vmatpush1.msra.mxu0 0.0
    %4828 = vmatprep.subr.mxu0 0.0
    %4829 = vmatpush1.msra.mxu0 0.0
    %4830 = vmatprep.subr.mxu0 0.0
    %4831 = vmatpush1.msra.mxu0 0.0
    %4832 = vmatprep.subr.mxu0 0.0
    %4833 = vmatpush1.msra.mxu0 0.0
    %4834 = vmatprep.subr.mxu0 0.0
    %4835 = vmatpush1.msra.mxu0 0.0
    %4836 = vmatprep.subr.mxu0 0.0
    %4837 = vmatpush1.msra.mxu0 %v4801
    %4838 = vmatprep.subr.mxu0 0.0
    %4839 = vmatpush2.msra.mxu0 0.0
    %4840 = vmatprep.subr.mxu0 0.0
    %4841 = vmatpush2.msra.mxu0 0.0
    %4842 = vmatprep.subr.mxu0 0.0
    %4843 = vmatpush2.msra.mxu0 0.0
    %4844 = vmatprep.subr.mxu0 0.0
    %4845 = vmatpush2.msra.mxu0 0.0
    %4846 = vmatprep.subr.mxu0 0.0
    %4847 = vmatpush2.msra.mxu0 0.0
    %4848 = vmatprep.subr.mxu0 0.0
    %4849 = vmatpush2.msra.mxu0 0.0
    %4850 = vmatprep.subr.mxu0 0.0
    %4851 = vmatpush2.msra.mxu0 0.0
    %4852 = vmatprep.subr.mxu0 0.0
    %4853 = vmatpush2.msra.mxu0 0.0
    %4854 = vmatprep.subr.mxu0 0.0
    %4855 = vmatpush2.msra.mxu0 0.0
    %4856 = vmatprep.subr.mxu0 0.0
    %4857 = vmatpush2.msra.mxu0 0.0
    %4858 = vmatprep.subr.mxu0 0.0
    %4859 = vmatpush2.msra.mxu0 0.0
    %4860 = vmatprep.subr.mxu0 0.0
    %4861 = vmatpush2.msra.mxu0 0.0
    %4862 = vmatprep.subr.mxu0 0.0
    %4863 = vmatpush2.msra.mxu0 0.0
    %4864 = vmatprep.subr.mxu0 0.0
    %4865 = vmatpush2.msra.mxu0 0.0
    %4866 = vmatprep.subr.mxu0 0.0
    %4867 = vmatpush2.msra.mxu0 0.0
    %4868 = vmatprep.subr.mxu0 0.0
    %4869 = vmatpush2.msra.mxu0 0.0
    %4870 = vmatprep.mubr.f32.mxu0 0.0
    %4871 = vmatmul.mubr.f32.gmra.mxu0 %v4804
    %v4872 = vpop.f32.mrf.mxu0
    %v4873 = vadd.f32 0.0, %v4872
    %v4874 = vpop.f32.mrf.mxu0
    %4875 = vdwg.mxu0
    %4876 = vrot.lane.b32.xlu0 %v2994, 64
    %v4877 = vpop.permute.xlu0 %4876
    %v4880 = vsel %vm1427, %v4410, 0
    %4882 = vmatprep.subr.mxu0 0.0
    %4883 = vmatpush1.msra.mxu0 0.0
    %4884 = vmatprep.subr.mxu0 0.0
    %4885 = vmatpush1.msra.mxu0 0.0
    %4886 = vmatprep.subr.mxu0 0.0
    %4887 = vmatpush1.msra.mxu0 0.0
    %4888 = vmatprep.subr.mxu0 0.0
    %4889 = vmatpush1.msra.mxu0 0.0
    %4890 = vmatprep.subr.mxu0 0.0
    %4891 = vmatpush1.msra.mxu0 0.0
    %4892 = vmatprep.subr.mxu0 0.0
    %4893 = vmatpush1.msra.mxu0 0.0
    %4894 = vmatprep.subr.mxu0 0.0
    %4895 = vmatpush1.msra.mxu0 0.0
    %4896 = vmatprep.subr.mxu0 0.0
    %4897 = vmatpush1.msra.mxu0 0.0
    %4898 = vmatprep.subr.mxu0 0.0
    %4899 = vmatpush1.msra.mxu0 0.0
    %4900 = vmatprep.subr.mxu0 0.0
    %4901 = vmatpush1.msra.mxu0 0.0
    %4902 = vmatprep.subr.mxu0 0.0
    %4903 = vmatpush1.msra.mxu0 0.0
    %4904 = vmatprep.subr.mxu0 0.0
    %4905 = vmatpush1.msra.mxu0 0.0
    %4906 = vmatprep.subr.mxu0 0.0
    %4907 = vmatpush1.msra.mxu0 0.0
    %4908 = vmatprep.subr.mxu0 0.0
    %4909 = vmatpush1.msra.mxu0 0.0
    %4910 = vmatprep.subr.mxu0 0.0
    %4911 = vmatpush1.msra.mxu0 0.0
    %4912 = vmatprep.subr.mxu0 0.0
    %4913 = vmatpush1.msra.mxu0 %v4877
    %4914 = vmatprep.subr.mxu0 0.0
    %4915 = vmatpush2.msra.mxu0 0.0
    %4916 = vmatprep.subr.mxu0 0.0
    %4917 = vmatpush2.msra.mxu0 0.0
    %4918 = vmatprep.subr.mxu0 0.0
    %4919 = vmatpush2.msra.mxu0 0.0
    %4920 = vmatprep.subr.mxu0 0.0
    %4921 = vmatpush2.msra.mxu0 0.0
    %4922 = vmatprep.subr.mxu0 0.0
    %4923 = vmatpush2.msra.mxu0 0.0
    %4924 = vmatprep.subr.mxu0 0.0
    %4925 = vmatpush2.msra.mxu0 0.0
    %4926 = vmatprep.subr.mxu0 0.0
    %4927 = vmatpush2.msra.mxu0 0.0
    %4928 = vmatprep.subr.mxu0 0.0
    %4929 = vmatpush2.msra.mxu0 0.0
    %4930 = vmatprep.subr.mxu0 0.0
    %4931 = vmatpush2.msra.mxu0 0.0
    %4932 = vmatprep.subr.mxu0 0.0
    %4933 = vmatpush2.msra.mxu0 0.0
    %4934 = vmatprep.subr.mxu0 0.0
    %4935 = vmatpush2.msra.mxu0 0.0
    %4936 = vmatprep.subr.mxu0 0.0
    %4937 = vmatpush2.msra.mxu0 0.0
    %4938 = vmatprep.subr.mxu0 0.0
    %4939 = vmatpush2.msra.mxu0 0.0
    %4940 = vmatprep.subr.mxu0 0.0
    %4941 = vmatpush2.msra.mxu0 0.0
    %4942 = vmatprep.subr.mxu0 0.0
    %4943 = vmatpush2.msra.mxu0 0.0
    %4944 = vmatprep.subr.mxu0 0.0
    %4945 = vmatpush2.msra.mxu0 0.0
    %4946 = vmatprep.mubr.f32.mxu0 0.0
    %4947 = vmatmul.mubr.f32.gmra.mxu0 %v4880
    %v4948 = vpop.f32.mrf.mxu0
    %v4949 = vadd.f32 0.0, %v4948
    %v4950 = vpop.f32.mrf.mxu0
    %4951 = vdwg.mxu0
    %4952 = vrot.lane.b32.xlu0 %v2996, 64
    %v4953 = vpop.permute.xlu0 %4952
    %v4956 = vsel %vm1427, %v4411, 0
    %4958 = vmatprep.subr.mxu0 0.0
    %4959 = vmatpush1.msra.mxu0 0.0
    %4960 = vmatprep.subr.mxu0 0.0
    %4961 = vmatpush1.msra.mxu0 0.0
    %4962 = vmatprep.subr.mxu0 0.0
    %4963 = vmatpush1.msra.mxu0 0.0
    %4964 = vmatprep.subr.mxu0 0.0
    %4965 = vmatpush1.msra.mxu0 0.0
    %4966 = vmatprep.subr.mxu0 0.0
    %4967 = vmatpush1.msra.mxu0 0.0
    %4968 = vmatprep.subr.mxu0 0.0
    %4969 = vmatpush1.msra.mxu0 0.0
    %4970 = vmatprep.subr.mxu0 0.0
    %4971 = vmatpush1.msra.mxu0 0.0
    %4972 = vmatprep.subr.mxu0 0.0
    %4973 = vmatpush1.msra.mxu0 0.0
    %4974 = vmatprep.subr.mxu0 0.0
    %4975 = vmatpush1.msra.mxu0 0.0
    %4976 = vmatprep.subr.mxu0 0.0
    %4977 = vmatpush1.msra.mxu0 0.0
    %4978 = vmatprep.subr.mxu0 0.0
    %4979 = vmatpush1.msra.mxu0 0.0
    %4980 = vmatprep.subr.mxu0 0.0
    %4981 = vmatpush1.msra.mxu0 0.0
    %4982 = vmatprep.subr.mxu0 0.0
    %4983 = vmatpush1.msra.mxu0 0.0
    %4984 = vmatprep.subr.mxu0 0.0
    %4985 = vmatpush1.msra.mxu0 0.0
    %4986 = vmatprep.subr.mxu0 0.0
    %4987 = vmatpush1.msra.mxu0 0.0
    %4988 = vmatprep.subr.mxu0 0.0
    %4989 = vmatpush1.msra.mxu0 %v4953
    %4990 = vmatprep.subr.mxu0 0.0
    %4991 = vmatpush2.msra.mxu0 0.0
    %4992 = vmatprep.subr.mxu0 0.0
    %4993 = vmatpush2.msra.mxu0 0.0
    %4994 = vmatprep.subr.mxu0 0.0
    %4995 = vmatpush2.msra.mxu0 0.0
    %4996 = vmatprep.subr.mxu0 0.0
    %4997 = vmatpush2.msra.mxu0 0.0
    %4998 = vmatprep.subr.mxu0 0.0
    %4999 = vmatpush2.msra.mxu0 0.0
    %5000 = vmatprep.subr.mxu0 0.0
    %5001 = vmatpush2.msra.mxu0 0.0
    %5002 = vmatprep.subr.mxu0 0.0
    %5003 = vmatpush2.msra.mxu0 0.0
    %5004 = vmatprep.subr.mxu0 0.0
    %5005 = vmatpush2.msra.mxu0 0.0
    %5006 = vmatprep.subr.mxu0 0.0
    %5007 = vmatpush2.msra.mxu0 0.0
    %5008 = vmatprep.subr.mxu0 0.0
    %5009 = vmatpush2.msra.mxu0 0.0
    %5010 = vmatprep.subr.mxu0 0.0
    %5011 = vmatpush2.msra.mxu0 0.0
    %5012 = vmatprep.subr.mxu0 0.0
    %5013 = vmatpush2.msra.mxu0 0.0
    %5014 = vmatprep.subr.mxu0 0.0
    %5015 = vmatpush2.msra.mxu0 0.0
    %5016 = vmatprep.subr.mxu0 0.0
    %5017 = vmatpush2.msra.mxu0 0.0
    %5018 = vmatprep.subr.mxu0 0.0
    %5019 = vmatpush2.msra.mxu0 0.0
    %5020 = vmatprep.subr.mxu0 0.0
    %5021 = vmatpush2.msra.mxu0 0.0
    %5022 = vmatprep.mubr.f32.mxu0 0.0
    %5023 = vmatmul.mubr.f32.gmra.mxu0 %v4956
    %v5024 = vpop.f32.mrf.mxu0
    %v5025 = vadd.f32 0.0, %v5024
    %v5026 = vpop.f32.mrf.mxu0
    %5027 = vdwg.mxu0
    %5028 = vrot.lane.b32.xlu0 %v2979, 64
    %v5029 = vpop.permute.xlu0 %5028
    %v5032 = vsel %vm1427, %v4412, 0
    %5034 = vmatprep.subr.mxu0 0.0
    %5035 = vmatpush1.msra.mxu0 0.0
    %5036 = vmatprep.subr.mxu0 0.0
    %5037 = vmatpush1.msra.mxu0 0.0
    %5038 = vmatprep.subr.mxu0 0.0
    %5039 = vmatpush1.msra.mxu0 0.0
    %5040 = vmatprep.subr.mxu0 0.0
    %5041 = vmatpush1.msra.mxu0 0.0
    %5042 = vmatprep.subr.mxu0 0.0
    %5043 = vmatpush1.msra.mxu0 0.0
    %5044 = vmatprep.subr.mxu0 0.0
    %5045 = vmatpush1.msra.mxu0 0.0
    %5046 = vmatprep.subr.mxu0 0.0
    %5047 = vmatpush1.msra.mxu0 0.0
    %5048 = vmatprep.subr.mxu0 0.0
    %5049 = vmatpush1.msra.mxu0 0.0
    %5050 = vmatprep.subr.mxu0 0.0
    %5051 = vmatpush1.msra.mxu0 0.0
    %5052 = vmatprep.subr.mxu0 0.0
    %5053 = vmatpush1.msra.mxu0 0.0
    %5054 = vmatprep.subr.mxu0 0.0
    %5055 = vmatpush1.msra.mxu0 0.0
    %5056 = vmatprep.subr.mxu0 0.0
    %5057 = vmatpush1.msra.mxu0 0.0
    %5058 = vmatprep.subr.mxu0 0.0
    %5059 = vmatpush1.msra.mxu0 0.0
    %5060 = vmatprep.subr.mxu0 0.0
    %5061 = vmatpush1.msra.mxu0 0.0
    %5062 = vmatprep.subr.mxu0 0.0
    %5063 = vmatpush1.msra.mxu0 0.0
    %5064 = vmatprep.subr.mxu0 0.0
    %5065 = vmatpush1.msra.mxu0 %v5029
    %5066 = vmatprep.subr.mxu0 0.0
    %5067 = vmatpush2.msra.mxu0 0.0
    %5068 = vmatprep.subr.mxu0 0.0
    %5069 = vmatpush2.msra.mxu0 0.0
    %5070 = vmatprep.subr.mxu0 0.0
    %5071 = vmatpush2.msra.mxu0 0.0
    %5072 = vmatprep.subr.mxu0 0.0
    %5073 = vmatpush2.msra.mxu0 0.0
    %5074 = vmatprep.subr.mxu0 0.0
    %5075 = vmatpush2.msra.mxu0 0.0
    %5076 = vmatprep.subr.mxu0 0.0
    %5077 = vmatpush2.msra.mxu0 0.0
    %5078 = vmatprep.subr.mxu0 0.0
    %5079 = vmatpush2.msra.mxu0 0.0
    %5080 = vmatprep.subr.mxu0 0.0
    %5081 = vmatpush2.msra.mxu0 0.0
    %5082 = vmatprep.subr.mxu0 0.0
    %5083 = vmatpush2.msra.mxu0 0.0
    %5084 = vmatprep.subr.mxu0 0.0
    %5085 = vmatpush2.msra.mxu0 0.0
    %5086 = vmatprep.subr.mxu0 0.0
    %5087 = vmatpush2.msra.mxu0 0.0
    %5088 = vmatprep.subr.mxu0 0.0
    %5089 = vmatpush2.msra.mxu0 0.0
    %5090 = vmatprep.subr.mxu0 0.0
    %5091 = vmatpush2.msra.mxu0 0.0
    %5092 = vmatprep.subr.mxu0 0.0
    %5093 = vmatpush2.msra.mxu0 0.0
    %5094 = vmatprep.subr.mxu0 0.0
    %5095 = vmatpush2.msra.mxu0 0.0
    %5096 = vmatprep.subr.mxu0 0.0
    %5097 = vmatpush2.msra.mxu0 0.0
    %5098 = vmatprep.mubr.f32.mxu0 0.0
    %5099 = vmatmul.mubr.f32.gmra.mxu0 %v5032
    %v5100 = vpop.f32.mrf.mxu0
    %v5101 = vadd.f32 0.0, %v5100
    %v5102 = vpop.f32.mrf.mxu0
    %5103 = vdwg.mxu0
    %5104 = vrot.lane.b32.xlu0 %v2999, 64
    %v5105 = vpop.permute.xlu0 %5104
    %v5108 = vsel %vm1427, %v4413, 0
    %5110 = vmatprep.subr.mxu0 0.0
    %5111 = vmatpush1.msra.mxu0 0.0
    %5112 = vmatprep.subr.mxu0 0.0
    %5113 = vmatpush1.msra.mxu0 0.0
    %5114 = vmatprep.subr.mxu0 0.0
    %5115 = vmatpush1.msra.mxu0 0.0
    %5116 = vmatprep.subr.mxu0 0.0
    %5117 = vmatpush1.msra.mxu0 0.0
    %5118 = vmatprep.subr.mxu0 0.0
    %5119 = vmatpush1.msra.mxu0 0.0
    %5120 = vmatprep.subr.mxu0 0.0
    %5121 = vmatpush1.msra.mxu0 0.0
    %5122 = vmatprep.subr.mxu0 0.0
    %5123 = vmatpush1.msra.mxu0 0.0
    %5124 = vmatprep.subr.mxu0 0.0
    %5125 = vmatpush1.msra.mxu0 0.0
    %5126 = vmatprep.subr.mxu0 0.0
    %5127 = vmatpush1.msra.mxu0 0.0
    %5128 = vmatprep.subr.mxu0 0.0
    %5129 = vmatpush1.msra.mxu0 0.0
    %5130 = vmatprep.subr.mxu0 0.0
    %5131 = vmatpush1.msra.mxu0 0.0
    %5132 = vmatprep.subr.mxu0 0.0
    %5133 = vmatpush1.msra.mxu0 0.0
    %5134 = vmatprep.subr.mxu0 0.0
    %5135 = vmatpush1.msra.mxu0 0.0
    %5136 = vmatprep.subr.mxu0 0.0
    %5137 = vmatpush1.msra.mxu0 0.0
    %5138 = vmatprep.subr.mxu0 0.0
    %5139 = vmatpush1.msra.mxu0 0.0
    %5140 = vmatprep.subr.mxu0 0.0
    %5141 = vmatpush1.msra.mxu0 %v5105
    %5142 = vmatprep.subr.mxu0 0.0
    %5143 = vmatpush2.msra.mxu0 0.0
    %5144 = vmatprep.subr.mxu0 0.0
    %5145 = vmatpush2.msra.mxu0 0.0
    %5146 = vmatprep.subr.mxu0 0.0
    %5147 = vmatpush2.msra.mxu0 0.0
    %5148 = vmatprep.subr.mxu0 0.0
    %5149 = vmatpush2.msra.mxu0 0.0
    %5150 = vmatprep.subr.mxu0 0.0
    %5151 = vmatpush2.msra.mxu0 0.0
    %5152 = vmatprep.subr.mxu0 0.0
    %5153 = vmatpush2.msra.mxu0 0.0
    %5154 = vmatprep.subr.mxu0 0.0
    %5155 = vmatpush2.msra.mxu0 0.0
    %5156 = vmatprep.subr.mxu0 0.0
    %5157 = vmatpush2.msra.mxu0 0.0
    %5158 = vmatprep.subr.mxu0 0.0
    %5159 = vmatpush2.msra.mxu0 0.0
    %5160 = vmatprep.subr.mxu0 0.0
    %5161 = vmatpush2.msra.mxu0 0.0
    %5162 = vmatprep.subr.mxu0 0.0
    %5163 = vmatpush2.msra.mxu0 0.0
    %5164 = vmatprep.subr.mxu0 0.0
    %5165 = vmatpush2.msra.mxu0 0.0
    %5166 = vmatprep.subr.mxu0 0.0
    %5167 = vmatpush2.msra.mxu0 0.0
    %5168 = vmatprep.subr.mxu0 0.0
    %5169 = vmatpush2.msra.mxu0 0.0
    %5170 = vmatprep.subr.mxu0 0.0
    %5171 = vmatpush2.msra.mxu0 0.0
    %5172 = vmatprep.subr.mxu0 0.0
    %5173 = vmatpush2.msra.mxu0 0.0
    %5174 = vmatprep.mubr.f32.mxu0 0.0
    %5175 = vmatmul.mubr.f32.gmra.mxu0 %v5108
    %v5176 = vpop.f32.mrf.mxu0
    %v5177 = vadd.f32 0.0, %v5176
    %v5178 = vpop.f32.mrf.mxu0
    %5179 = vdwg.mxu0
    %5180 = vrot.lane.b32.xlu0 %v3001, 64
    %v5181 = vpop.permute.xlu0 %5180
    %v5184 = vsel %vm1427, %v4414, 0
    %5186 = vmatprep.subr.mxu0 0.0
    %5187 = vmatpush1.msra.mxu0 0.0
    %5188 = vmatprep.subr.mxu0 0.0
    %5189 = vmatpush1.msra.mxu0 0.0
    %5190 = vmatprep.subr.mxu0 0.0
    %5191 = vmatpush1.msra.mxu0 0.0
    %5192 = vmatprep.subr.mxu0 0.0
    %5193 = vmatpush1.msra.mxu0 0.0
    %5194 = vmatprep.subr.mxu0 0.0
    %5195 = vmatpush1.msra.mxu0 0.0
    %5196 = vmatprep.subr.mxu0 0.0
    %5197 = vmatpush1.msra.mxu0 0.0
    %5198 = vmatprep.subr.mxu0 0.0
    %5199 = vmatpush1.msra.mxu0 0.0
    %5200 = vmatprep.subr.mxu0 0.0
    %5201 = vmatpush1.msra.mxu0 0.0
    %5202 = vmatprep.subr.mxu0 0.0
    %5203 = vmatpush1.msra.mxu0 0.0
    %5204 = vmatprep.subr.mxu0 0.0
    %5205 = vmatpush1.msra.mxu0 0.0
    %5206 = vmatprep.subr.mxu0 0.0
    %5207 = vmatpush1.msra.mxu0 0.0
    %5208 = vmatprep.subr.mxu0 0.0
    %5209 = vmatpush1.msra.mxu0 0.0
    %5210 = vmatprep.subr.mxu0 0.0
    %5211 = vmatpush1.msra.mxu0 0.0
    %5212 = vmatprep.subr.mxu0 0.0
    %5213 = vmatpush1.msra.mxu0 0.0
    %5214 = vmatprep.subr.mxu0 0.0
    %5215 = vmatpush1.msra.mxu0 0.0
    %5216 = vmatprep.subr.mxu0 0.0
    %5217 = vmatpush1.msra.mxu0 %v5181
    %5218 = vmatprep.subr.mxu0 0.0
    %5219 = vmatpush2.msra.mxu0 0.0
    %5220 = vmatprep.subr.mxu0 0.0
    %5221 = vmatpush2.msra.mxu0 0.0
    %5222 = vmatprep.subr.mxu0 0.0
    %5223 = vmatpush2.msra.mxu0 0.0
    %5224 = vmatprep.subr.mxu0 0.0
    %5225 = vmatpush2.msra.mxu0 0.0
    %5226 = vmatprep.subr.mxu0 0.0
    %5227 = vmatpush2.msra.mxu0 0.0
    %5228 = vmatprep.subr.mxu0 0.0
    %5229 = vmatpush2.msra.mxu0 0.0
    %5230 = vmatprep.subr.mxu0 0.0
    %5231 = vmatpush2.msra.mxu0 0.0
    %5232 = vmatprep.subr.mxu0 0.0
    %5233 = vmatpush2.msra.mxu0 0.0
    %5234 = vmatprep.subr.mxu0 0.0
    %5235 = vmatpush2.msra.mxu0 0.0
    %5236 = vmatprep.subr.mxu0 0.0
    %5237 = vmatpush2.msra.mxu0 0.0
    %5238 = vmatprep.subr.mxu0 0.0
    %5239 = vmatpush2.msra.mxu0 0.0
    %5240 = vmatprep.subr.mxu0 0.0
    %5241 = vmatpush2.msra.mxu0 0.0
    %5242 = vmatprep.subr.mxu0 0.0
    %5243 = vmatpush2.msra.mxu0 0.0
    %5244 = vmatprep.subr.mxu0 0.0
    %5245 = vmatpush2.msra.mxu0 0.0
    %5246 = vmatprep.subr.mxu0 0.0
    %5247 = vmatpush2.msra.mxu0 0.0
    %5248 = vmatprep.subr.mxu0 0.0
    %5249 = vmatpush2.msra.mxu0 0.0
    %5250 = vmatprep.mubr.f32.mxu0 0.0
    %5251 = vmatmul.mubr.f32.gmra.mxu0 %v5184
    %v5252 = vpop.f32.mrf.mxu0
    %v5253 = vadd.f32 0.0, %v5252
    %v5254 = vpop.f32.mrf.mxu0
    %5255 = vdwg.mxu0
    %5256 = vrot.lane.b32.xlu0 %v3003, 64
    %v5257 = vpop.permute.xlu0 %5256
    %v5260 = vsel %vm1427, %v4415, 0
    %5262 = vmatprep.subr.mxu0 0.0
    %5263 = vmatpush1.msra.mxu0 0.0
    %5264 = vmatprep.subr.mxu0 0.0
    %5265 = vmatpush1.msra.mxu0 0.0
    %5266 = vmatprep.subr.mxu0 0.0
    %5267 = vmatpush1.msra.mxu0 0.0
    %5268 = vmatprep.subr.mxu0 0.0
    %5269 = vmatpush1.msra.mxu0 0.0
    %5270 = vmatprep.subr.mxu0 0.0
    %5271 = vmatpush1.msra.mxu0 0.0
    %5272 = vmatprep.subr.mxu0 0.0
    %5273 = vmatpush1.msra.mxu0 0.0
    %5274 = vmatprep.subr.mxu0 0.0
    %5275 = vmatpush1.msra.mxu0 0.0
    %5276 = vmatprep.subr.mxu0 0.0
    %5277 = vmatpush1.msra.mxu0 0.0
    %5278 = vmatprep.subr.mxu0 0.0
    %5279 = vmatpush1.msra.mxu0 0.0
    %5280 = vmatprep.subr.mxu0 0.0
    %5281 = vmatpush1.msra.mxu0 0.0
    %5282 = vmatprep.subr.mxu0 0.0
    %5283 = vmatpush1.msra.mxu0 0.0
    %5284 = vmatprep.subr.mxu0 0.0
    %5285 = vmatpush1.msra.mxu0 0.0
    %5286 = vmatprep.subr.mxu0 0.0
    %5287 = vmatpush1.msra.mxu0 0.0
    %5288 = vmatprep.subr.mxu0 0.0
    %5289 = vmatpush1.msra.mxu0 0.0
    %5290 = vmatprep.subr.mxu0 0.0
    %5291 = vmatpush1.msra.mxu0 0.0
    %5292 = vmatprep.subr.mxu0 0.0
    %5293 = vmatpush1.msra.mxu0 %v5257
    %5294 = vmatprep.subr.mxu0 0.0
    %5295 = vmatpush2.msra.mxu0 0.0
    %5296 = vmatprep.subr.mxu0 0.0
    %5297 = vmatpush2.msra.mxu0 0.0
    %5298 = vmatprep.subr.mxu0 0.0
    %5299 = vmatpush2.msra.mxu0 0.0
    %5300 = vmatprep.subr.mxu0 0.0
    %5301 = vmatpush2.msra.mxu0 0.0
    %5302 = vmatprep.subr.mxu0 0.0
    %5303 = vmatpush2.msra.mxu0 0.0
    %5304 = vmatprep.subr.mxu0 0.0
    %5305 = vmatpush2.msra.mxu0 0.0
    %5306 = vmatprep.subr.mxu0 0.0
    %5307 = vmatpush2.msra.mxu0 0.0
    %5308 = vmatprep.subr.mxu0 0.0
    %5309 = vmatpush2.msra.mxu0 0.0
    %5310 = vmatprep.subr.mxu0 0.0
    %5311 = vmatpush2.msra.mxu0 0.0
    %5312 = vmatprep.subr.mxu0 0.0
    %5313 = vmatpush2.msra.mxu0 0.0
    %5314 = vmatprep.subr.mxu0 0.0
    %5315 = vmatpush2.msra.mxu0 0.0
    %5316 = vmatprep.subr.mxu0 0.0
    %5317 = vmatpush2.msra.mxu0 0.0
    %5318 = vmatprep.subr.mxu0 0.0
    %5319 = vmatpush2.msra.mxu0 0.0
    %5320 = vmatprep.subr.mxu0 0.0
    %5321 = vmatpush2.msra.mxu0 0.0
    %5322 = vmatprep.subr.mxu0 0.0
    %5323 = vmatpush2.msra.mxu0 0.0
    %5324 = vmatprep.subr.mxu0 0.0
    %5325 = vmatpush2.msra.mxu0 0.0
    %5326 = vmatprep.mubr.f32.mxu0 0.0
    %5327 = vmatmul.mubr.f32.gmra.mxu0 %v5260
    %v5328 = vpop.f32.mrf.mxu0
    %v5329 = vadd.f32 0.0, %v5328
    %v5330 = vpop.f32.mrf.mxu0
    %5331 = vdwg.mxu0
    %5332 = vrot.lane.b32.xlu0 %v3005, 64
    %v5333 = vpop.permute.xlu0 %5332
    %v5336 = vsel %vm1427, %v4416, 0
    %5338 = vmatprep.subr.mxu0 0.0
    %5339 = vmatpush1.msra.mxu0 0.0
    %5340 = vmatprep.subr.mxu0 0.0
    %5341 = vmatpush1.msra.mxu0 0.0
    %5342 = vmatprep.subr.mxu0 0.0
    %5343 = vmatpush1.msra.mxu0 0.0
    %5344 = vmatprep.subr.mxu0 0.0
    %5345 = vmatpush1.msra.mxu0 0.0
    %5346 = vmatprep.subr.mxu0 0.0
    %5347 = vmatpush1.msra.mxu0 0.0
    %5348 = vmatprep.subr.mxu0 0.0
    %5349 = vmatpush1.msra.mxu0 0.0
    %5350 = vmatprep.subr.mxu0 0.0
    %5351 = vmatpush1.msra.mxu0 0.0
    %5352 = vmatprep.subr.mxu0 0.0
    %5353 = vmatpush1.msra.mxu0 0.0
    %5354 = vmatprep.subr.mxu0 0.0
    %5355 = vmatpush1.msra.mxu0 0.0
    %5356 = vmatprep.subr.mxu0 0.0
    %5357 = vmatpush1.msra.mxu0 0.0
    %5358 = vmatprep.subr.mxu0 0.0
    %5359 = vmatpush1.msra.mxu0 0.0
    %5360 = vmatprep.subr.mxu0 0.0
    %5361 = vmatpush1.msra.mxu0 0.0
    %5362 = vmatprep.subr.mxu0 0.0
    %5363 = vmatpush1.msra.mxu0 0.0
    %5364 = vmatprep.subr.mxu0 0.0
    %5365 = vmatpush1.msra.mxu0 0.0
    %5366 = vmatprep.subr.mxu0 0.0
    %5367 = vmatpush1.msra.mxu0 0.0
    %5368 = vmatprep.subr.mxu0 0.0
    %5369 = vmatpush1.msra.mxu0 %v5333
    %5370 = vmatprep.subr.mxu0 0.0
    %5371 = vmatpush2.msra.mxu0 0.0
    %5372 = vmatprep.subr.mxu0 0.0
    %5373 = vmatpush2.msra.mxu0 0.0
    %5374 = vmatprep.subr.mxu0 0.0
    %5375 = vmatpush2.msra.mxu0 0.0
    %5376 = vmatprep.subr.mxu0 0.0
    %5377 = vmatpush2.msra.mxu0 0.0
    %5378 = vmatprep.subr.mxu0 0.0
    %5379 = vmatpush2.msra.mxu0 0.0
    %5380 = vmatprep.subr.mxu0 0.0
    %5381 = vmatpush2.msra.mxu0 0.0
    %5382 = vmatprep.subr.mxu0 0.0
    %5383 = vmatpush2.msra.mxu0 0.0
    %5384 = vmatprep.subr.mxu0 0.0
    %5385 = vmatpush2.msra.mxu0 0.0
    %5386 = vmatprep.subr.mxu0 0.0
    %5387 = vmatpush2.msra.mxu0 0.0
    %5388 = vmatprep.subr.mxu0 0.0
    %5389 = vmatpush2.msra.mxu0 0.0
    %5390 = vmatprep.subr.mxu0 0.0
    %5391 = vmatpush2.msra.mxu0 0.0
    %5392 = vmatprep.subr.mxu0 0.0
    %5393 = vmatpush2.msra.mxu0 0.0
    %5394 = vmatprep.subr.mxu0 0.0
    %5395 = vmatpush2.msra.mxu0 0.0
    %5396 = vmatprep.subr.mxu0 0.0
    %5397 = vmatpush2.msra.mxu0 0.0
    %5398 = vmatprep.subr.mxu0 0.0
    %5399 = vmatpush2.msra.mxu0 0.0
    %5400 = vmatprep.subr.mxu0 0.0
    %5401 = vmatpush2.msra.mxu0 0.0
    %5402 = vmatprep.mubr.f32.mxu0 0.0
    %5403 = vmatmul.mubr.f32.gmra.mxu0 %v5336
    %v5404 = vpop.f32.mrf.mxu0
    %v5405 = vadd.f32 0.0, %v5404
    %v5406 = vpop.f32.mrf.mxu0
    %5407 = vdwg.mxu0
    %5408 = vrot.lane.b32.xlu0 %v3007, 64
    %v5409 = vpop.permute.xlu0 %5408
    %v5412 = vsel %vm1427, %v4417, 0
    %5414 = vmatprep.subr.mxu0 0.0
    %5415 = vmatpush1.msra.mxu0 0.0
    %5416 = vmatprep.subr.mxu0 0.0
    %5417 = vmatpush1.msra.mxu0 0.0
    %5418 = vmatprep.subr.mxu0 0.0
    %5419 = vmatpush1.msra.mxu0 0.0
    %5420 = vmatprep.subr.mxu0 0.0
    %5421 = vmatpush1.msra.mxu0 0.0
    %5422 = vmatprep.subr.mxu0 0.0
    %5423 = vmatpush1.msra.mxu0 0.0
    %5424 = vmatprep.subr.mxu0 0.0
    %5425 = vmatpush1.msra.mxu0 0.0
    %5426 = vmatprep.subr.mxu0 0.0
    %5427 = vmatpush1.msra.mxu0 0.0
    %5428 = vmatprep.subr.mxu0 0.0
    %5429 = vmatpush1.msra.mxu0 0.0
    %5430 = vmatprep.subr.mxu0 0.0
    %5431 = vmatpush1.msra.mxu0 0.0
    %5432 = vmatprep.subr.mxu0 0.0
    %5433 = vmatpush1.msra.mxu0 0.0
    %5434 = vmatprep.subr.mxu0 0.0
    %5435 = vmatpush1.msra.mxu0 0.0
    %5436 = vmatprep.subr.mxu0 0.0
    %5437 = vmatpush1.msra.mxu0 0.0
    %5438 = vmatprep.subr.mxu0 0.0
    %5439 = vmatpush1.msra.mxu0 0.0
    %5440 = vmatprep.subr.mxu0 0.0
    %5441 = vmatpush1.msra.mxu0 0.0
    %5442 = vmatprep.subr.mxu0 0.0
    %5443 = vmatpush1.msra.mxu0 0.0
    %5444 = vmatprep.subr.mxu0 0.0
    %5445 = vmatpush1.msra.mxu0 %v5409
    %5446 = vmatprep.subr.mxu0 0.0
    %5447 = vmatpush2.msra.mxu0 0.0
    %5448 = vmatprep.subr.mxu0 0.0
    %5449 = vmatpush2.msra.mxu0 0.0
    %5450 = vmatprep.subr.mxu0 0.0
    %5451 = vmatpush2.msra.mxu0 0.0
    %5452 = vmatprep.subr.mxu0 0.0
    %5453 = vmatpush2.msra.mxu0 0.0
    %5454 = vmatprep.subr.mxu0 0.0
    %5455 = vmatpush2.msra.mxu0 0.0
    %5456 = vmatprep.subr.mxu0 0.0
    %5457 = vmatpush2.msra.mxu0 0.0
    %5458 = vmatprep.subr.mxu0 0.0
    %5459 = vmatpush2.msra.mxu0 0.0
    %5460 = vmatprep.subr.mxu0 0.0
    %5461 = vmatpush2.msra.mxu0 0.0
    %5462 = vmatprep.subr.mxu0 0.0
    %5463 = vmatpush2.msra.mxu0 0.0
    %5464 = vmatprep.subr.mxu0 0.0
    %5465 = vmatpush2.msra.mxu0 0.0
    %5466 = vmatprep.subr.mxu0 0.0
    %5467 = vmatpush2.msra.mxu0 0.0
    %5468 = vmatprep.subr.mxu0 0.0
    %5469 = vmatpush2.msra.mxu0 0.0
    %5470 = vmatprep.subr.mxu0 0.0
    %5471 = vmatpush2.msra.mxu0 0.0
    %5472 = vmatprep.subr.mxu0 0.0
    %5473 = vmatpush2.msra.mxu0 0.0
    %5474 = vmatprep.subr.mxu0 0.0
    %5475 = vmatpush2.msra.mxu0 0.0
    %5476 = vmatprep.subr.mxu0 0.0
    %5477 = vmatpush2.msra.mxu0 0.0
    %5478 = vmatprep.mubr.f32.mxu0 0.0
    %5479 = vmatmul.mubr.f32.gmra.mxu0 %v5412
    %v5480 = vpop.f32.mrf.mxu0
    %v5481 = vadd.f32 0.0, %v5480
    %v5482 = vpop.f32.mrf.mxu0
    %5483 = vdwg.mxu0
    %5484 = vrot.lane.b32.xlu0 %v3009, 64
    %v5485 = vpop.permute.xlu0 %5484
    %v5488 = vsel %vm1427, %v4418, 0
    %5490 = vmatprep.subr.mxu0 0.0
    %5491 = vmatpush1.msra.mxu0 0.0
    %5492 = vmatprep.subr.mxu0 0.0
    %5493 = vmatpush1.msra.mxu0 0.0
    %5494 = vmatprep.subr.mxu0 0.0
    %5495 = vmatpush1.msra.mxu0 0.0
    %5496 = vmatprep.subr.mxu0 0.0
    %5497 = vmatpush1.msra.mxu0 0.0
    %5498 = vmatprep.subr.mxu0 0.0
    %5499 = vmatpush1.msra.mxu0 0.0
    %5500 = vmatprep.subr.mxu0 0.0
    %5501 = vmatpush1.msra.mxu0 0.0
    %5502 = vmatprep.subr.mxu0 0.0
    %5503 = vmatpush1.msra.mxu0 0.0
    %5504 = vmatprep.subr.mxu0 0.0
    %5505 = vmatpush1.msra.mxu0 0.0
    %5506 = vmatprep.subr.mxu0 0.0
    %5507 = vmatpush1.msra.mxu0 0.0
    %5508 = vmatprep.subr.mxu0 0.0
    %5509 = vmatpush1.msra.mxu0 0.0
    %5510 = vmatprep.subr.mxu0 0.0
    %5511 = vmatpush1.msra.mxu0 0.0
    %5512 = vmatprep.subr.mxu0 0.0
    %5513 = vmatpush1.msra.mxu0 0.0
    %5514 = vmatprep.subr.mxu0 0.0
    %5515 = vmatpush1.msra.mxu0 0.0
    %5516 = vmatprep.subr.mxu0 0.0
    %5517 = vmatpush1.msra.mxu0 0.0
    %5518 = vmatprep.subr.mxu0 0.0
    %5519 = vmatpush1.msra.mxu0 0.0
    %5520 = vmatprep.subr.mxu0 0.0
    %5521 = vmatpush1.msra.mxu0 %v5485
    %5522 = vmatprep.subr.mxu0 0.0
    %5523 = vmatpush2.msra.mxu0 0.0
    %5524 = vmatprep.subr.mxu0 0.0
    %5525 = vmatpush2.msra.mxu0 0.0
    %5526 = vmatprep.subr.mxu0 0.0
    %5527 = vmatpush2.msra.mxu0 0.0
    %5528 = vmatprep.subr.mxu0 0.0
    %5529 = vmatpush2.msra.mxu0 0.0
    %5530 = vmatprep.subr.mxu0 0.0
    %5531 = vmatpush2.msra.mxu0 0.0
    %5532 = vmatprep.subr.mxu0 0.0
    %5533 = vmatpush2.msra.mxu0 0.0
    %5534 = vmatprep.subr.mxu0 0.0
    %5535 = vmatpush2.msra.mxu0 0.0
    %5536 = vmatprep.subr.mxu0 0.0
    %5537 = vmatpush2.msra.mxu0 0.0
    %5538 = vmatprep.subr.mxu0 0.0
    %5539 = vmatpush2.msra.mxu0 0.0
    %5540 = vmatprep.subr.mxu0 0.0
    %5541 = vmatpush2.msra.mxu0 0.0
    %5542 = vmatprep.subr.mxu0 0.0
    %5543 = vmatpush2.msra.mxu0 0.0
    %5544 = vmatprep.subr.mxu0 0.0
    %5545 = vmatpush2.msra.mxu0 0.0
    %5546 = vmatprep.subr.mxu0 0.0
    %5547 = vmatpush2.msra.mxu0 0.0
    %5548 = vmatprep.subr.mxu0 0.0
    %5549 = vmatpush2.msra.mxu0 0.0
    %5550 = vmatprep.subr.mxu0 0.0
    %5551 = vmatpush2.msra.mxu0 0.0
    %5552 = vmatprep.subr.mxu0 0.0
    %5553 = vmatpush2.msra.mxu0 0.0
    %5554 = vmatprep.mubr.f32.mxu0 0.0
    %5555 = vmatmul.mubr.f32.gmra.mxu0 %v5488
    %v5556 = vpop.f32.mrf.mxu0
    %v5557 = vadd.f32 0.0, %v5556
    %v5558 = vpop.f32.mrf.mxu0
    %5559 = vdwg.mxu0
    %5560 = vrot.lane.b32.xlu0 %v3011, 64
    %v5561 = vpop.permute.xlu0 %5560
    %v5564 = vsel %vm1427, %v4419, 0
    %5566 = vmatprep.subr.mxu0 0.0
    %5567 = vmatpush1.msra.mxu0 0.0
    %5568 = vmatprep.subr.mxu0 0.0
    %5569 = vmatpush1.msra.mxu0 0.0
    %5570 = vmatprep.subr.mxu0 0.0
    %5571 = vmatpush1.msra.mxu0 0.0
    %5572 = vmatprep.subr.mxu0 0.0
    %5573 = vmatpush1.msra.mxu0 0.0
    %5574 = vmatprep.subr.mxu0 0.0
    %5575 = vmatpush1.msra.mxu0 0.0
    %5576 = vmatprep.subr.mxu0 0.0
    %5577 = vmatpush1.msra.mxu0 0.0
    %5578 = vmatprep.subr.mxu0 0.0
    %5579 = vmatpush1.msra.mxu0 0.0
    %5580 = vmatprep.subr.mxu0 0.0
    %5581 = vmatpush1.msra.mxu0 0.0
    %5582 = vmatprep.subr.mxu0 0.0
    %5583 = vmatpush1.msra.mxu0 0.0
    %5584 = vmatprep.subr.mxu0 0.0
    %5585 = vmatpush1.msra.mxu0 0.0
    %5586 = vmatprep.subr.mxu0 0.0
    %5587 = vmatpush1.msra.mxu0 0.0
    %5588 = vmatprep.subr.mxu0 0.0
    %5589 = vmatpush1.msra.mxu0 0.0
    %5590 = vmatprep.subr.mxu0 0.0
    %5591 = vmatpush1.msra.mxu0 0.0
    %5592 = vmatprep.subr.mxu0 0.0
    %5593 = vmatpush1.msra.mxu0 0.0
    %5594 = vmatprep.subr.mxu0 0.0
    %5595 = vmatpush1.msra.mxu0 0.0
    %5596 = vmatprep.subr.mxu0 0.0
    %5597 = vmatpush1.msra.mxu0 %v5561
    %5598 = vmatprep.subr.mxu0 0.0
    %5599 = vmatpush2.msra.mxu0 0.0
    %5600 = vmatprep.subr.mxu0 0.0
    %5601 = vmatpush2.msra.mxu0 0.0
    %5602 = vmatprep.subr.mxu0 0.0
    %5603 = vmatpush2.msra.mxu0 0.0
    %5604 = vmatprep.subr.mxu0 0.0
    %5605 = vmatpush2.msra.mxu0 0.0
    %5606 = vmatprep.subr.mxu0 0.0
    %5607 = vmatpush2.msra.mxu0 0.0
    %5608 = vmatprep.subr.mxu0 0.0
    %5609 = vmatpush2.msra.mxu0 0.0
    %5610 = vmatprep.subr.mxu0 0.0
    %5611 = vmatpush2.msra.mxu0 0.0
    %5612 = vmatprep.subr.mxu0 0.0
    %5613 = vmatpush2.msra.mxu0 0.0
    %5614 = vmatprep.subr.mxu0 0.0
    %5615 = vmatpush2.msra.mxu0 0.0
    %5616 = vmatprep.subr.mxu0 0.0
    %5617 = vmatpush2.msra.mxu0 0.0
    %5618 = vmatprep.subr.mxu0 0.0
    %5619 = vmatpush2.msra.mxu0 0.0
    %5620 = vmatprep.subr.mxu0 0.0
    %5621 = vmatpush2.msra.mxu0 0.0
    %5622 = vmatprep.subr.mxu0 0.0
    %5623 = vmatpush2.msra.mxu0 0.0
    %5624 = vmatprep.subr.mxu0 0.0
    %5625 = vmatpush2.msra.mxu0 0.0
    %5626 = vmatprep.subr.mxu0 0.0
    %5627 = vmatpush2.msra.mxu0 0.0
    %5628 = vmatprep.subr.mxu0 0.0
    %5629 = vmatpush2.msra.mxu0 0.0
    %5630 = vmatprep.mubr.f32.mxu0 0.0
    %5631 = vmatmul.mubr.f32.gmra.mxu0 %v5564
    %v5632 = vpop.f32.mrf.mxu0
    %v5633 = vadd.f32 0.0, %v5632
    %v5634 = vpop.f32.mrf.mxu0
    %5635 = vdwg.mxu0
    %5637 = vrot.lane.b32.xlu0 %v4569, 4
    %v5638 = vpop.permute.xlu0 %5637
    %5641 = vrot.lane.b32.xlu0 %v4645, 8
    %v5642 = vpop.permute.xlu0 %5641
    %5645 = vrot.lane.b32.xlu0 %v4721, 12
    %v5646 = vpop.permute.xlu0 %5645
    %5649 = vrot.lane.b32.xlu0 %v4797, 16
    %v5650 = vpop.permute.xlu0 %5649
    %5653 = vrot.lane.b32.xlu0 %v4873, 20
    %v5654 = vpop.permute.xlu0 %5653
    %5657 = vrot.lane.b32.xlu0 %v4949, 24
    %v5658 = vpop.permute.xlu0 %5657
    %5661 = vrot.lane.b32.xlu0 %v5025, 28
    %v5662 = vpop.permute.xlu0 %5661
    %v5664 = vsel %vm196, %v4493, %v5638
    %v5665 = vsel %vm1427, %v5664, %v5642
    %v5666 = vsel %vm2850, %v5665, %v5646
    %v5667 = vsel %vm2852, %v5666, %v5650
    %v5668 = vsel %vm2854, %v5667, %v5654
    %v5669 = vsel %vm2856, %v5668, %v5658
    %v5670 = vsel %vm2858, %v5669, %v5662
    %5672 = vrot.lane.b32.xlu0 %v5177, 4
    %v5673 = vpop.permute.xlu0 %5672
    %5676 = vrot.lane.b32.xlu0 %v5253, 8
    %v5677 = vpop.permute.xlu0 %5676
    %5680 = vrot.lane.b32.xlu0 %v5329, 12
    %v5681 = vpop.permute.xlu0 %5680
    %5684 = vrot.lane.b32.xlu0 %v5405, 16
    %v5685 = vpop.permute.xlu0 %5684
    %5688 = vrot.lane.b32.xlu0 %v5481, 20
    %v5689 = vpop.permute.xlu0 %5688
    %5692 = vrot.lane.b32.xlu0 %v5557, 24
    %v5693 = vpop.permute.xlu0 %5692
    %5696 = vrot.lane.b32.xlu0 %v5633, 28
    %v5697 = vpop.permute.xlu0 %5696
    %v5699 = vsel %vm196, %v5101, %v5673
    %v5700 = vsel %vm1427, %v5699, %v5677
    %v5701 = vsel %vm2850, %v5700, %v5681
    %v5702 = vsel %vm2852, %v5701, %v5685
    %v5703 = vsel %vm2854, %v5702, %v5689
    %v5704 = vsel %vm2856, %v5703, %v5693
    %v5705 = vsel %vm2858, %v5704, %v5697
    %v5706 = vadd.f32 %v5670, %v2895
    %v5707 = vadd.f32 %v5705, %v2896
    %v5708 = vld [vmem:[#allocation8] sm:$0xff]
    %v5709 = vld [vmem:[#allocation8 + $0x8] sm:$0xff]
    %v5710 = vld [vmem:[#allocation8 + $0x10] sm:$0xff]
    %v5711 = vld [vmem:[#allocation8 + $0x18] sm:$0xff]
    %v5712 = vld [vmem:[%s4] sm:$0x1]
    %v5714 = vlaneseq
    %v5715 = vshrl.u32 %v5714, 7
    %v5716 = vsub.s32 0, %v5715
    %v5717 = vrot.slane %v5712, %v5716
    %v5720 = vsel %vm82, %v5706, 0
    %v5723 = vsel %vm82, %v5707, 0
    %5725 = vmatprep.subr.mxu0 0.0
    %5726 = vmatpush1.msra.mxu0 0.0
    %5727 = vmatprep.subr.mxu0 0.0
    %5728 = vmatpush1.msra.mxu0 0.0
    %5729 = vmatprep.subr.mxu0 0.0
    %5730 = vmatpush1.msra.mxu0 0.0
    %5731 = vmatprep.subr.mxu0 0.0
    %5732 = vmatpush1.msra.mxu0 0.0
    %5733 = vmatprep.subr.mxu0 0.0
    %5734 = vmatpush1.msra.mxu0 0.0
    %5735 = vmatprep.subr.mxu0 0.0
    %5736 = vmatpush1.msra.mxu0 0.0
    %5737 = vmatprep.subr.mxu0 0.0
    %5738 = vmatpush1.msra.mxu0 0.0
    %5739 = vmatprep.subr.mxu0 0.0
    %5740 = vmatpush1.msra.mxu0 0.0
    %5741 = vmatprep.subr.mxu0 0.0
    %5742 = vmatpush1.msra.mxu0 0.0
    %5743 = vmatprep.subr.mxu0 0.0
    %5744 = vmatpush1.msra.mxu0 0.0
    %5745 = vmatprep.subr.mxu0 0.0
    %5746 = vmatpush1.msra.mxu0 0.0
    %5747 = vmatprep.subr.mxu0 0.0
    %5748 = vmatpush1.msra.mxu0 0.0
    %5749 = vmatprep.subr.mxu0 0.0
    %5750 = vmatpush1.msra.mxu0 %v5711
    %5751 = vmatprep.subr.mxu0 0.0
    %5752 = vmatpush1.msra.mxu0 %v5710
    %5753 = vmatprep.subr.mxu0 0.0
    %5754 = vmatpush1.msra.mxu0 %v5709
    %5755 = vmatprep.subr.mxu0 0.0
    %5756 = vmatpush1.msra.mxu0 %v5708
    %5757 = vmatprep.subr.mxu0 0.0
    %5758 = vmatpush2.msra.mxu0 0.0
    %5759 = vmatprep.subr.mxu0 0.0
    %5760 = vmatpush2.msra.mxu0 0.0
    %5761 = vmatprep.subr.mxu0 0.0
    %5762 = vmatpush2.msra.mxu0 0.0
    %5763 = vmatprep.subr.mxu0 0.0
    %5764 = vmatpush2.msra.mxu0 0.0
    %5765 = vmatprep.subr.mxu0 0.0
    %5766 = vmatpush2.msra.mxu0 0.0
    %5767 = vmatprep.subr.mxu0 0.0
    %5768 = vmatpush2.msra.mxu0 0.0
    %5769 = vmatprep.subr.mxu0 0.0
    %5770 = vmatpush2.msra.mxu0 0.0
    %5771 = vmatprep.subr.mxu0 0.0
    %5772 = vmatpush2.msra.mxu0 0.0
    %5773 = vmatprep.subr.mxu0 0.0
    %5774 = vmatpush2.msra.mxu0 0.0
    %5775 = vmatprep.subr.mxu0 0.0
    %5776 = vmatpush2.msra.mxu0 0.0
    %5777 = vmatprep.subr.mxu0 0.0
    %5778 = vmatpush2.msra.mxu0 0.0
    %5779 = vmatprep.subr.mxu0 0.0
    %5780 = vmatpush2.msra.mxu0 0.0
    %5781 = vmatprep.subr.mxu0 0.0
    %5782 = vmatpush2.msra.mxu0 0.0
    %5783 = vmatprep.subr.mxu0 0.0
    %5784 = vmatpush2.msra.mxu0 0.0
    %5785 = vmatprep.subr.mxu0 0.0
    %5786 = vmatpush2.msra.mxu0 0.0
    %5787 = vmatprep.subr.mxu0 0.0
    %5788 = vmatpush2.msra.mxu0 0.0
    %5789 = vmatprep.mubr.f32.mxu0 0.0
    %5790 = vmatmul.mubr.f32.gmra.mxu0 %v5720
    %v5791 = vpop.f32.mrf.mxu0
    %v5792 = vadd.f32 %v5717, %v5791
    %v5793 = vpop.f32.mrf.mxu0
    %5794 = vmatprep.mubr.f32.mxu0 0.0
    %5795 = vmatmul.mubr.f32.gmra.mxu0 %v5723
    %v5796 = vpop.f32.mrf.mxu0
    %v5797 = vadd.f32 %v5717, %v5796
    %v5798 = vpop.f32.mrf.mxu0
    %5799 = vdwg.mxu0
    %5800 = vst.msk [vmem:[#allocation10] sm:$0xff] %vm82, %v5792
    %5801 = vst.msk [vmem:[#allocation10 + $0x8] sm:$0xff] %vm82, %v5797
    // Predicated region
    $region38: #{tpu_custom_call.1} parent=1 // pred_check
      _
    $region39: #{tpu_custom_call.1} parent=1 // pred_check_branch
      %5803 = sbr.rel (0) target = $region41
    $region40: #{tpu_custom_call.1} parent=1 // pred_region
      %s5805 = ssub.s32 256, 256
      %5806 = vsyncadd [#allocation4], %s5805
      %s5807 = sshll.u32 [#allocation10], 4
      %s5808 = int_to_ptr.vmem [resolvable:$true] %s5807
      %5813 = dma.vmem_to_hbm [thread:$0]  %s5808, 256, %s5, [#allocation4], 128, 128, 8
    $region41: #{tpu_custom_call.1} parent=1 // pred_fallthru
      _
    // Predicated region
    $region42: #{tpu_custom_call.1} parent=1 // pred_check
      _
    $region43: #{tpu_custom_call.1} parent=1 // pred_check_branch
      %5815 = sbr.rel (0) target = $region45
    $region44: #{tpu_custom_call.1} parent=1 // pred_region
      %5816 = dma.done [#allocation4], 256
    $region45: #{tpu_custom_call.1} parent=1 // pred_fallthru
      _
    %5817 = vsyncpa [#allocation3], 1
    %5818 = vsyncpa [#allocation6], 1
    %5819 = vsyncpa [#allocation9], 1
    %5820 = vsyncpa [#allocation4], 1

</llo_original>
